<compile_context>
chip_gen: v7x
topology: tpu7x:2x2x1
jax: 0.10.0
libtpu: 0.0.40
codegen_flags: <defaults>
</compile_context>

<pallas_src>
from functools import partial

import jax
import jax.numpy as jnp
from jax.experimental import pallas as pl
from jax.experimental.pallas import tpu as pltpu


# bf16 feeds the MXU only on real TPU hardware; the CPU interpreter's DotThunk
# cannot execute BF16 x BF16 = F32, so fall back to f32 there.
_DOT_DTYPE = jnp.bfloat16 if jax.default_backend() == "tpu" else jnp.float32
_BIG = 1e30          # finite "infinity" for masked softmax
_NEG_BIG = -1e30


def _choose_tile(n, preferred, align):
    """Largest tile <= preferred that divides n and is a multiple of align;
    falls back to the full dimension (always legal for BlockSpec)."""
    if n <= preferred:
        return n
    t = (preferred // align) * align
    while t >= align:
        if n % t == 0:
            return t
        t -= align
    return n


# ----------------------------------------------------------------------------
# Per-metapath projection kernel: h = x @ W, elT = (h @ attn_l)^T, er = h @ attn_r
# Runs once per (metapath, node tile); the GAT kernel then reuses these tiles.
# ----------------------------------------------------------------------------
def _project_kernel(x_ref, w_ref, al_ref, ar_ref, h_ref, elT_ref, er_ref):
    h32 = jnp.dot(x_ref[...], w_ref[0], preferred_element_type=jnp.float32)
    h = h32.astype(h_ref.dtype)                                   # (Tn, D)
    h_ref[0] = h
    er_ref[0] = jnp.dot(h, ar_ref[0], preferred_element_type=jnp.float32)  # (Tn, H)
    # el emitted already transposed: (H, Tn), so the GAT hot loop never transposes.
    elT_ref[0] = jax.lax.dot_general(
        al_ref[0], h, dimension_numbers=(((0,), (1,)), ((), ())),
        preferred_element_type=jnp.float32)


def pallas_project(x, fc_w, al, ar):
    M_, Din, D = fc_w.shape
    N = x.shape[0]
    H = al.shape[2]
    t_n = _choose_tile(N, 1024, 128)   # lane dim of elT -> multiple of 128 (or full N)
    g_n = N // t_n
    return pl.pallas_call(
        _project_kernel,
        out_shape=(jax.ShapeDtypeStruct((M_, N, D), x.dtype),
                   jax.ShapeDtypeStruct((M_, H, N), jnp.float32),
                   jax.ShapeDtypeStruct((M_, N, H), jnp.float32)),
        grid_spec=pltpu.PrefetchScalarGridSpec(
            num_scalar_prefetch=0,
            grid=(M_, g_n),
            in_specs=[
                pl.BlockSpec((t_n, Din), lambda m, i: (i, 0)),
                pl.BlockSpec((1, Din, D), lambda m, i: (m, 0, 0)),
                pl.BlockSpec((1, D, H), lambda m, i: (m, 0, 0)),
                pl.BlockSpec((1, D, H), lambda m, i: (m, 0, 0)),
            ],
            out_specs=(
                pl.BlockSpec((1, t_n, D), lambda m, i: (m, i, 0)),
                pl.BlockSpec((1, H, t_n), lambda m, i: (m, 0, i)),
                pl.BlockSpec((1, t_n, H), lambda m, i: (m, i, 0)),
            )),
        compiler_params=pltpu.CompilerParams(
            dimension_semantics=("parallel", "parallel")),
    )(x, fc_w, al, ar)


# ----------------------------------------------------------------------------
# Fused multi-metapath GAT kernel (flash-style edge softmax + fused semantic
# per-row scores), grid = (dst tile, metapath, src tile).
# ----------------------------------------------------------------------------
def _gat_kernel(hd_ref, hs_ref, elT_ref, er_ref, b_ref, adj_ref,
                w1_ref, b1_ref, w2_ref,
                z_ref, wrow_ref, m_sc, l_sc, acc_sc, *, num_heads, head_dim):
    H, F = num_heads, head_dim
    k = pl.program_id(2)
    nk = pl.num_programs(2)

    @pl.when(k == 0)
    def _init():
        m_sc[...] = jnp.full_like(m_sc, _NEG_BIG)
        l_sc[...] = jnp.zeros_like(l_sc)
        acc_sc[...] = jnp.zeros_like(acc_sc)

    er = er_ref[0]                                           # (Tdst, H)  f32
    elT = elT_ref[0]                                         # (H, Tsrc)  f32
    hs = hs_ref[0]                                           # (Tsrc, D)  MXU dtype

    # edge score s[d, h, j] = leaky_relu(er[d, h] + el[j, h]), single additive mask.
    s = er[:, :, None] + elT[None, :, :]                     # (Tdst, H, Tsrc)
    s = jnp.where(s > 0, s, 0.2 * s)                         # leaky_relu(0.2)
    mask_f = (adj_ref[0] != 0).astype(jnp.float32)           # (Tdst, Tsrc)
    s = s + ((mask_f - 1.0) * _BIG)[:, None, :]              # masked entries -> -1e30

    # Online (flash) softmax update over the src axis.
    m_prev = m_sc[...]
    m_new = jnp.maximum(m_prev, jnp.max(s, axis=-1))         # (Tdst, H)
    corr = jnp.exp(m_prev - m_new)
    p = jnp.exp(s - m_new[:, :, None]) * mask_f[:, None, :]  # exact 0 for masked rows
    l_sc[...] = corr * l_sc[...] + jnp.sum(p, axis=-1)
    m_sc[...] = m_new

    # Per-head aggregation on the MXU, single lane-dense accumulator store.
    p_dd = p.astype(hs.dtype)                                # one cast for whole block
    acc = acc_sc[...]                                        # (Tdst, H*F)
    parts = []
    for h in range(H):
        agg_h = jnp.dot(p_dd[:, h, :], hs[:, h * F:(h + 1) * F],
                        preferred_element_type=jnp.float32)  # (Tdst, F)
        parts.append(corr[:, h:h + 1] * acc[:, h * F:(h + 1) * F] + agg_h)
    acc_sc[...] = jnp.concatenate(parts, axis=-1)

    @pl.when(k == nk - 1)
    def _finalize():
        l = l_sc[...]                                        # (Tdst, H)
        inv = jnp.where(l > 0, 1.0 / l, 0.0)                 # zero in-degree -> 0
        accf = acc_sc[...]
        cols = []
        for h in range(H):
            cols.append(accf[:, h * F:(h + 1) * F] * inv[:, h:h + 1])
        z = jnp.concatenate(cols, axis=-1) + b_ref[0]        # (Tdst, H*F)
        z = jnp.where(z > 0, z, jnp.exp(jnp.minimum(z, 0.0)) - 1.0)   # ELU
        z_ref[0] = z.astype(z_ref.dtype)
        # Fused semantic-attention pass 1: per-row score tanh(z @ W1 + b1) @ W2,
        # computed while the z tile is still in VMEM (saves one HBM pass over z).
        proj = jnp.tanh(jnp.dot(z.astype(w1_ref.dtype), w1_ref[...],
                                preferred_element_type=jnp.float32) + b1_ref[...])
        wrow_ref[0] = jnp.dot(proj.astype(w2_ref.dtype), w2_ref[...],
                              preferred_element_type=jnp.float32)     # (Tdst, 1)


def pallas_gat_metapaths(hproj, elT, er, bias, adj_i8, sem_w1, sem_b1, sem_w2):
    """All metapaths of one HAN layer.

    Returns (z, w_rows): z (M, N, H*F) node embeddings per metapath, and
    w_rows (M, N, 1) per-row semantic-attention scores.
    """
    M_, N, D = hproj.shape
    H = er.shape[2]
    F = D // H
    Hd = sem_w1.shape[1]

    t_dst = _choose_tile(N, 256, 32)    # 32-aligned for int8 adjacency sublane packing
    t_src = _choose_tile(N, 512, 128)   # lane dim of adj / elT -> multiple of 128 (or full)
    g_dst = N // t_dst
    g_src = N // t_src

    kernel = partial(_gat_kernel, num_heads=H, head_dim=F)

    dd_sz = jnp.dtype(hproj.dtype).itemsize
    cost = pl.CostEstimate(
        flops=int(M_ * N * N * (2 * D + 8 * H) + M_ * N * (2 * D * Hd + 2 * Hd)),
        transcendentals=int(M_ * N * N * H + M_ * N * (D + Hd)),
        bytes_accessed=int(adj_i8.size
                           + dd_sz * M_ * N * D * (1 + g_dst)   # h as dst once, as src per dst tile
                           + 4 * M_ * N * H * (1 + g_dst)       # er / elT
                           + dd_sz * M_ * N * D + 4 * M_ * N))  # z / w_rows outputs

    return pl.pallas_call(
        kernel,
        out_shape=(jax.ShapeDtypeStruct((M_, N, D), hproj.dtype),
                   jax.ShapeDtypeStruct((M_, N, 1), jnp.float32)),
        grid_spec=pltpu.PrefetchScalarGridSpec(
            num_scalar_prefetch=0,
            grid=(g_dst, M_, g_src),
            in_specs=[
                pl.BlockSpec((1, t_dst, D), lambda i, m, k: (m, i, 0)),      # h (dst tile)
                pl.BlockSpec((1, t_src, D), lambda i, m, k: (m, k, 0)),      # h (src tile)
                pl.BlockSpec((1, H, t_src), lambda i, m, k: (m, 0, k)),      # elT (src)
                pl.BlockSpec((1, t_dst, H), lambda i, m, k: (m, i, 0)),      # er (dst)
                pl.BlockSpec((1, 1, D), lambda i, m, k: (m, 0, 0)),          # output bias
                pl.BlockSpec((1, t_dst, t_src), lambda i, m, k: (m, i, k)),  # int8 adjacency
                pl.BlockSpec((D, Hd), lambda i, m, k: (0, 0)),               # semantic W1
                pl.BlockSpec((1, Hd), lambda i, m, k: (0, 0)),               # semantic b1
                pl.BlockSpec((Hd, 1), lambda i, m, k: (0, 0)),               # semantic W2
            ],
            out_specs=(
                pl.BlockSpec((1, t_dst, D), lambda i, m, k: (m, i, 0)),
                pl.BlockSpec((1, t_dst, 1), lambda i, m, k: (m, i, 0)),
            ),
            scratch_shapes=[
                pltpu.VMEM((t_dst, H), jnp.float32),    # running max
                pltpu.VMEM((t_dst, H), jnp.float32),    # running denominator
                pltpu.VMEM((t_dst, D), jnp.float32),    # lane-dense accumulator
            ]),
        compiler_params=pltpu.CompilerParams(
            dimension_semantics=("parallel", "parallel", "arbitrary"),
            vmem_limit_bytes=48 * 1024 * 1024),
        cost_estimate=cost,
    )(hproj, hproj, elT, er, bias, adj_i8, sem_w1, sem_b1, sem_w2)


# ----------------------------------------------------------------------------
# Semantic attention: beta = softmax_M(mean_N(w_rows)), then apply beta.
# ----------------------------------------------------------------------------
def _sem_beta_kernel(w_ref, beta_ref, acc_sc, *, n_total):
    i = pl.program_id(0)

    @pl.when(i == 0)
    def _init():
        acc_sc[...] = jnp.zeros_like(acc_sc)

    acc_sc[...] += jnp.sum(w_ref[...], axis=1)               # (M, Tn, 1) -> (M, 1)

    @pl.when(i == pl.num_programs(0) - 1)
    def _finalize():
        wbar = acc_sc[...] * (1.0 / n_total)                  # mean over nodes
        wbar = wbar - jnp.max(wbar, axis=0, keepdims=True)
        e = jnp.exp(wbar)
        beta_ref[...] = e / jnp.sum(e, axis=0, keepdims=True)  # softmax over metapaths


def pallas_semantic_beta(w_rows):
    M_, N, _ = w_rows.shape
    t_n = _choose_tile(N, 2048, 8)
    g_n = N // t_n
    kernel = partial(_sem_beta_kernel, n_total=float(N))
    return pl.pallas_call(
        kernel,
        out_shape=jax.ShapeDtypeStruct((M_, 1), jnp.float32),
        grid_spec=pltpu.PrefetchScalarGridSpec(
            num_scalar_prefetch=0,
            grid=(g_n,),
            in_specs=[pl.BlockSpec((M_, t_n, 1), lambda i: (0, i, 0))],
            out_specs=pl.BlockSpec((M_, 1), lambda i: (0, 0)),
            scratch_shapes=[pltpu.VMEM((M_, 1), jnp.float32)]),
        compiler_params=pltpu.CompilerParams(
            dimension_semantics=("arbitrary",)),
    )(w_rows)


def _sem_apply_kernel(z_ref, beta_ref, o_ref):
    z = z_ref[...]                                           # (M, Tn, D)
    beta = beta_ref[...]                                     # (M, 1)
    acc = beta[0:1, 0:1] * z[0].astype(jnp.float32)
    for m in range(1, z.shape[0]):
        acc = acc + beta[m:m + 1, 0:1] * z[m].astype(jnp.float32)
    o_ref[...] = acc


def pallas_semantic_apply(z, beta):
    M_, N, D = z.shape
    t_n = _choose_tile(N, 1024, 8)
    g_n = N // t_n
    return pl.pallas_call(
        _sem_apply_kernel,
        out_shape=jax.ShapeDtypeStruct((N, D), jnp.float32),
        grid_spec=pltpu.PrefetchScalarGridSpec(
            num_scalar_prefetch=0,
            grid=(g_n,),
            in_specs=[
                pl.BlockSpec((M_, t_n, D), lambda i: (0, i, 0)),
                pl.BlockSpec((M_, 1), lambda i: (0, 0)),
            ],
            out_specs=pl.BlockSpec((t_n, D), lambda i: (i, 0))),
        compiler_params=pltpu.CompilerParams(
            dimension_semantics=("parallel",)),
    )(z, beta)


# ----------------------------------------------------------------------------
# Final prediction linear (row-tiled)
# ----------------------------------------------------------------------------
def _linear_kernel(x_ref, w_ref, b_ref, o_ref):
    o_ref[...] = jnp.dot(x_ref[...].astype(w_ref.dtype), w_ref[...],
                         preferred_element_type=jnp.float32) + b_ref[...]


def pallas_linear(x, w, b):
    N, K = x.shape
    M_out = w.shape[1]
    t_n = _choose_tile(N, 512, 8)
    g_n = N // t_n
    return pl.pallas_call(
        _linear_kernel,
        out_shape=jax.ShapeDtypeStruct((N, M_out), jnp.float32),
        grid_spec=pltpu.PrefetchScalarGridSpec(
            num_scalar_prefetch=0,
            grid=(g_n,),
            in_specs=[
                pl.BlockSpec((t_n, K), lambda i: (i, 0)),
                pl.BlockSpec((K, M_out), lambda i: (0, 0)),
                pl.BlockSpec((1, M_out), lambda i: (0, 0)),
            ],
            out_specs=pl.BlockSpec((t_n, M_out), lambda i: (i, 0))),
        compiler_params=pltpu.CompilerParams(
            dimension_semantics=("parallel",)),
    )(x, w, b)


# ----------------------------------------------------------------------------
# Model glue: parameters + forward
# ----------------------------------------------------------------------------
def init_han_params(key, num_metapaths, in_size, hidden_size, out_size, num_heads):
    def nrm(k, shape, scale=0.1):
        return scale * jax.random.normal(k, shape, dtype=jnp.float32)

    H, F = num_heads, hidden_size
    D = H * F
    eye = jnp.eye(H, dtype=jnp.float32)

    layers = []
    layer_in = in_size
    for _ in range(num_heads):   # HAN builds num_heads HANLayers
        key, kf, kl, kr, kb, k1, k2, k3 = jax.random.split(key, 8)
        attn_l = nrm(kl, (num_metapaths, H, F))
        attn_r = nrm(kr, (num_metapaths, H, F))
        # Block-diagonal (H*F, H) forms so el/er become one lane-dense matmul.
        al = (attn_l[:, :, :, None] * eye[:, None, :]).reshape(num_metapaths, D, H)
        ar = (attn_r[:, :, :, None] * eye[:, None, :]).reshape(num_metapaths, D, H)
        layers.append({
            'fc_w': nrm(kf, (num_metapaths, layer_in, D)),
            'al': al,
            'ar': ar,
            'bias': nrm(kb, (num_metapaths, 1, D)),
            'sem_w1': nrm(k1, (D, F)),
            'sem_b1': nrm(k2, (1, F)),
            'sem_w2': nrm(k3, (F, 1)),
        })
        layer_in = D

    key, kw, kb2 = jax.random.split(key, 3)
    return {
        'layers': layers,
        'predict_w': nrm(kw, (D, out_size)),
        'predict_b': nrm(kb2, (1, out_size)),
    }


@jax.jit
def han_forward(features, params, adj_i8):
    dd = _DOT_DTYPE
    h = features
    for layer in params['layers']:
        hproj, elT, er = pallas_project(h.astype(dd), layer['fc_w'].astype(dd),
                                        layer['al'].astype(dd), layer['ar'].astype(dd))
        z, w_rows = pallas_gat_metapaths(hproj, elT, er, layer['bias'], adj_i8,
                                         layer['sem_w1'].astype(dd),
                                         layer['sem_b1'],
                                         layer['sem_w2'].astype(dd))
        beta = pallas_semantic_beta(w_rows)                   # (M, 1)
        h = pallas_semantic_apply(z, beta)                    # (N, H*F), f32
    return pallas_linear(h, params['predict_w'].astype(_DOT_DTYPE), params['predict_b'])


# ----------------------------------------------------------------------------
# Pure-JAX reference (for a tolerance check against the kernels)
# ----------------------------------------------------------------------------
def han_reference(features, params, adj_i8):
    h = features
    adj = (adj_i8 != 0)
    M = adj.shape[0]
    for layer in params['layers']:
        D = layer['fc_w'].shape[2]
        H = layer['al'].shape[2]
        F = D // H
        zs = []
        for m in range(M):
            hp = h @ layer['fc_w'][m]                         # (N, D)
            el = hp @ layer['al'][m]                          # (N, H)
            er = hp @ layer['ar'][m]                          # (N, H)
            e = er[:, None, :] + el[None, :, :]               # (Ndst, Nsrc, H)
            e = jnp.where(e > 0, e, 0.2 * e)
            mask = adj[m][:, :, None]
            e = jnp.where(mask, e, -jnp.inf)
            a = jax.nn.softmax(e, axis=1)
            a = jnp.where(mask, a, 0.0)
            out = jnp.einsum('dsh,shf->dhf', a, hp.reshape(-1, H, F)).reshape(-1, D)
            out = out + layer['bias'][m]
            out = jnp.where(out > 0, out, jnp.exp(jnp.minimum(out, 0.0)) - 1.0)
            zs.append(out)
        z = jnp.stack(zs, axis=0)                             # (M, N, D)
        w = jnp.tanh(z @ layer['sem_w1'] + layer['sem_b1']) @ layer['sem_w2']
        beta = jax.nn.softmax(w.mean(axis=1), axis=0)         # (M, 1)
        h = jnp.sum(beta[:, None, :] * z, axis=0)             # (N, D)
    return h @ params['predict_w'] + params['predict_b']


# ----------------------------------------------------------------------------
# Main
# ----------------------------------------------------------------------------
if __name__ == "__main__":
    # Small synthetic heterograph: N nodes, M metapath dense adjacencies.
    N = 16            # nodes
    M = 2             # metapaths
    IN_SIZE = 8       # input feature dim
    HIDDEN = 8        # hidden size per head
    HEADS = 2         # attention heads (also number of HAN layers)
    OUT = 4           # number of classes

    key = jax.random.PRNGKey(0)
    k_feat, k_adj, k_par = jax.random.split(key, 3)

    features = jax.random.normal(k_feat, (N, IN_SIZE), dtype=jnp.float32)

    # Dense int8 adjacency per metapath (random edges + self loops), adj[m, dst, src].
    adjs = []
    for m in range(M):
        ka = jax.random.fold_in(k_adj, m)
        a = (jax.random.uniform(ka, (N, N)) < 0.3).astype(jnp.int8)
        a = jnp.maximum(a, jnp.eye(N, dtype=jnp.int8))   # self loops
        adjs.append(a)
    adj_i8 = jnp.stack(adjs, axis=0)                     # (M, N, N) int8

    params = init_han_params(k_par, M, IN_SIZE, HIDDEN, OUT, HEADS)

    logits = han_forward(features, params, adj_i8)
    logits = jax.block_until_ready(logits)

    assert logits.shape == (N, OUT), logits.shape
    assert bool(jnp.all(jnp.isfinite(logits)))

    ref = han_reference(features, params, adj_i8)
    err = float(jnp.max(jnp.abs(logits - ref)))
    assert err < 0.2, f"max |pallas - reference| = {err}"

    print("KERNEL_OK")
</pallas_src>

<mosaic_0001>
module attributes {stable_mosaic.version = 11 : i64} {
  func.func @_project_kernel(%arg0: i32, %arg1: i32, %arg2: memref<16x8xf32, #tpu.memory_space<vmem>>, %arg3: memref<1x8x16xf32, #tpu.memory_space<vmem>>, %arg4: memref<1x16x2xf32, #tpu.memory_space<vmem>>, %arg5: memref<1x16x2xf32, #tpu.memory_space<vmem>>, %arg6: memref<1x16x16xf32, #tpu.memory_space<vmem>>, %arg7: memref<1x2x16xf32, #tpu.memory_space<vmem>>, %arg8: memref<1x16x2xf32, #tpu.memory_space<vmem>>) attributes {dimension_semantics = [#tpu.dimension_semantics<parallel>, #tpu.dimension_semantics<parallel>], iteration_bounds = array<i64: 2, 1>, scalar_prefetch = 0 : i64, scratch_operands = 0 : i64, tpu.core_type = #tpu.core_type<tc>, window_params = [{transform_indices = @transform_0, window_bounds = array<i64: 16, 8>}, {transform_indices = @transform_1, window_bounds = array<i64: 1, 8, 16>}, {transform_indices = @transform_2, window_bounds = array<i64: 1, 16, 2>}, {transform_indices = @transform_3, window_bounds = array<i64: 1, 16, 2>}, {transform_indices = @transform_4, window_bounds = array<i64: 1, 16, 16>}, {transform_indices = @transform_5, window_bounds = array<i64: 1, 2, 16>}, {transform_indices = @transform_6, window_bounds = array<i64: 1, 16, 2>}]} {
    %c0 = arith.constant 0 : index
    %c0_0 = arith.constant 0 : index
    %0 = vector.load %arg2[%c0, %c0_0] : memref<16x8xf32, #tpu.memory_space<vmem>>, vector<16x8xf32>
    %c0_1 = arith.constant 0 : index
    %c0_2 = arith.constant 0 : index
    %c0_3 = arith.constant 0 : index
    %1 = vector.load %arg3[%c0_1, %c0_2, %c0_3] : memref<1x8x16xf32, #tpu.memory_space<vmem>>, vector<1x8x16xf32>
    %2 = vector.shape_cast %1 : vector<1x8x16xf32> to vector<8x16xf32>
    %cst = arith.constant dense<0.000000e+00> : vector<16x16xf32>
    %3 = tpu.matmul %0, %2, %cst {dimension_numbers = #tpu.dot_dimension_numbers<[1], [0], [0], [1], [0, 0, 1, 1], [], []>} : vector<16x8xf32>, vector<8x16xf32>, vector<16x16xf32> -> vector<16x16xf32>
    %c0_4 = arith.constant 0 : index
    %c0_5 = arith.constant 0 : index
    %c0_6 = arith.constant 0 : index
    %4 = vector.load %arg6[%c0_4, %c0_5, %c0_6] : memref<1x16x16xf32, #tpu.memory_space<vmem>>, vector<1x16x16xf32>
    %5 = vector.shape_cast %4 : vector<1x16x16xf32> to vector<16x16xf32>
    %6 = vector.shape_cast %3 : vector<16x16xf32> to vector<1x16x16xf32>
    tpu.vector_store %arg6[%c0_4, %c0_5, %c0_6], %6 {strides = array<i32>} : memref<1x16x16xf32, #tpu.memory_space<vmem>>, vector<1x16x16xf32>,
    %c0_7 = arith.constant 0 : index
    %c0_8 = arith.constant 0 : index
    %c0_9 = arith.constant 0 : index
    %7 = vector.load %arg5[%c0_7, %c0_8, %c0_9] : memref<1x16x2xf32, #tpu.memory_space<vmem>>, vector<1x16x2xf32>
    %8 = vector.shape_cast %7 : vector<1x16x2xf32> to vector<16x2xf32>
    %cst_10 = arith.constant dense<0.000000e+00> : vector<16x2xf32>
    %9 = tpu.matmul %3, %8, %cst_10 {dimension_numbers = #tpu.dot_dimension_numbers<[1], [0], [0], [1], [0, 0, 1, 1], [], []>} : vector<16x16xf32>, vector<16x2xf32>, vector<16x2xf32> -> vector<16x2xf32>
    %c0_11 = arith.constant 0 : index
    %c0_12 = arith.constant 0 : index
    %c0_13 = arith.constant 0 : index
    %10 = vector.load %arg8[%c0_11, %c0_12, %c0_13] : memref<1x16x2xf32, #tpu.memory_space<vmem>>, vector<1x16x2xf32>
    %11 = vector.shape_cast %10 : vector<1x16x2xf32> to vector<16x2xf32>
    %12 = vector.shape_cast %9 : vector<16x2xf32> to vector<1x16x2xf32>
    tpu.vector_store %arg8[%c0_11, %c0_12, %c0_13], %12 {strides = array<i32>} : memref<1x16x2xf32, #tpu.memory_space<vmem>>, vector<1x16x2xf32>,
    %c0_14 = arith.constant 0 : index
    %c0_15 = arith.constant 0 : index
    %c0_16 = arith.constant 0 : index
    %13 = vector.load %arg4[%c0_14, %c0_15, %c0_16] : memref<1x16x2xf32, #tpu.memory_space<vmem>>, vector<1x16x2xf32>
    %14 = vector.shape_cast %13 : vector<1x16x2xf32> to vector<16x2xf32>
    %cst_17 = arith.constant dense<0.000000e+00> : vector<2x16xf32>
    %15 = tpu.matmul %14, %3, %cst_17 {dimension_numbers = #tpu.dot_dimension_numbers<[0], [1], [1], [0], [0, 1, 1, 0], [], []>} : vector<16x2xf32>, vector<16x16xf32>, vector<2x16xf32> -> vector<2x16xf32>
    %c0_18 = arith.constant 0 : index
    %c0_19 = arith.constant 0 : index
    %c0_20 = arith.constant 0 : index
    %16 = vector.load %arg7[%c0_18, %c0_19, %c0_20] : memref<1x2x16xf32, #tpu.memory_space<vmem>>, vector<1x2x16xf32>
    %17 = vector.shape_cast %16 : vector<1x2x16xf32> to vector<2x16xf32>
    %18 = vector.shape_cast %15 : vector<2x16xf32> to vector<1x2x16xf32>
    tpu.vector_store %arg7[%c0_18, %c0_19, %c0_20], %18 {strides = array<i32>} : memref<1x2x16xf32, #tpu.memory_space<vmem>>, vector<1x2x16xf32>,
    return
  }
  func.func @transform_0(%arg0: i32, %arg1: i32) -> (i32, i32) {
    %c0_i32 = arith.constant 0 : i32
    %c0_i32_0 = arith.constant 0 : i32
    return %arg1, %c0_i32 : i32, i32
  }
  func.func @transform_1(%arg0: i32, %arg1: i32) -> (i32, i32, i32) {
    %c0_i32 = arith.constant 0 : i32
    %c0_i32_0 = arith.constant 0 : i32
    %c0_i32_1 = arith.constant 0 : i32
    return %arg0, %c0_i32, %c0_i32_0 : i32, i32, i32
  }
  func.func @transform_2(%arg0: i32, %arg1: i32) -> (i32, i32, i32) {
    %c0_i32 = arith.constant 0 : i32
    %c0_i32_0 = arith.constant 0 : i32
    %c0_i32_1 = arith.constant 0 : i32
    return %arg0, %c0_i32, %c0_i32_0 : i32, i32, i32
  }
  func.func @transform_3(%arg0: i32, %arg1: i32) -> (i32, i32, i32) {
    %c0_i32 = arith.constant 0 : i32
    %c0_i32_0 = arith.constant 0 : i32
    %c0_i32_1 = arith.constant 0 : i32
    return %arg0, %c0_i32, %c0_i32_0 : i32, i32, i32
  }
  func.func @transform_4(%arg0: i32, %arg1: i32) -> (i32, i32, i32) {
    %c0_i32 = arith.constant 0 : i32
    %c0_i32_0 = arith.constant 0 : i32
    return %arg0, %arg1, %c0_i32 : i32, i32, i32
  }
  func.func @transform_5(%arg0: i32, %arg1: i32) -> (i32, i32, i32) {
    %c0_i32 = arith.constant 0 : i32
    %c0_i32_0 = arith.constant 0 : i32
    return %arg0, %c0_i32, %arg1 : i32, i32, i32
  }
  func.func @transform_6(%arg0: i32, %arg1: i32) -> (i32, i32, i32) {
    %c0_i32 = arith.constant 0 : i32
    %c0_i32_0 = arith.constant 0 : i32
    return %arg0, %arg1, %c0_i32 : i32, i32, i32
  }
}

module attributes {stable_mosaic.version = 11 : i64} {
  func.func @_sem_apply_kernel(%arg0: i32, %arg1: memref<2x16x16xf32, #tpu.memory_space<vmem>>, %arg2: memref<2x1xf32, #tpu.memory_space<vmem>>, %arg3: memref<16x16xf32, #tpu.memory_space<vmem>>) attributes {dimension_semantics = [#tpu.dimension_semantics<parallel>], iteration_bounds = array<i64: 1>, scalar_prefetch = 0 : i64, scratch_operands = 0 : i64, tpu.core_type = #tpu.core_type<tc>, window_params = [{transform_indices = @transform_0, window_bounds = array<i64: 2, 16, 16>}, {pipeline_mode = #tpu.pipeline_mode<synchronous>, transform_indices = @transform_1, window_bounds = array<i64: 2, 1>}, {transform_indices = @transform_2, window_bounds = array<i64: 16, 16>}]} {
    %c0 = arith.constant 0 : index
    %c0_0 = arith.constant 0 : index
    %c0_1 = arith.constant 0 : index
    %0 = vector.load %arg1[%c0, %c0_0, %c0_1] : memref<2x16x16xf32, #tpu.memory_space<vmem>>, vector<2x16x16xf32>
    %c0_2 = arith.constant 0 : index
    %c0_3 = arith.constant 0 : index
    %1 = vector.load %arg2[%c0_2, %c0_3] : memref<2x1xf32, #tpu.memory_space<vmem>>, vector<2x1xf32>
    %2 = vector.extract_strided_slice %1 {offsets = [0, 0], sizes = [1, 1], strides = [1, 1]} : vector<2x1xf32> to vector<1x1xf32>
    %3 = vector.extract_strided_slice %0 {offsets = [0, 0, 0], sizes = [1, 16, 16], strides = [1, 1, 1]} : vector<2x16x16xf32> to vector<1x16x16xf32>
    %4 = vector.shape_cast %3 : vector<1x16x16xf32> to vector<16x16xf32>
    %5 = vector.broadcast %2 : vector<1x1xf32> to vector<16x16xf32>
    %6 = arith.mulf %5, %4 : vector<16x16xf32>
    %7 = vector.extract_strided_slice %1 {offsets = [1, 0], sizes = [1, 1], strides = [1, 1]} : vector<2x1xf32> to vector<1x1xf32>
    %8 = vector.extract_strided_slice %0 {offsets = [1, 0, 0], sizes = [1, 16, 16], strides = [1, 1, 1]} : vector<2x16x16xf32> to vector<1x16x16xf32>
    %9 = vector.shape_cast %8 : vector<1x16x16xf32> to vector<16x16xf32>
    %10 = vector.broadcast %7 : vector<1x1xf32> to vector<16x16xf32>
    %11 = arith.mulf %10, %9 : vector<16x16xf32>
    %12 = arith.addf %6, %11 : vector<16x16xf32>
    %c0_4 = arith.constant 0 : index
    %c0_5 = arith.constant 0 : index
    %13 = vector.load %arg3[%c0_4, %c0_5] : memref<16x16xf32, #tpu.memory_space<vmem>>, vector<16x16xf32>
    tpu.vector_store %arg3[%c0_4, %c0_5], %12 {strides = array<i32>} : memref<16x16xf32, #tpu.memory_space<vmem>>, vector<16x16xf32>,
    return
  }
  func.func @transform_0(%arg0: i32) -> (i32, i32, i32) {
    %c0_i32 = arith.constant 0 : i32
    %c0_i32_0 = arith.constant 0 : i32
    %c0_i32_1 = arith.constant 0 : i32
    return %c0_i32, %arg0, %c0_i32_0 : i32, i32, i32
  }
  func.func @transform_1(%arg0: i32) -> (i32, i32) {
    %c0_i32 = arith.constant 0 : i32
    %c0_i32_0 = arith.constant 0 : i32
    %c0_i32_1 = arith.constant 0 : i32
    return %c0_i32, %c0_i32_0 : i32, i32
  }
  func.func @transform_2(%arg0: i32) -> (i32, i32) {
    %c0_i32 = arith.constant 0 : i32
    %c0_i32_0 = arith.constant 0 : i32
    return %arg0, %c0_i32 : i32, i32
  }
}

module attributes {stable_mosaic.version = 11 : i64} {
  func.func @_sem_beta_kernel(%arg0: i32, %arg1: memref<2x16x1xf32, #tpu.memory_space<vmem>>, %arg2: memref<2x1xf32, #tpu.memory_space<vmem>>, %arg3: memref<2x1xf32, #tpu.memory_space<vmem>>) attributes {dimension_semantics = [#tpu.dimension_semantics<arbitrary>], iteration_bounds = array<i64: 1>, scalar_prefetch = 0 : i64, scratch_operands = 1 : i64, tpu.core_type = #tpu.core_type<tc>, window_params = [{transform_indices = @transform_0, window_bounds = array<i64: 2, 16, 1>}, {pipeline_mode = #tpu.pipeline_mode<synchronous>, transform_indices = @transform_1, window_bounds = array<i64: 2, 1>}]} {
    %c0_i32 = arith.constant 0 : i32
    %0 = arith.cmpi eq, %arg0, %c0_i32 : i32
    %1 = arith.extui %0 : i1 to i32
    %c0_i32_0 = arith.constant 0 : i32
    %2 = arith.cmpi ne, %1, %c0_i32_0 : i32
    scf.if %2 {
      %cst_9 = arith.constant 0.000000e+00 : f32
      %11 = vector.broadcast %cst_9 : f32 to vector<2x1xf32>
      %c0_10 = arith.constant 0 : index
      %c0_11 = arith.constant 0 : index
      %12 = vector.load %arg3[%c0_10, %c0_11] : memref<2x1xf32, #tpu.memory_space<vmem>>, vector<2x1xf32>
      tpu.vector_store %arg3[%c0_10, %c0_11], %11 {strides = array<i32>} : memref<2x1xf32, #tpu.memory_space<vmem>>, vector<2x1xf32>,
    } else {
    }
    %c0 = arith.constant 0 : index
    %c0_1 = arith.constant 0 : index
    %3 = vector.load %arg3[%c0, %c0_1] : memref<2x1xf32, #tpu.memory_space<vmem>>, vector<2x1xf32>
    %c0_2 = arith.constant 0 : index
    %c0_3 = arith.constant 0 : index
    %c0_4 = arith.constant 0 : index
    %4 = vector.load %arg1[%c0_2, %c0_3, %c0_4] : memref<2x16x1xf32, #tpu.memory_space<vmem>>, vector<2x16x1xf32>
    %cst = arith.constant dense<0.000000e+00> : vector<2x1xf32>
    %5 = vector.multi_reduction <add>, %4, %cst [1] : vector<2x16x1xf32> to vector<2x1xf32>
    %6 = arith.addf %3, %5 : vector<2x1xf32>
    %c0_5 = arith.constant 0 : index
    %c0_6 = arith.constant 0 : index
    %7 = vector.load %arg3[%c0_5, %c0_6] : memref<2x1xf32, #tpu.memory_space<vmem>>, vector<2x1xf32>
    tpu.vector_store %arg3[%c0_5, %c0_6], %6 {strides = array<i32>} : memref<2x1xf32, #tpu.memory_space<vmem>>, vector<2x1xf32>,
    %c0_i32_7 = arith.constant 0 : i32
    %8 = arith.cmpi eq, %arg0, %c0_i32_7 : i32
    %9 = arith.extui %8 : i1 to i32
    %c0_i32_8 = arith.constant 0 : i32
    %10 = arith.cmpi ne, %9, %c0_i32_8 : i32
    scf.if %10 {
      %c0_9 = arith.constant 0 : index
      %c0_10 = arith.constant 0 : index
      %11 = vector.load %arg3[%c0_9, %c0_10] : memref<2x1xf32, #tpu.memory_space<vmem>>, vector<2x1xf32>
      %cst_11 = arith.constant 6.250000e-02 : f32
      %12 = vector.broadcast %cst_11 : f32 to vector<2x1xf32>
      %13 = arith.mulf %11, %12 : vector<2x1xf32>
      %cst_12 = arith.constant dense<0xFF800000> : vector<1xf32>
      %14 = vector.multi_reduction <maximumf>, %13, %cst_12 [0] : vector<2x1xf32> to vector<1xf32>
      %15 = vector.shape_cast %14 : vector<1xf32> to vector<1x1xf32>
      %16 = vector.broadcast %15 : vector<1x1xf32> to vector<2x1xf32>
      %17 = arith.subf %13, %16 : vector<2x1xf32>
      %18 = math.exp %17 : vector<2x1xf32>
      %cst_13 = arith.constant dense<0.000000e+00> : vector<1xf32>
      %19 = vector.multi_reduction <add>, %18, %cst_13 [0] : vector<2x1xf32> to vector<1xf32>
      %20 = vector.shape_cast %19 : vector<1xf32> to vector<1x1xf32>
      %21 = vector.broadcast %20 : vector<1x1xf32> to vector<2x1xf32>
      %22 = arith.divf %18, %21 : vector<2x1xf32>
      %c0_14 = arith.constant 0 : index
      %c0_15 = arith.constant 0 : index
      %23 = vector.load %arg2[%c0_14, %c0_15] : memref<2x1xf32, #tpu.memory_space<vmem>>, vector<2x1xf32>
      tpu.vector_store %arg2[%c0_14, %c0_15], %22 {strides = array<i32>} : memref<2x1xf32, #tpu.memory_space<vmem>>, vector<2x1xf32>,
    } else {
    }
    return
  }
  func.func @transform_0(%arg0: i32) -> (i32, i32, i32) {
    %c0_i32 = arith.constant 0 : i32
    %c0_i32_0 = arith.constant 0 : i32
    %c0_i32_1 = arith.constant 0 : i32
    return %c0_i32, %arg0, %c0_i32_0 : i32, i32, i32
  }
  func.func @transform_1(%arg0: i32) -> (i32, i32) {
    %c0_i32 = arith.constant 0 : i32
    %c0_i32_0 = arith.constant 0 : i32
    %c0_i32_1 = arith.constant 0 : i32
    return %c0_i32, %c0_i32_0 : i32, i32
  }
}

module attributes {stable_mosaic.version = 11 : i64} {
  func.func @_gat_kernel(%arg0: i32, %arg1: i32, %arg2: i32, %arg3: memref<1x16x16xf32, #tpu.memory_space<vmem>>, %arg4: memref<1x16x16xf32, #tpu.memory_space<vmem>>, %arg5: memref<1x2x16xf32, #tpu.memory_space<vmem>>, %arg6: memref<1x16x2xf32, #tpu.memory_space<vmem>>, %arg7: memref<1x1x16xf32, #tpu.memory_space<vmem>>, %arg8: memref<1x16x16xi8, #tpu.memory_space<vmem>>, %arg9: memref<16x8xf32, #tpu.memory_space<vmem>>, %arg10: memref<1x8xf32, #tpu.memory_space<vmem>>, %arg11: memref<8x1xf32, #tpu.memory_space<vmem>>, %arg12: memref<1x16x16xf32, #tpu.memory_space<vmem>>, %arg13: memref<1x16x1xf32, #tpu.memory_space<vmem>>, %arg14: memref<16x2xf32, #tpu.memory_space<vmem>>, %arg15: memref<16x2xf32, #tpu.memory_space<vmem>>, %arg16: memref<16x16xf32, #tpu.memory_space<vmem>>) attributes {dimension_semantics = [#tpu.dimension_semantics<parallel>, #tpu.dimension_semantics<parallel>, #tpu.dimension_semantics<arbitrary>], iteration_bounds = array<i64: 1, 2, 1>, scalar_prefetch = 0 : i64, scratch_operands = 3 : i64, tpu.core_type = #tpu.core_type<tc>, window_params = [{transform_indices = @transform_0, window_bounds = array<i64: 1, 16, 16>}, {transform_indices = @transform_1, window_bounds = array<i64: 1, 16, 16>}, {transform_indices = @transform_2, window_bounds = array<i64: 1, 2, 16>}, {transform_indices = @transform_3, window_bounds = array<i64: 1, 16, 2>}, {transform_indices = @transform_4, window_bounds = array<i64: 1, 1, 16>}, {transform_indices = @transform_5, window_bounds = array<i64: 1, 16, 16>}, {pipeline_mode = #tpu.pipeline_mode<synchronous>, transform_indices = @transform_6, window_bounds = array<i64: 16, 8>}, {pipeline_mode = #tpu.pipeline_mode<synchronous>, transform_indices = @transform_7, window_bounds = array<i64: 1, 8>}, {pipeline_mode = #tpu.pipeline_mode<synchronous>, transform_indices = @transform_8, window_bounds = array<i64: 8, 1>}, {transform_indices = @transform_9, window_bounds = array<i64: 1, 16, 16>}, {transform_indices = @transform_10, window_bounds = array<i64: 1, 16, 1>}]} {
    %c0_i32 = arith.constant 0 : i32
    %0 = arith.cmpi eq, %arg2, %c0_i32 : i32
    %1 = arith.extui %0 : i1 to i32
    %c0_i32_0 = arith.constant 0 : i32
    %2 = arith.cmpi ne, %1, %c0_i32_0 : i32
    scf.if %2 {
      %cst_33 = arith.constant -1.000000e+30 : f32
      %74 = vector.broadcast %cst_33 : f32 to vector<16x2xf32>
      %c0_34 = arith.constant 0 : index
      %c0_35 = arith.constant 0 : index
      %75 = vector.load %arg14[%c0_34, %c0_35] : memref<16x2xf32, #tpu.memory_space<vmem>>, vector<16x2xf32>
      tpu.vector_store %arg14[%c0_34, %c0_35], %74 {strides = array<i32>} : memref<16x2xf32, #tpu.memory_space<vmem>>, vector<16x2xf32>,
      %cst_36 = arith.constant 0.000000e+00 : f32
      %76 = vector.broadcast %cst_36 : f32 to vector<16x2xf32>
      %c0_37 = arith.constant 0 : index
      %c0_38 = arith.constant 0 : index
      %77 = vector.load %arg15[%c0_37, %c0_38] : memref<16x2xf32, #tpu.memory_space<vmem>>, vector<16x2xf32>
      tpu.vector_store %arg15[%c0_37, %c0_38], %76 {strides = array<i32>} : memref<16x2xf32, #tpu.memory_space<vmem>>, vector<16x2xf32>,
      %cst_39 = arith.constant 0.000000e+00 : f32
      %78 = vector.broadcast %cst_39 : f32 to vector<16x16xf32>
      %c0_40 = arith.constant 0 : index
      %c0_41 = arith.constant 0 : index
      %79 = vector.load %arg16[%c0_40, %c0_41] : memref<16x16xf32, #tpu.memory_space<vmem>>, vector<16x16xf32>
      tpu.vector_store %arg16[%c0_40, %c0_41], %78 {strides = array<i32>} : memref<16x16xf32, #tpu.memory_space<vmem>>, vector<16x16xf32>,
    } else {
    }
    %c0 = arith.constant 0 : index
    %c0_1 = arith.constant 0 : index
    %c0_2 = arith.constant 0 : index
    %3 = vector.load %arg6[%c0, %c0_1, %c0_2] : memref<1x16x2xf32, #tpu.memory_space<vmem>>, vector<1x16x2xf32>
    %4 = vector.shape_cast %3 : vector<1x16x2xf32> to vector<16x2xf32>
    %c0_3 = arith.constant 0 : index
    %c0_4 = arith.constant 0 : index
    %c0_5 = arith.constant 0 : index
    %5 = vector.load %arg5[%c0_3, %c0_4, %c0_5] : memref<1x2x16xf32, #tpu.memory_space<vmem>>, vector<1x2x16xf32>
    %6 = vector.shape_cast %5 : vector<1x2x16xf32> to vector<2x16xf32>
    %c0_6 = arith.constant 0 : index
    %c0_7 = arith.constant 0 : index
    %c0_8 = arith.constant 0 : index
    %7 = vector.load %arg4[%c0_6, %c0_7, %c0_8] : memref<1x16x16xf32, #tpu.memory_space<vmem>>, vector<1x16x16xf32>
    %8 = vector.shape_cast %7 : vector<1x16x16xf32> to vector<16x16xf32>
    %9 = vector.shape_cast %4 : vector<16x2xf32> to vector<16x2x1xf32>
    %10 = vector.shape_cast %6 : vector<2x16xf32> to vector<1x2x16xf32>
    %11 = vector.broadcast %9 : vector<16x2x1xf32> to vector<16x2x16xf32>
    %12 = vector.broadcast %10 : vector<1x2x16xf32> to vector<16x2x16xf32>
    %13 = arith.addf %11, %12 : vector<16x2x16xf32>
    %cst = arith.constant 0.000000e+00 : f32
    %14 = vector.broadcast %cst : f32 to vector<16x2x16xf32>
    %15 = arith.cmpf ogt, %13, %14 : vector<16x2x16xf32>
    %cst_9 = arith.constant 2.000000e-01 : f32
    %16 = vector.broadcast %cst_9 : f32 to vector<16x2x16xf32>
    %17 = arith.mulf %16, %13 : vector<16x2x16xf32>
    %18 = arith.select %15, %13, %17 : vector<16x2x16xi1>, vector<16x2x16xf32>
    %c0_10 = arith.constant 0 : index
    %c0_11 = arith.constant 0 : index
    %c0_12 = arith.constant 0 : index
    %19 = vector.load %arg8[%c0_10, %c0_11, %c0_12] : memref<1x16x16xi8, #tpu.memory_space<vmem>>, vector<1x16x16xi8>
    %20 = vector.shape_cast %19 : vector<1x16x16xi8> to vector<16x16xi8>
    %c0_i8 = arith.constant 0 : i8
    %21 = vector.broadcast %c0_i8 : i8 to vector<16x16xi8>
    %22 = arith.cmpi ne, %20, %21 : vector<16x16xi8>
    %23 = arith.extui %22 : vector<16x16xi1> to vector<16x16xi32>
    %24 = arith.sitofp %23 : vector<16x16xi32> to vector<16x16xf32>
    %cst_13 = arith.constant 1.000000e+00 : f32
    %25 = vector.broadcast %cst_13 : f32 to vector<16x16xf32>
    %26 = arith.subf %24, %25 : vector<16x16xf32>
    %cst_14 = arith.constant 1.000000e+30 : f32
    %27 = vector.broadcast %cst_14 : f32 to vector<16x16xf32>
    %28 = arith.mulf %26, %27 : vector<16x16xf32>
    %29 = vector.shape_cast %28 : vector<16x16xf32> to vector<16x1x16xf32>
    %30 = vector.broadcast %29 : vector<16x1x16xf32> to vector<16x2x16xf32>
    %31 = arith.addf %18, %30 : vector<16x2x16xf32>
    %c0_15 = arith.constant 0 : index
    %c0_16 = arith.constant 0 : index
    %32 = vector.load %arg14[%c0_15, %c0_16] : memref<16x2xf32, #tpu.memory_space<vmem>>, vector<16x2xf32>
    %cst_17 = arith.constant dense<0xFF800000> : vector<16x2xf32>
    %33 = vector.multi_reduction <maximumf>, %31, %cst_17 [2] : vector<16x2x16xf32> to vector<16x2xf32>
    %34 = arith.maximumf %32, %33 : vector<16x2xf32>
    %35 = arith.subf %32, %34 : vector<16x2xf32>
    %36 = math.exp %35 : vector<16x2xf32>
    %37 = vector.shape_cast %34 : vector<16x2xf32> to vector<16x2x1xf32>
    %38 = vector.broadcast %37 : vector<16x2x1xf32> to vector<16x2x16xf32>
    %39 = arith.subf %31, %38 : vector<16x2x16xf32>
    %40 = math.exp %39 : vector<16x2x16xf32>
    %41 = vector.shape_cast %24 : vector<16x16xf32> to vector<16x1x16xf32>
    %42 = vector.broadcast %41 : vector<16x1x16xf32> to vector<16x2x16xf32>
    %43 = arith.mulf %40, %42 : vector<16x2x16xf32>
    %c0_18 = arith.constant 0 : index
    %c0_19 = arith.constant 0 : index
    %44 = vector.load %arg15[%c0_18, %c0_19] : memref<16x2xf32, #tpu.memory_space<vmem>>, vector<16x2xf32>
    %45 = arith.mulf %36, %44 : vector<16x2xf32>
    %cst_20 = arith.constant dense<0.000000e+00> : vector<16x2xf32>
    %46 = vector.multi_reduction <add>, %43, %cst_20 [2] : vector<16x2x16xf32> to vector<16x2xf32>
    %47 = arith.addf %45, %46 : vector<16x2xf32>
    %c0_21 = arith.constant 0 : index
    %c0_22 = arith.constant 0 : index
    %48 = vector.load %arg15[%c0_21, %c0_22] : memref<16x2xf32, #tpu.memory_space<vmem>>, vector<16x2xf32>
    tpu.vector_store %arg15[%c0_21, %c0_22], %47 {strides = array<i32>} : memref<16x2xf32, #tpu.memory_space<vmem>>, vector<16x2xf32>,
    %c0_23 = arith.constant 0 : index
    %c0_24 = arith.constant 0 : index
    %49 = vector.load %arg14[%c0_23, %c0_24] : memref<16x2xf32, #tpu.memory_space<vmem>>, vector<16x2xf32>
    tpu.vector_store %arg14[%c0_23, %c0_24], %34 {strides = array<i32>} : memref<16x2xf32, #tpu.memory_space<vmem>>, vector<16x2xf32>,
    %c0_25 = arith.constant 0 : index
    %c0_26 = arith.constant 0 : index
    %50 = vector.load %arg16[%c0_25, %c0_26] : memref<16x16xf32, #tpu.memory_space<vmem>>, vector<16x16xf32>
    %51 = vector.extract_strided_slice %43 {offsets = [0, 0, 0], sizes = [16, 1, 16], strides = [1, 1, 1]} : vector<16x2x16xf32> to vector<16x1x16xf32>
    %52 = vector.shape_cast %51 : vector<16x1x16xf32> to vector<16x16xf32>
    %53 = vector.extract_strided_slice %8 {offsets = [0, 0], sizes = [16, 8], strides = [1, 1]} : vector<16x16xf32> to vector<16x8xf32>
    %cst_27 = arith.constant dense<0.000000e+00> : vector<16x8xf32>
    %54 = tpu.matmul %52, %53, %cst_27 {dimension_numbers = #tpu.dot_dimension_numbers<[1], [0], [0], [1], [0, 0, 1, 1], [], []>} : vector<16x16xf32>, vector<16x8xf32>, vector<16x8xf32> -> vector<16x8xf32>
    %55 = vector.extract_strided_slice %36 {offsets = [0, 0], sizes = [16, 1], strides = [1, 1]} : vector<16x2xf32> to vector<16x1xf32>
    %56 = vector.extract_strided_slice %50 {offsets = [0, 0], sizes = [16, 8], strides = [1, 1]} : vector<16x16xf32> to vector<16x8xf32>
    %57 = vector.broadcast %55 : vector<16x1xf32> to vector<16x8xf32>
    %58 = arith.mulf %57, %56 : vector<16x8xf32>
    %59 = arith.addf %58, %54 : vector<16x8xf32>
    %60 = vector.extract_strided_slice %43 {offsets = [0, 1, 0], sizes = [16, 1, 16], strides = [1, 1, 1]} : vector<16x2x16xf32> to vector<16x1x16xf32>
    %61 = vector.shape_cast %60 : vector<16x1x16xf32> to vector<16x16xf32>
    %62 = vector.extract_strided_slice %8 {offsets = [0, 8], sizes = [16, 8], strides = [1, 1]} : vector<16x16xf32> to vector<16x8xf32>
    %cst_28 = arith.constant dense<0.000000e+00> : vector<16x8xf32>
    %63 = tpu.matmul %61, %62, %cst_28 {dimension_numbers = #tpu.dot_dimension_numbers<[1], [0], [0], [1], [0, 0, 1, 1], [], []>} : vector<16x16xf32>, vector<16x8xf32>, vector<16x8xf32> -> vector<16x8xf32>
    %64 = vector.extract_strided_slice %36 {offsets = [0, 1], sizes = [16, 1], strides = [1, 1]} : vector<16x2xf32> to vector<16x1xf32>
    %65 = vector.extract_strided_slice %50 {offsets = [0, 8], sizes = [16, 8], strides = [1, 1]} : vector<16x16xf32> to vector<16x8xf32>
    %66 = vector.broadcast %64 : vector<16x1xf32> to vector<16x8xf32>
    %67 = arith.mulf %66, %65 : vector<16x8xf32>
    %68 = arith.addf %67, %63 : vector<16x8xf32>
    %69 = tpu.concatenate %59, %68 in 1 : vector<16x8xf32>, vector<16x8xf32> -> vector<16x16xf32>
    %c0_29 = arith.constant 0 : index
    %c0_30 = arith.constant 0 : index
    %70 = vector.load %arg16[%c0_29, %c0_30] : memref<16x16xf32, #tpu.memory_space<vmem>>, vector<16x16xf32>
    tpu.vector_store %arg16[%c0_29, %c0_30], %69 {strides = array<i32>} : memref<16x16xf32, #tpu.memory_space<vmem>>, vector<16x16xf32>,
    %c0_i32_31 = arith.constant 0 : i32
    %71 = arith.cmpi eq, %arg2, %c0_i32_31 : i32
    %72 = arith.extui %71 : i1 to i32
    %c0_i32_32 = arith.constant 0 : i32
    %73 = arith.cmpi ne, %72, %c0_i32_32 : i32
    scf.if %73 {
      %c0_33 = arith.constant 0 : index
      %c0_34 = arith.constant 0 : index
      %74 = vector.load %arg15[%c0_33, %c0_34] : memref<16x2xf32, #tpu.memory_space<vmem>>, vector<16x2xf32>
      %cst_35 = arith.constant 0.000000e+00 : f32
      %75 = vector.broadcast %cst_35 : f32 to vector<16x2xf32>
      %76 = arith.cmpf ogt, %74, %75 : vector<16x2xf32>
      %cst_36 = arith.constant 1.000000e+00 : f32
      %77 = vector.broadcast %cst_36 : f32 to vector<16x2xf32>
      %78 = arith.divf %77, %74 : vector<16x2xf32>
      %cst_37 = arith.constant 0.000000e+00 : f32
      %79 = vector.broadcast %cst_37 : f32 to vector<16x2xf32>
      %80 = arith.select %76, %78, %79 : vector<16x2xi1>, vector<16x2xf32>
      %c0_38 = arith.constant 0 : index
      %c0_39 = arith.constant 0 : index
      %81 = vector.load %arg16[%c0_38, %c0_39] : memref<16x16xf32, #tpu.memory_space<vmem>>, vector<16x16xf32>
      %82 = vector.extract_strided_slice %81 {offsets = [0, 0], sizes = [16, 8], strides = [1, 1]} : vector<16x16xf32> to vector<16x8xf32>
      %83 = vector.extract_strided_slice %80 {offsets = [0, 0], sizes = [16, 1], strides = [1, 1]} : vector<16x2xf32> to vector<16x1xf32>
      %84 = vector.broadcast %83 : vector<16x1xf32> to vector<16x8xf32>
      %85 = arith.mulf %82, %84 : vector<16x8xf32>
      %86 = vector.extract_strided_slice %81 {offsets = [0, 8], sizes = [16, 8], strides = [1, 1]} : vector<16x16xf32> to vector<16x8xf32>
      %87 = vector.extract_strided_slice %80 {offsets = [0, 1], sizes = [16, 1], strides = [1, 1]} : vector<16x2xf32> to vector<16x1xf32>
      %88 = vector.broadcast %87 : vector<16x1xf32> to vector<16x8xf32>
      %89 = arith.mulf %86, %88 : vector<16x8xf32>
      %90 = tpu.concatenate %85, %89 in 1 : vector<16x8xf32>, vector<16x8xf32> -> vector<16x16xf32>
      %c0_40 = arith.constant 0 : index
      %c0_41 = arith.constant 0 : index
      %c0_42 = arith.constant 0 : index
      %91 = vector.load %arg7[%c0_40, %c0_41, %c0_42] : memref<1x1x16xf32, #tpu.memory_space<vmem>>, vector<1x1x16xf32>
      %92 = vector.shape_cast %91 : vector<1x1x16xf32> to vector<1x16xf32>
      %93 = vector.broadcast %92 : vector<1x16xf32> to vector<16x16xf32>
      %94 = arith.addf %90, %93 : vector<16x16xf32>
      %cst_43 = arith.constant 0.000000e+00 : f32
      %95 = vector.broadcast %cst_43 : f32 to vector<16x16xf32>
      %96 = arith.cmpf ogt, %94, %95 : vector<16x16xf32>
      %cst_44 = arith.constant 0.000000e+00 : f32
      %97 = vector.broadcast %cst_44 : f32 to vector<16x16xf32>
      %98 = arith.minimumf %94, %97 : vector<16x16xf32>
      %99 = math.exp %98 : vector<16x16xf32>
      %cst_45 = arith.constant 1.000000e+00 : f32
      %100 = vector.broadcast %cst_45 : f32 to vector<16x16xf32>
      %101 = arith.subf %99, %100 : vector<16x16xf32>
      %102 = arith.select %96, %94, %101 : vector<16x16xi1>, vector<16x16xf32>
      %c0_46 = arith.constant 0 : index
      %c0_47 = arith.constant 0 : index
      %c0_48 = arith.constant 0 : index
      %103 = vector.load %arg12[%c0_46, %c0_47, %c0_48] : memref<1x16x16xf32, #tpu.memory_space<vmem>>, vector<1x16x16xf32>
      %104 = vector.shape_cast %103 : vector<1x16x16xf32> to vector<16x16xf32>
      %105 = vector.shape_cast %102 : vector<16x16xf32> to vector<1x16x16xf32>
      tpu.vector_store %arg12[%c0_46, %c0_47, %c0_48], %105 {strides = array<i32>} : memref<1x16x16xf32, #tpu.memory_space<vmem>>, vector<1x16x16xf32>,
      %c0_49 = arith.constant 0 : index
      %c0_50 = arith.constant 0 : index
      %106 = vector.load %arg9[%c0_49, %c0_50] : memref<16x8xf32, #tpu.memory_space<vmem>>, vector<16x8xf32>
      %cst_51 = arith.constant dense<0.000000e+00> : vector<16x8xf32>
      %107 = tpu.matmul %102, %106, %cst_51 {dimension_numbers = #tpu.dot_dimension_numbers<[1], [0], [0], [1], [0, 0, 1, 1], [], []>} : vector<16x16xf32>, vector<16x8xf32>, vector<16x8xf32> -> vector<16x8xf32>
      %c0_52 = arith.constant 0 : index
      %c0_53 = arith.constant 0 : index
      %108 = vector.load %arg10[%c0_52, %c0_53] : memref<1x8xf32, #tpu.memory_space<vmem>>, vector<1x8xf32>
      %109 = vector.broadcast %108 : vector<1x8xf32> to vector<16x8xf32>
      %110 = arith.addf %107, %109 : vector<16x8xf32>
      %111 = math.tanh %110 : vector<16x8xf32>
      %c0_54 = arith.constant 0 : index
      %c0_55 = arith.constant 0 : index
      %112 = vector.load %arg11[%c0_54, %c0_55] : memref<8x1xf32, #tpu.memory_space<vmem>>, vector<8x1xf32>
      %cst_56 = arith.constant dense<0.000000e+00> : vector<16x1xf32>
      %113 = tpu.matmul %111, %112, %cst_56 {dimension_numbers = #tpu.dot_dimension_numbers<[1], [0], [0], [1], [0, 0, 1, 1], [], []>} : vector<16x8xf32>, vector<8x1xf32>, vector<16x1xf32> -> vector<16x1xf32>
      %c0_57 = arith.constant 0 : index
      %c0_58 = arith.constant 0 : index
      %c0_59 = arith.constant 0 : index
      %114 = vector.load %arg13[%c0_57, %c0_58, %c0_59] : memref<1x16x1xf32, #tpu.memory_space<vmem>>, vector<1x16x1xf32>
      %115 = vector.shape_cast %114 : vector<1x16x1xf32> to vector<16x1xf32>
      %116 = vector.shape_cast %113 : vector<16x1xf32> to vector<1x16x1xf32>
      tpu.vector_store %arg13[%c0_57, %c0_58, %c0_59], %116 {strides = array<i32>} : memref<1x16x1xf32, #tpu.memory_space<vmem>>, vector<1x16x1xf32>,
    } else {
    }
    return
  }
  func.func @transform_0(%arg0: i32, %arg1: i32, %arg2: i32) -> (i32, i32, i32) {
    %c0_i32 = arith.constant 0 : i32
    %c0_i32_0 = arith.constant 0 : i32
    return %arg1, %arg0, %c0_i32 : i32, i32, i32
  }
  func.func @transform_1(%arg0: i32, %arg1: i32, %arg2: i32) -> (i32, i32, i32) {
    %c0_i32 = arith.constant 0 : i32
    %c0_i32_0 = arith.constant 0 : i32
    return %arg1, %arg2, %c0_i32 : i32, i32, i32
  }
  func.func @transform_2(%arg0: i32, %arg1: i32, %arg2: i32) -> (i32, i32, i32) {
    %c0_i32 = arith.constant 0 : i32
    %c0_i32_0 = arith.constant 0 : i32
    return %arg1, %c0_i32, %arg2 : i32, i32, i32
  }
  func.func @transform_3(%arg0: i32, %arg1: i32, %arg2: i32) -> (i32, i32, i32) {
    %c0_i32 = arith.constant 0 : i32
    %c0_i32_0 = arith.constant 0 : i32
    return %arg1, %arg0, %c0_i32 : i32, i32, i32
  }
  func.func @transform_4(%arg0: i32, %arg1: i32, %arg2: i32) -> (i32, i32, i32) {
    %c0_i32 = arith.constant 0 : i32
    %c0_i32_0 = arith.constant 0 : i32
    %c0_i32_1 = arith.constant 0 : i32
    return %arg1, %c0_i32, %c0_i32_0 : i32, i32, i32
  }
  func.func @transform_5(%arg0: i32, %arg1: i32, %arg2: i32) -> (i32, i32, i32) {
    %c0_i32 = arith.constant 0 : i32
    return %arg1, %arg0, %arg2 : i32, i32, i32
  }
  func.func @transform_6(%arg0: i32, %arg1: i32, %arg2: i32) -> (i32, i32) {
    %c0_i32 = arith.constant 0 : i32
    %c0_i32_0 = arith.constant 0 : i32
    %c0_i32_1 = arith.constant 0 : i32
    return %c0_i32, %c0_i32_0 : i32, i32
  }
  func.func @transform_7(%arg0: i32, %arg1: i32, %arg2: i32) -> (i32, i32) {
    %c0_i32 = arith.constant 0 : i32
    %c0_i32_0 = arith.constant 0 : i32
    %c0_i32_1 = arith.constant 0 : i32
    return %c0_i32, %c0_i32_0 : i32, i32
  }
  func.func @transform_8(%arg0: i32, %arg1: i32, %arg2: i32) -> (i32, i32) {
    %c0_i32 = arith.constant 0 : i32
    %c0_i32_0 = arith.constant 0 : i32
    %c0_i32_1 = arith.constant 0 : i32
    return %c0_i32, %c0_i32_0 : i32, i32
  }
  func.func @transform_9(%arg0: i32, %arg1: i32, %arg2: i32) -> (i32, i32, i32) {
    %c0_i32 = arith.constant 0 : i32
    %c0_i32_0 = arith.constant 0 : i32
    return %arg1, %arg0, %c0_i32 : i32, i32, i32
  }
  func.func @transform_10(%arg0: i32, %arg1: i32, %arg2: i32) -> (i32, i32, i32) {
    %c0_i32 = arith.constant 0 : i32
    %c0_i32_0 = arith.constant 0 : i32
    return %arg1, %arg0, %c0_i32 : i32, i32, i32
  }
}

module attributes {stable_mosaic.version = 11 : i64} {
  func.func @_project_kernel(%arg0: i32, %arg1: i32, %arg2: memref<16x16xf32, #tpu.memory_space<vmem>>, %arg3: memref<1x16x16xf32, #tpu.memory_space<vmem>>, %arg4: memref<1x16x2xf32, #tpu.memory_space<vmem>>, %arg5: memref<1x16x2xf32, #tpu.memory_space<vmem>>, %arg6: memref<1x16x16xf32, #tpu.memory_space<vmem>>, %arg7: memref<1x2x16xf32, #tpu.memory_space<vmem>>, %arg8: memref<1x16x2xf32, #tpu.memory_space<vmem>>) attributes {dimension_semantics = [#tpu.dimension_semantics<parallel>, #tpu.dimension_semantics<parallel>], iteration_bounds = array<i64: 2, 1>, scalar_prefetch = 0 : i64, scratch_operands = 0 : i64, tpu.core_type = #tpu.core_type<tc>, window_params = [{transform_indices = @transform_0, window_bounds = array<i64: 16, 16>}, {transform_indices = @transform_1, window_bounds = array<i64: 1, 16, 16>}, {transform_indices = @transform_2, window_bounds = array<i64: 1, 16, 2>}, {transform_indices = @transform_3, window_bounds = array<i64: 1, 16, 2>}, {transform_indices = @transform_4, window_bounds = array<i64: 1, 16, 16>}, {transform_indices = @transform_5, window_bounds = array<i64: 1, 2, 16>}, {transform_indices = @transform_6, window_bounds = array<i64: 1, 16, 2>}]} {
    %c0 = arith.constant 0 : index
    %c0_0 = arith.constant 0 : index
    %0 = vector.load %arg2[%c0, %c0_0] : memref<16x16xf32, #tpu.memory_space<vmem>>, vector<16x16xf32>
    %c0_1 = arith.constant 0 : index
    %c0_2 = arith.constant 0 : index
    %c0_3 = arith.constant 0 : index
    %1 = vector.load %arg3[%c0_1, %c0_2, %c0_3] : memref<1x16x16xf32, #tpu.memory_space<vmem>>, vector<1x16x16xf32>
    %2 = vector.shape_cast %1 : vector<1x16x16xf32> to vector<16x16xf32>
    %cst = arith.constant dense<0.000000e+00> : vector<16x16xf32>
    %3 = tpu.matmul %0, %2, %cst {dimension_numbers = #tpu.dot_dimension_numbers<[1], [0], [0], [1], [0, 0, 1, 1], [], []>} : vector<16x16xf32>, vector<16x16xf32>, vector<16x16xf32> -> vector<16x16xf32>
    %c0_4 = arith.constant 0 : index
    %c0_5 = arith.constant 0 : index
    %c0_6 = arith.constant 0 : index
    %4 = vector.load %arg6[%c0_4, %c0_5, %c0_6] : memref<1x16x16xf32, #tpu.memory_space<vmem>>, vector<1x16x16xf32>
    %5 = vector.shape_cast %4 : vector<1x16x16xf32> to vector<16x16xf32>
    %6 = vector.shape_cast %3 : vector<16x16xf32> to vector<1x16x16xf32>
    tpu.vector_store %arg6[%c0_4, %c0_5, %c0_6], %6 {strides = array<i32>} : memref<1x16x16xf32, #tpu.memory_space<vmem>>, vector<1x16x16xf32>,
    %c0_7 = arith.constant 0 : index
    %c0_8 = arith.constant 0 : index
    %c0_9 = arith.constant 0 : index
    %7 = vector.load %arg5[%c0_7, %c0_8, %c0_9] : memref<1x16x2xf32, #tpu.memory_space<vmem>>, vector<1x16x2xf32>
    %8 = vector.shape_cast %7 : vector<1x16x2xf32> to vector<16x2xf32>
    %cst_10 = arith.constant dense<0.000000e+00> : vector<16x2xf32>
    %9 = tpu.matmul %3, %8, %cst_10 {dimension_numbers = #tpu.dot_dimension_numbers<[1], [0], [0], [1], [0, 0, 1, 1], [], []>} : vector<16x16xf32>, vector<16x2xf32>, vector<16x2xf32> -> vector<16x2xf32>
    %c0_11 = arith.constant 0 : index
    %c0_12 = arith.constant 0 : index
    %c0_13 = arith.constant 0 : index
    %10 = vector.load %arg8[%c0_11, %c0_12, %c0_13] : memref<1x16x2xf32, #tpu.memory_space<vmem>>, vector<1x16x2xf32>
    %11 = vector.shape_cast %10 : vector<1x16x2xf32> to vector<16x2xf32>
    %12 = vector.shape_cast %9 : vector<16x2xf32> to vector<1x16x2xf32>
    tpu.vector_store %arg8[%c0_11, %c0_12, %c0_13], %12 {strides = array<i32>} : memref<1x16x2xf32, #tpu.memory_space<vmem>>, vector<1x16x2xf32>,
    %c0_14 = arith.constant 0 : index
    %c0_15 = arith.constant 0 : index
    %c0_16 = arith.constant 0 : index
    %13 = vector.load %arg4[%c0_14, %c0_15, %c0_16] : memref<1x16x2xf32, #tpu.memory_space<vmem>>, vector<1x16x2xf32>
    %14 = vector.shape_cast %13 : vector<1x16x2xf32> to vector<16x2xf32>
    %cst_17 = arith.constant dense<0.000000e+00> : vector<2x16xf32>
    %15 = tpu.matmul %14, %3, %cst_17 {dimension_numbers = #tpu.dot_dimension_numbers<[0], [1], [1], [0], [0, 1, 1, 0], [], []>} : vector<16x2xf32>, vector<16x16xf32>, vector<2x16xf32> -> vector<2x16xf32>
    %c0_18 = arith.constant 0 : index
    %c0_19 = arith.constant 0 : index
    %c0_20 = arith.constant 0 : index
    %16 = vector.load %arg7[%c0_18, %c0_19, %c0_20] : memref<1x2x16xf32, #tpu.memory_space<vmem>>, vector<1x2x16xf32>
    %17 = vector.shape_cast %16 : vector<1x2x16xf32> to vector<2x16xf32>
    %18 = vector.shape_cast %15 : vector<2x16xf32> to vector<1x2x16xf32>
    tpu.vector_store %arg7[%c0_18, %c0_19, %c0_20], %18 {strides = array<i32>} : memref<1x2x16xf32, #tpu.memory_space<vmem>>, vector<1x2x16xf32>,
    return
  }
  func.func @transform_0(%arg0: i32, %arg1: i32) -> (i32, i32) {
    %c0_i32 = arith.constant 0 : i32
    %c0_i32_0 = arith.constant 0 : i32
    return %arg1, %c0_i32 : i32, i32
  }
  func.func @transform_1(%arg0: i32, %arg1: i32) -> (i32, i32, i32) {
    %c0_i32 = arith.constant 0 : i32
    %c0_i32_0 = arith.constant 0 : i32
    %c0_i32_1 = arith.constant 0 : i32
    return %arg0, %c0_i32, %c0_i32_0 : i32, i32, i32
  }
  func.func @transform_2(%arg0: i32, %arg1: i32) -> (i32, i32, i32) {
    %c0_i32 = arith.constant 0 : i32
    %c0_i32_0 = arith.constant 0 : i32
    %c0_i32_1 = arith.constant 0 : i32
    return %arg0, %c0_i32, %c0_i32_0 : i32, i32, i32
  }
  func.func @transform_3(%arg0: i32, %arg1: i32) -> (i32, i32, i32) {
    %c0_i32 = arith.constant 0 : i32
    %c0_i32_0 = arith.constant 0 : i32
    %c0_i32_1 = arith.constant 0 : i32
    return %arg0, %c0_i32, %c0_i32_0 : i32, i32, i32
  }
  func.func @transform_4(%arg0: i32, %arg1: i32) -> (i32, i32, i32) {
    %c0_i32 = arith.constant 0 : i32
    %c0_i32_0 = arith.constant 0 : i32
    return %arg0, %arg1, %c0_i32 : i32, i32, i32
  }
  func.func @transform_5(%arg0: i32, %arg1: i32) -> (i32, i32, i32) {
    %c0_i32 = arith.constant 0 : i32
    %c0_i32_0 = arith.constant 0 : i32
    return %arg0, %c0_i32, %arg1 : i32, i32, i32
  }
  func.func @transform_6(%arg0: i32, %arg1: i32) -> (i32, i32, i32) {
    %c0_i32 = arith.constant 0 : i32
    %c0_i32_0 = arith.constant 0 : i32
    return %arg0, %arg1, %c0_i32 : i32, i32, i32
  }
}

module attributes {stable_mosaic.version = 11 : i64} {
  func.func @_linear_kernel(%arg0: i32, %arg1: memref<16x16xf32, #tpu.memory_space<vmem>>, %arg2: memref<16x4xf32, #tpu.memory_space<vmem>>, %arg3: memref<1x4xf32, #tpu.memory_space<vmem>>, %arg4: memref<16x4xf32, #tpu.memory_space<vmem>>) attributes {dimension_semantics = [#tpu.dimension_semantics<parallel>], iteration_bounds = array<i64: 1>, scalar_prefetch = 0 : i64, scratch_operands = 0 : i64, tpu.core_type = #tpu.core_type<tc>, window_params = [{transform_indices = @transform_0, window_bounds = array<i64: 16, 16>}, {pipeline_mode = #tpu.pipeline_mode<synchronous>, transform_indices = @transform_1, window_bounds = array<i64: 16, 4>}, {pipeline_mode = #tpu.pipeline_mode<synchronous>, transform_indices = @transform_2, window_bounds = array<i64: 1, 4>}, {transform_indices = @transform_3, window_bounds = array<i64: 16, 4>}]} {
    %c0 = arith.constant 0 : index
    %c0_0 = arith.constant 0 : index
    %0 = vector.load %arg1[%c0, %c0_0] : memref<16x16xf32, #tpu.memory_space<vmem>>, vector<16x16xf32>
    %c0_1 = arith.constant 0 : index
    %c0_2 = arith.constant 0 : index
    %1 = vector.load %arg2[%c0_1, %c0_2] : memref<16x4xf32, #tpu.memory_space<vmem>>, vector<16x4xf32>
    %cst = arith.constant dense<0.000000e+00> : vector<16x4xf32>
    %2 = tpu.matmul %0, %1, %cst {dimension_numbers = #tpu.dot_dimension_numbers<[1], [0], [0], [1], [0, 0, 1, 1], [], []>} : vector<16x16xf32>, vector<16x4xf32>, vector<16x4xf32> -> vector<16x4xf32>
    %c0_3 = arith.constant 0 : index
    %c0_4 = arith.constant 0 : index
    %3 = vector.load %arg3[%c0_3, %c0_4] : memref<1x4xf32, #tpu.memory_space<vmem>>, vector<1x4xf32>
    %4 = vector.broadcast %3 : vector<1x4xf32> to vector<16x4xf32>
    %5 = arith.addf %2, %4 : vector<16x4xf32>
    %c0_5 = arith.constant 0 : index
    %c0_6 = arith.constant 0 : index
    %6 = vector.load %arg4[%c0_5, %c0_6] : memref<16x4xf32, #tpu.memory_space<vmem>>, vector<16x4xf32>
    tpu.vector_store %arg4[%c0_5, %c0_6], %5 {strides = array<i32>} : memref<16x4xf32, #tpu.memory_space<vmem>>, vector<16x4xf32>,
    return
  }
  func.func @transform_0(%arg0: i32) -> (i32, i32) {
    %c0_i32 = arith.constant 0 : i32
    %c0_i32_0 = arith.constant 0 : i32
    return %arg0, %c0_i32 : i32, i32
  }
  func.func @transform_1(%arg0: i32) -> (i32, i32) {
    %c0_i32 = arith.constant 0 : i32
    %c0_i32_0 = arith.constant 0 : i32
    %c0_i32_1 = arith.constant 0 : i32
    return %c0_i32, %c0_i32_0 : i32, i32
  }
  func.func @transform_2(%arg0: i32) -> (i32, i32) {
    %c0_i32 = arith.constant 0 : i32
    %c0_i32_0 = arith.constant 0 : i32
    %c0_i32_1 = arith.constant 0 : i32
    return %c0_i32, %c0_i32_0 : i32, i32
  }
  func.func @transform_3(%arg0: i32) -> (i32, i32) {
    %c0_i32 = arith.constant 0 : i32
    %c0_i32_0 = arith.constant 0 : i32
    return %arg0, %c0_i32 : i32, i32
  }
}

</mosaic_0001>

<llo_original>
// kernel: han_forward.9
$region0: #{han_forward.9}
  #allocation0 [shape = 'u32[]', space=smem, size = 0x4, offset = 0x4, fixed_abs, tag = 'smem constant byte address 0x4 - core index']
  #allocation1 [shape = 'u32[144,128]{1,0:T(1,128)}', space=vmem, size = 0x12000, scoped, tag = 'internal scratch']
  %s0 = inlined_call_operand.vmem [shape: f32[16,8], index: 0, kind: input, shape index: {}]
  %s1 = inlined_call_operand.vmem [shape: f32[2,8,16], index: 1, kind: input, shape index: {}]
  %s2 = inlined_call_operand.vmem [shape: f32[2,16,2], index: 2, kind: input, shape index: {}]
  %s3 = inlined_call_operand.vmem [shape: f32[2,16,2], index: 3, kind: input, shape index: {}]
  %s4 = inlined_call_operand.vmem [shape: f32[2,16,16], index: 4, kind: output, shape index: {0}]
  %s5 = inlined_call_operand.vmem [shape: f32[2,2,16], index: 5, kind: output, shape index: {1}]
  %s6 = inlined_call_operand.vmem [shape: f32[2,16,2], index: 6, kind: output, shape index: {2}]
  %7 = xla_tuple %s4, %s5, %s6
  %s8 = sld [smem:[#allocation0]]
  $region65: #{han_forward.9} parent=0
    _
  %s10 = ssub.s32 1, %s8
  %s11 = scalar_select 0, %s10, %s8
  loop: start=0, step=1, limit=4
  $region2: #{han_forward.9} parent=0 // loop_pre_header
    _
  $region3: #{han_forward.9} parent=0 // loop_header
    %s13 = sphi 0, %s17
    %p14 = scmp.ge.s32.totalorder %s13, 4
    %s20 = sphi 0, %s32
    %s21 = sphi 0, %s28
    %s22 = sphi 0, %s20
    %s23 = sphi 0, %s21
    %s24 = sphi 0, %s22
    %s25 = sphi 0, %s23
    %s35 = sphi 0, %s37
    %s38 = sphi 0, %s35
    %s39 = sphi 0, %s38
    %s55 = sphi 0, %s39
    %s61 = sphi 0, %s63
    %s64 = sphi 0, %s61
    %s65 = sphi 0, %s64
    %s81 = sphi 0, %s65
    %s87 = sphi 0, %s89
    %s90 = sphi 0, %s87
    %s91 = sphi 0, %s90
    %s107 = sphi 0, %s91
    %s113 = sphi 0, %s115
    %s116 = sphi 0, %s113
    %s117 = sphi 0, %s116
    %s133 = sphi 0, %s117
    %s141 = sphi 0, %s143
    %s144 = sphi 0, %s141
    %s145 = sphi 0, %s144
    %s161 = sphi 0, %s145
    %s169 = sphi 0, %s171
    %s172 = sphi 0, %s169
    %s173 = sphi 0, %s172
    %s189 = sphi 0, %s173
    %s197 = sphi 0, %s199
    %s200 = sphi 0, %s197
    %s201 = sphi 0, %s200
    %s217 = sphi 0, %s201
  $region4: #{han_forward.9} parent=0 // loop_header_branch
    %16 = sbr.rel (%p14) target = $region8
  $region5: #{han_forward.9} parent=0 // loop_body
    %s18 = ssub.s32 %s13, 1
    %s19 = ssub.s32 %s13, 2
    %s26 = sadd.s32 1, %s21
    %p27 = scmp.ge.s32.totalorder %s26, 1
    %s28 = scalar_select %p27, 0, %s26
    %s29 = sadd.s32 1, %s20
    %s30 = scalar_select %p27, %s29, %s20
    %p31 = scmp.ge.s32.totalorder %s30, 2
    %s32 = scalar_select %p31, 0, %s30
    %s33 = ssub.s32 %s21, %s28
    %p34 = scmp.eq.s32.totalorder %s33, 0
    %s36 = sadd.s32 %s35, 1
    %s37 = scalar_select %p34, %s35, %s36
    %p40 = pneg %p34
    %p41 = scmp.eq.s32.totalorder %s13, 1
    %p42 = por %p40, %p41
    %p43 = scmp.ne.s32.totalorder %s35, %s38
    %p44 = scmp.eq.s32.totalorder %s13, 0
    %p45 = por %p43, %p44
    %p46 = scmp.ne.s32.totalorder %s35, %s38
    %p47 = scmp.eq.s32.totalorder %s18, 1
    %p48 = por %p46, %p47
    %p49 = scmp.ne.s32.totalorder %s38, %s39
    %p50 = scmp.eq.s32.totalorder %s18, 0
    %p51 = por %p49, %p50
    %p52 = scmp.ne.s32.totalorder %s38, %s39
    %p53 = scmp.eq.s32.totalorder %s19, 1
    %p54 = por %p52, %p53
    %p56 = scmp.ne.s32.totalorder %s39, %s55
    %p57 = scmp.eq.s32.totalorder %s19, 0
    %p58 = por %p56, %p57
    %s59 = ssub.s32 %s20, %s32
    %p60 = scmp.eq.s32.totalorder %s59, 0
    %s62 = sadd.s32 %s61, 1
    %s63 = scalar_select %p60, %s61, %s62
    %p66 = pneg %p60
    %p67 = scmp.eq.s32.totalorder %s13, 1
    %p68 = por %p66, %p67
    %p69 = scmp.ne.s32.totalorder %s61, %s64
    %p70 = scmp.eq.s32.totalorder %s13, 0
    %p71 = por %p69, %p70
    %p72 = scmp.ne.s32.totalorder %s61, %s64
    %p73 = scmp.eq.s32.totalorder %s18, 1
    %p74 = por %p72, %p73
    %p75 = scmp.ne.s32.totalorder %s64, %s65
    %p76 = scmp.eq.s32.totalorder %s18, 0
    %p77 = por %p75, %p76
    %p78 = scmp.ne.s32.totalorder %s64, %s65
    %p79 = scmp.eq.s32.totalorder %s19, 1
    %p80 = por %p78, %p79
    %p82 = scmp.ne.s32.totalorder %s65, %s81
    %p83 = scmp.eq.s32.totalorder %s19, 0
    %p84 = por %p82, %p83
    %s85 = ssub.s32 %s20, %s32
    %p86 = scmp.eq.s32.totalorder %s85, 0
    %s88 = sadd.s32 %s87, 1
    %s89 = scalar_select %p86, %s87, %s88
    %p92 = pneg %p86
    %p93 = scmp.eq.s32.totalorder %s13, 1
    %p94 = por %p92, %p93
    %p95 = scmp.ne.s32.totalorder %s87, %s90
    %p96 = scmp.eq.s32.totalorder %s13, 0
    %p97 = por %p95, %p96
    %p98 = scmp.ne.s32.totalorder %s87, %s90
    %p99 = scmp.eq.s32.totalorder %s18, 1
    %p100 = por %p98, %p99
    %p101 = scmp.ne.s32.totalorder %s90, %s91
    %p102 = scmp.eq.s32.totalorder %s18, 0
    %p103 = por %p101, %p102
    %p104 = scmp.ne.s32.totalorder %s90, %s91
    %p105 = scmp.eq.s32.totalorder %s19, 1
    %p106 = por %p104, %p105
    %p108 = scmp.ne.s32.totalorder %s91, %s107
    %p109 = scmp.eq.s32.totalorder %s19, 0
    %p110 = por %p108, %p109
    %s111 = ssub.s32 %s20, %s32
    %p112 = scmp.eq.s32.totalorder %s111, 0
    %s114 = sadd.s32 %s113, 1
    %s115 = scalar_select %p112, %s113, %s114
    %p118 = pneg %p112
    %p119 = scmp.eq.s32.totalorder %s13, 1
    %p120 = por %p118, %p119
    %p121 = scmp.ne.s32.totalorder %s113, %s116
    %p122 = scmp.eq.s32.totalorder %s13, 0
    %p123 = por %p121, %p122
    %p124 = scmp.ne.s32.totalorder %s113, %s116
    %p125 = scmp.eq.s32.totalorder %s18, 1
    %p126 = por %p124, %p125
    %p127 = scmp.ne.s32.totalorder %s116, %s117
    %p128 = scmp.eq.s32.totalorder %s18, 0
    %p129 = por %p127, %p128
    %p130 = scmp.ne.s32.totalorder %s116, %s117
    %p131 = scmp.eq.s32.totalorder %s19, 1
    %p132 = por %p130, %p131
    %p134 = scmp.ne.s32.totalorder %s117, %s133
    %p135 = scmp.eq.s32.totalorder %s19, 0
    %p136 = por %p134, %p135
    %s137 = ssub.s32 %s20, %s32
    %s138 = ssub.s32 %s21, %s28
    %s139 = sor.u32 %s137, %s138
    %p140 = scmp.eq.s32.totalorder %s139, 0
    %s142 = sadd.s32 %s141, 1
    %s143 = scalar_select %p140, %s141, %s142
    %p146 = pneg %p140
    %p147 = scmp.eq.s32.totalorder %s13, 1
    %p148 = por %p146, %p147
    %p149 = scmp.ne.s32.totalorder %s141, %s144
    %p150 = scmp.eq.s32.totalorder %s13, 0
    %p151 = por %p149, %p150
    %p152 = scmp.ne.s32.totalorder %s141, %s144
    %p153 = scmp.eq.s32.totalorder %s18, 1
    %p154 = por %p152, %p153
    %p155 = scmp.ne.s32.totalorder %s144, %s145
    %p156 = scmp.eq.s32.totalorder %s18, 0
    %p157 = por %p155, %p156
    %p158 = scmp.ne.s32.totalorder %s144, %s145
    %p159 = scmp.eq.s32.totalorder %s19, 1
    %p160 = por %p158, %p159
    %p162 = scmp.ne.s32.totalorder %s145, %s161
    %p163 = scmp.eq.s32.totalorder %s19, 0
    %p164 = por %p162, %p163
    %s165 = ssub.s32 %s20, %s32
    %s166 = ssub.s32 %s21, %s28
    %s167 = sor.u32 %s165, %s166
    %p168 = scmp.eq.s32.totalorder %s167, 0
    %s170 = sadd.s32 %s169, 1
    %s171 = scalar_select %p168, %s169, %s170
    %p174 = pneg %p168
    %p175 = scmp.eq.s32.totalorder %s13, 1
    %p176 = por %p174, %p175
    %p177 = scmp.ne.s32.totalorder %s169, %s172
    %p178 = scmp.eq.s32.totalorder %s13, 0
    %p179 = por %p177, %p178
    %p180 = scmp.ne.s32.totalorder %s169, %s172
    %p181 = scmp.eq.s32.totalorder %s18, 1
    %p182 = por %p180, %p181
    %p183 = scmp.ne.s32.totalorder %s172, %s173
    %p184 = scmp.eq.s32.totalorder %s18, 0
    %p185 = por %p183, %p184
    %p186 = scmp.ne.s32.totalorder %s172, %s173
    %p187 = scmp.eq.s32.totalorder %s19, 1
    %p188 = por %p186, %p187
    %p190 = scmp.ne.s32.totalorder %s173, %s189
    %p191 = scmp.eq.s32.totalorder %s19, 0
    %p192 = por %p190, %p191
    %s193 = ssub.s32 %s20, %s32
    %s194 = ssub.s32 %s21, %s28
    %s195 = sor.u32 %s193, %s194
    %p196 = scmp.eq.s32.totalorder %s195, 0
    %s198 = sadd.s32 %s197, 1
    %s199 = scalar_select %p196, %s197, %s198
    %p202 = pneg %p196
    %p203 = scmp.eq.s32.totalorder %s13, 1
    %p204 = por %p202, %p203
    %p205 = scmp.ne.s32.totalorder %s197, %s200
    %p206 = scmp.eq.s32.totalorder %s13, 0
    %p207 = por %p205, %p206
    %p208 = scmp.ne.s32.totalorder %s197, %s200
    %p209 = scmp.eq.s32.totalorder %s18, 1
    %p210 = por %p208, %p209
    %p211 = scmp.ne.s32.totalorder %s200, %s201
    %p212 = scmp.eq.s32.totalorder %s18, 0
    %p213 = por %p211, %p212
    %p214 = scmp.ne.s32.totalorder %s200, %s201
    %p215 = scmp.eq.s32.totalorder %s19, 1
    %p216 = por %p214, %p215
    %p218 = scmp.ne.s32.totalorder %s201, %s217
    %p219 = scmp.eq.s32.totalorder %s19, 0
    %p220 = por %p218, %p219
    %p221 = scmp.le.s32.totalorder 1, %s13
    %p222 = scmp.lt.s32.totalorder %s13, 3
    %p223 = pnand %p221, %p222
    %p224 = pneg %p223
    // Predicated region
    $region9: #{han_forward.9} parent=5 // pred_check
      _
    $region10: #{han_forward.9} parent=5 // pred_check_branch
      %226 = sbr.rel (%p223) target = $region12
    $region11: #{han_forward.9} parent=5 // pred_region
      %s227 = ssub.s32 %s13, 1
      // Predicated region
      $region13: #{han_forward.9} parent=11 // pred_check
        %p228 = pneg %p51
      $region14: #{han_forward.9} parent=11 // pred_check_branch
        %230 = sbr.rel (%p228) target = $region16
      $region15: #{han_forward.9} parent=11 // pred_region
        %s231 = smul.u32 2, %s23
        %p232 = scmp.lt.s32.totalorder %s231, 1
        %s233 = scalar_select %p232, %s231, 1
        %s234 = smul.addr %s233, 8
        %s235 = scalar_lea.vmem %s0, %s234
        %s236 = smul.u32 2, %s23
      $region16: #{han_forward.9} parent=11 // pred_fallthru
        _
    $region12: #{han_forward.9} parent=5 // pred_fallthru
      _
    %p237 = scmp.lt.s32.totalorder %s13, 2
    // Predicated region
    $region17: #{han_forward.9} parent=5 // pred_check
      %p238 = pneg %p237
    $region18: #{han_forward.9} parent=5 // pred_check_branch
      %240 = sbr.rel (%p238) target = $region20
    $region19: #{han_forward.9} parent=5 // pred_region
      // Predicated region
      $region21: #{han_forward.9} parent=19 // pred_check
        %p241 = pneg %p71
      $region22: #{han_forward.9} parent=19 // pred_check_branch
        %243 = sbr.rel (%p241) target = $region24
      $region23: #{han_forward.9} parent=19 // pred_region
        %p244 = scmp.lt.s32.totalorder %s20, 1
        %s245 = scalar_select %p244, %s20, 1
        %s246 = smul.addr %s245, 8
        %s247 = scalar_lea.vmem %s1, %s246
      $region24: #{han_forward.9} parent=19 // pred_fallthru
        _
      // Predicated region
      $region25: #{han_forward.9} parent=19 // pred_check
        %p248 = pneg %p97
      $region26: #{han_forward.9} parent=19 // pred_check_branch
        %250 = sbr.rel (%p248) target = $region28
      $region27: #{han_forward.9} parent=19 // pred_region
        %p251 = scmp.lt.s32.totalorder %s20, 1
        %s252 = scalar_select %p251, %s20, 1
        %s253 = smul.addr %s252, 2
        %s254 = smul.addr %s253, 8
        %s255 = scalar_lea.vmem %s2, %s254
      $region28: #{han_forward.9} parent=19 // pred_fallthru
        _
      // Predicated region
      $region29: #{han_forward.9} parent=19 // pred_check
        %p256 = pneg %p123
      $region30: #{han_forward.9} parent=19 // pred_check_branch
        %258 = sbr.rel (%p256) target = $region32
      $region31: #{han_forward.9} parent=19 // pred_region
        %p259 = scmp.lt.s32.totalorder %s20, 1
        %s260 = scalar_select %p259, %s20, 1
        %s261 = smul.addr %s260, 2
        %s262 = smul.addr %s261, 8
        %s263 = scalar_lea.vmem %s3, %s262
      $region32: #{han_forward.9} parent=19 // pred_fallthru
        _
    $region20: #{han_forward.9} parent=5 // pred_fallthru
      _
    %p264 = scmp.le.s32.totalorder 1, %s13
    %p265 = scmp.lt.s32.totalorder %s13, 3
    %p266 = pnand %p264, %p265
    %p267 = pneg %p266
    // Predicated region
    $region33: #{han_forward.9} parent=5 // pred_check
      _
    $region34: #{han_forward.9} parent=5 // pred_check_branch
      %269 = sbr.rel (%p266) target = $region36
    $region35: #{han_forward.9} parent=5 // pred_region
      %s270 = ssub.s32 %s13, 1
      %s271 = smul.u32 2, %s23
      %p272 = scmp.lt.s32.totalorder %s271, 1
      %s273 = scalar_select %p272, %s271, 1
      %s274 = smul.addr %s273, 8
      %s275 = scalar_lea.vmem %s0, %s274
      %p276 = pneg %p51
      %p277 = pneg %p48
      %p278 = scmp.lt.s32.totalorder %s22, 1
      %s279 = scalar_select %p278, %s22, 1
      %s280 = smul.addr %s279, 8
      %s281 = scalar_lea.vmem %s1, %s280
      %p282 = pneg %p77
      %p283 = pneg %p74
      %p284 = scmp.lt.s32.totalorder %s22, 1
      %s285 = scalar_select %p284, %s22, 1
      %s286 = smul.addr %s285, 2
      %s287 = smul.addr %s286, 8
      %s288 = scalar_lea.vmem %s2, %s287
      %p289 = pneg %p103
      %p290 = pneg %p100
      %p291 = scmp.lt.s32.totalorder %s22, 1
      %s292 = scalar_select %p291, %s22, 1
      %s293 = smul.addr %s292, 2
      %s294 = smul.addr %s293, 8
      %s295 = scalar_lea.vmem %s3, %s294
      %p296 = pneg %p129
      %p297 = pneg %p126
      %p298 = pneg %p157
      %p299 = pneg %p154
      %s300 = smul.u32 2, %s23
      %p301 = scmp.lt.s32.totalorder %s22, 1
      %s302 = scalar_select %p301, %s22, 1
      %p303 = scmp.lt.s32.totalorder %s300, 1
      %s304 = scalar_select %p303, %s300, 1
      %s305 = smul.addr %s302, 2
      %s306 = sadd.s32 %s304, %s305
      %s307 = smul.addr %s306, 8
      %s308 = scalar_lea.vmem %s4, %s307
      %p309 = pneg %p185
      %p310 = pneg %p182
      %p311 = scmp.lt.s32.totalorder %s22, 1
      %s312 = scalar_select %p311, %s22, 1
      %p313 = scmp.lt.s32.totalorder %s23, 0
      %s314 = scalar_select %p313, %s23, 0
      %s315 = sadd.s32 %s314, %s312
      %s316 = smul.addr %s315, 2
      %s317 = scalar_lea.vmem %s5, %s316
      %p318 = pneg %p213
      %p319 = pneg %p210
      %s320 = smul.u32 2, %s23
      %p321 = scmp.lt.s32.totalorder %s22, 1
      %s322 = scalar_select %p321, %s22, 1
      %p323 = scmp.lt.s32.totalorder %s320, 1
      %s324 = scalar_select %p323, %s320, 1
      %s325 = smul.addr %s322, 2
      %s326 = sadd.s32 %s324, %s325
      %s327 = smul.addr %s326, 8
      %s328 = scalar_lea.vmem %s6, %s327
      %s329 = smul.u32 2, %s23
      %p330 = scmp.lt.s32.totalorder %s329, 1
      %s331 = scalar_select %p330, %s329, 1
      %s332 = smul.addr %s331, 8
      %s333 = scalar_lea.vmem %s0, %s332
      %s334 = smul.u32 2, %s23
      %p335 = scmp.lt.s32.totalorder %s22, 1
      %s336 = scalar_select %p335, %s22, 1
      %s337 = smul.addr %s336, 8
      %s338 = scalar_lea.vmem %s1, %s337
      %p339 = scmp.lt.s32.totalorder %s22, 1
      %s340 = scalar_select %p339, %s22, 1
      %s341 = smul.addr %s340, 2
      %s342 = smul.addr %s341, 8
      %s343 = scalar_lea.vmem %s2, %s342
      %p344 = scmp.lt.s32.totalorder %s22, 1
      %s345 = scalar_select %p344, %s22, 1
      %s346 = smul.addr %s345, 2
      %s347 = smul.addr %s346, 8
      %s348 = scalar_lea.vmem %s3, %s347
      %s349 = smul.u32 2, %s23
      %p350 = scmp.lt.s32.totalorder %s22, 1
      %s351 = scalar_select %p350, %s22, 1
      %p352 = scmp.lt.s32.totalorder %s349, 1
      %s353 = scalar_select %p352, %s349, 1
      %s354 = smul.addr %s351, 2
      %s355 = sadd.s32 %s353, %s354
      %s356 = smul.addr %s355, 8
      %s357 = scalar_lea.vmem %s4, %s356
      %s358 = smul.u32 2, %s23
      %p359 = scmp.lt.s32.totalorder %s22, 1
      %s360 = scalar_select %p359, %s22, 1
      %p361 = scmp.lt.s32.totalorder %s23, 0
      %s362 = scalar_select %p361, %s23, 0
      %s363 = sadd.s32 %s362, %s360
      %s364 = smul.addr %s363, 2
      %s365 = scalar_lea.vmem %s5, %s364
      %s366 = smul.u32 2, %s23
      %p367 = scmp.lt.s32.totalorder %s22, 1
      %s368 = scalar_select %p367, %s22, 1
      %p369 = scmp.lt.s32.totalorder %s366, 1
      %s370 = scalar_select %p369, %s366, 1
      %s371 = smul.addr %s368, 2
      %s372 = sadd.s32 %s370, %s371
      %s373 = smul.addr %s372, 8
      %s374 = scalar_lea.vmem %s6, %s373
      %s375 = smul.u32 2, %s23
      %v376 = vld [vmem:[%s333] sm:$0xff]
      %v377 = vld [vmem:[%s333 + $0x8] sm:$0xff]
      %v378 = vld [vmem:[%s338] sm:$0xff]
      %vm379 = vcmask 64512
      %v381 = vsel %vm379, %v376, 0
      %v384 = vsel %vm379, %v377, 0
      %386 = vmatprep.subr.mxu0 0.0
      %387 = vmatpush1.msra.mxu0 %v378
      %388 = vmatprep.subr.mxu0 0.0
      %389 = vmatpush1.msra.mxu0 0.0
      %390 = vmatprep.subr.mxu0 0.0
      %391 = vmatpush1.msra.mxu0 0.0
      %392 = vmatprep.subr.mxu0 0.0
      %393 = vmatpush1.msra.mxu0 0.0
      %394 = vmatprep.subr.mxu0 0.0
      %395 = vmatpush1.msra.mxu0 0.0
      %396 = vmatprep.subr.mxu0 0.0
      %397 = vmatpush1.msra.mxu0 0.0
      %398 = vmatprep.subr.mxu0 0.0
      %399 = vmatpush1.msra.mxu0 0.0
      %400 = vmatprep.subr.mxu0 0.0
      %401 = vmatpush1.msra.mxu0 0.0
      %402 = vmatprep.subr.mxu0 0.0
      %403 = vmatpush1.msra.mxu0 0.0
      %404 = vmatprep.subr.mxu0 0.0
      %405 = vmatpush1.msra.mxu0 0.0
      %406 = vmatprep.subr.mxu0 0.0
      %407 = vmatpush1.msra.mxu0 0.0
      %408 = vmatprep.subr.mxu0 0.0
      %409 = vmatpush1.msra.mxu0 0.0
      %410 = vmatprep.subr.mxu0 0.0
      %411 = vmatpush1.msra.mxu0 0.0
      %412 = vmatprep.subr.mxu0 0.0
      %413 = vmatpush1.msra.mxu0 0.0
      %414 = vmatprep.subr.mxu0 0.0
      %415 = vmatpush1.msra.mxu0 0.0
      %416 = vmatprep.subr.mxu0 0.0
      %417 = vmatpush1.msra.mxu0 0.0
      %418 = vmatprep.subr.mxu0 0.0
      %419 = vmatpush1.msra.mxu0 0.0
      %420 = vmatprep.subr.mxu0 0.0
      %421 = vmatpush1.msra.mxu0 0.0
      %422 = vmatprep.subr.mxu0 0.0
      %423 = vmatpush1.msra.mxu0 0.0
      %424 = vmatprep.subr.mxu0 0.0
      %425 = vmatpush1.msra.mxu0 0.0
      %426 = vmatprep.subr.mxu0 0.0
      %427 = vmatpush1.msra.mxu0 0.0
      %428 = vmatprep.subr.mxu0 0.0
      %429 = vmatpush1.msra.mxu0 0.0
      %430 = vmatprep.subr.mxu0 0.0
      %431 = vmatpush1.msra.mxu0 0.0
      %432 = vmatprep.subr.mxu0 0.0
      %433 = vmatpush1.msra.mxu0 0.0
      %434 = vmatprep.subr.mxu0 0.0
      %435 = vmatpush1.msra.mxu0 0.0
      %436 = vmatprep.subr.mxu0 0.0
      %437 = vmatpush1.msra.mxu0 0.0
      %438 = vmatprep.subr.mxu0 0.0
      %439 = vmatpush1.msra.mxu0 0.0
      %440 = vmatprep.subr.mxu0 0.0
      %441 = vmatpush1.msra.mxu0 0.0
      %442 = vmatprep.subr.mxu0 0.0
      %443 = vmatpush1.msra.mxu0 0.0
      %444 = vmatprep.subr.mxu0 0.0
      %445 = vmatpush1.msra.mxu0 0.0
      %446 = vmatprep.subr.mxu0 0.0
      %447 = vmatpush1.msra.mxu0 0.0
      %448 = vmatprep.subr.mxu0 0.0
      %449 = vmatpush1.msra.mxu0 0.0
      %450 = vmatprep.mubr.f32.mxu0 0.0
      %451 = vmatmul.mubr.f32.gmra.mrb[0].mxu0 %v381
      %v452 = vpop.f32.mrb[0].mxu0
      %v453 = vadd.f32 0.0, %v452
      %v454 = vpop.f32.mrb[0].mxu0
      %455 = vmatprep.mubr.f32.mxu0 0.0
      %456 = vmatmul.mubr.f32.gmra.mrb[0].mxu0 %v384
      %v457 = vpop.f32.mrb[0].mxu0
      %v458 = vadd.f32 0.0, %v457
      %v459 = vpop.f32.mrb[0].mxu0
      %460 = vdwg.mxu0
      %vm461 = vcmask 130048
      %462 = vst.msk [vmem:[%s357] sm:$0xff] %vm461, %v453
      %463 = vst.msk [vmem:[%s357 + $0x8] sm:$0xff] %vm461, %v458
      %v464 = vld [vmem:[%s348] sm:$0xff]
      %v465 = vld [vmem:[%s348 + $0x8] sm:$0xff]
      %v467 = vsel %vm461, %v453, 0
      %v470 = vsel %vm461, %v458, 0
      %472 = vmatprep.subr.mxu0 0.0
      %473 = vmatpush1.msra.mxu0 %v464
      %474 = vmatprep.subr.mxu0 0.0
      %475 = vmatpush1.msra.mxu0 %v465
      %476 = vmatprep.subr.mxu0 0.0
      %477 = vmatpush1.msra.mxu0 0.0
      %478 = vmatprep.subr.mxu0 0.0
      %479 = vmatpush1.msra.mxu0 0.0
      %480 = vmatprep.subr.mxu0 0.0
      %481 = vmatpush1.msra.mxu0 0.0
      %482 = vmatprep.subr.mxu0 0.0
      %483 = vmatpush1.msra.mxu0 0.0
      %484 = vmatprep.subr.mxu0 0.0
      %485 = vmatpush1.msra.mxu0 0.0
      %486 = vmatprep.subr.mxu0 0.0
      %487 = vmatpush1.msra.mxu0 0.0
      %488 = vmatprep.subr.mxu0 0.0
      %489 = vmatpush1.msra.mxu0 0.0
      %490 = vmatprep.subr.mxu0 0.0
      %491 = vmatpush1.msra.mxu0 0.0
      %492 = vmatprep.subr.mxu0 0.0
      %493 = vmatpush1.msra.mxu0 0.0
      %494 = vmatprep.subr.mxu0 0.0
      %495 = vmatpush1.msra.mxu0 0.0
      %496 = vmatprep.subr.mxu0 0.0
      %497 = vmatpush1.msra.mxu0 0.0
      %498 = vmatprep.subr.mxu0 0.0
      %499 = vmatpush1.msra.mxu0 0.0
      %500 = vmatprep.subr.mxu0 0.0
      %501 = vmatpush1.msra.mxu0 0.0
      %502 = vmatprep.subr.mxu0 0.0
      %503 = vmatpush1.msra.mxu0 0.0
      %504 = vmatprep.subr.mxu0 0.0
      %505 = vmatpush1.msra.mxu0 0.0
      %506 = vmatprep.subr.mxu0 0.0
      %507 = vmatpush1.msra.mxu0 0.0
      %508 = vmatprep.subr.mxu0 0.0
      %509 = vmatpush1.msra.mxu0 0.0
      %510 = vmatprep.subr.mxu0 0.0
      %511 = vmatpush1.msra.mxu0 0.0
      %512 = vmatprep.subr.mxu0 0.0
      %513 = vmatpush1.msra.mxu0 0.0
      %514 = vmatprep.subr.mxu0 0.0
      %515 = vmatpush1.msra.mxu0 0.0
      %516 = vmatprep.subr.mxu0 0.0
      %517 = vmatpush1.msra.mxu0 0.0
      %518 = vmatprep.subr.mxu0 0.0
      %519 = vmatpush1.msra.mxu0 0.0
      %520 = vmatprep.subr.mxu0 0.0
      %521 = vmatpush1.msra.mxu0 0.0
      %522 = vmatprep.subr.mxu0 0.0
      %523 = vmatpush1.msra.mxu0 0.0
      %524 = vmatprep.subr.mxu0 0.0
      %525 = vmatpush1.msra.mxu0 0.0
      %526 = vmatprep.subr.mxu0 0.0
      %527 = vmatpush1.msra.mxu0 0.0
      %528 = vmatprep.subr.mxu0 0.0
      %529 = vmatpush1.msra.mxu0 0.0
      %530 = vmatprep.subr.mxu0 0.0
      %531 = vmatpush1.msra.mxu0 0.0
      %532 = vmatprep.subr.mxu0 0.0
      %533 = vmatpush1.msra.mxu0 0.0
      %534 = vmatprep.subr.mxu0 0.0
      %535 = vmatpush1.msra.mxu0 0.0
      %536 = vmatprep.mubr.f32.mxu0 0.0
      %537 = vmatmul.mubr.f32.gmra.mrb[0].mxu0 %v467
      %v538 = vpop.f32.mrb[0].mxu0
      %v539 = vadd.f32 0.0, %v538
      %v540 = vpop.f32.mrb[0].mxu0
      %541 = vmatprep.mubr.f32.mxu0 0.0
      %542 = vmatmul.mubr.f32.gmra.mrb[0].mxu0 %v470
      %v543 = vpop.f32.mrb[0].mxu0
      %v544 = vadd.f32 0.0, %v543
      %v545 = vpop.f32.mrb[0].mxu0
      %546 = vdwg.mxu0
      %vm547 = vcmask 15360
      %548 = vst.msk [vmem:[%s374] sm:$0xff] %vm547, %v539
      %549 = vst.msk [vmem:[%s374 + $0x8] sm:$0xff] %vm547, %v544
      %v550 = vld [vmem:[%s343] sm:$0xff]
      %v551 = vld [vmem:[%s343 + $0x8] sm:$0xff]
      %552 = vxpose.xlu0.b32.start [1/16] %v550, 128
      %553 = vxpose.xlu0.b32.cont [2/16] %v551, 128
      %554 = vxpose.xlu0.b32.cont [3/16] 0.0, 128
      %555 = vxpose.xlu0.b32.cont [4/16] 0.0, 128
      %556 = vxpose.xlu0.b32.cont [5/16] 0.0, 128
      %557 = vxpose.xlu0.b32.cont [6/16] 0.0, 128
      %558 = vxpose.xlu0.b32.cont [7/16] 0.0, 128
      %559 = vxpose.xlu0.b32.cont [8/16] 0.0, 128
      %560 = vxpose.xlu0.b32.cont [9/16] 0.0, 128
      %561 = vxpose.xlu0.b32.cont [10/16] 0.0, 128
      %562 = vxpose.xlu0.b32.cont [11/16] 0.0, 128
      %563 = vxpose.xlu0.b32.cont [12/16] 0.0, 128
      %564 = vxpose.xlu0.b32.cont [13/16] 0.0, 128
      %565 = vxpose.xlu0.b32.cont [14/16] 0.0, 128
      %566 = vxpose.xlu0.b32.cont [15/16] 0.0, 128
      %567 = vxpose.xlu0.b32.end [16/16] 0.0, 128
      %v568 = vpop.trf.xlu0
      %v569 = vpop.trf.xlu0
      %v570 = vpop.trf.xlu0
      %v571 = vpop.trf.xlu0
      %v572 = vpop.trf.xlu0
      %v573 = vpop.trf.xlu0
      %v574 = vpop.trf.xlu0
      %v575 = vpop.trf.xlu0
      %v576 = vpop.trf.xlu0
      %v577 = vpop.trf.xlu0
      %v578 = vpop.trf.xlu0
      %v579 = vpop.trf.xlu0
      %v580 = vpop.trf.xlu0
      %v581 = vpop.trf.xlu0
      %v582 = vpop.trf.xlu0
      %v583 = vpop.trf.xlu0
      %v585 = vsel %vm461, %v568, 0
      %587 = vmatprep.subr.mxu0 0.0
      %588 = vmatpush1.xpose.msra.mxu0 %v467
      %589 = vmatprep.subr.mxu0 0.0
      %590 = vmatpush1.xpose.msra.mxu0 %v470
      %591 = vmatprep.subr.mxu0 0.0
      %592 = vmatpush1.xpose.msra.mxu0 0.0
      %593 = vmatprep.subr.mxu0 0.0
      %594 = vmatpush1.xpose.msra.mxu0 0.0
      %595 = vmatprep.subr.mxu0 0.0
      %596 = vmatpush1.xpose.msra.mxu0 0.0
      %597 = vmatprep.subr.mxu0 0.0
      %598 = vmatpush1.xpose.msra.mxu0 0.0
      %599 = vmatprep.subr.mxu0 0.0
      %600 = vmatpush1.xpose.msra.mxu0 0.0
      %601 = vmatprep.subr.mxu0 0.0
      %602 = vmatpush1.xpose.msra.mxu0 0.0
      %603 = vmatprep.subr.mxu0 0.0
      %604 = vmatpush1.xpose.msra.mxu0 0.0
      %605 = vmatprep.subr.mxu0 0.0
      %606 = vmatpush1.xpose.msra.mxu0 0.0
      %607 = vmatprep.subr.mxu0 0.0
      %608 = vmatpush1.xpose.msra.mxu0 0.0
      %609 = vmatprep.subr.mxu0 0.0
      %610 = vmatpush1.xpose.msra.mxu0 0.0
      %611 = vmatprep.subr.mxu0 0.0
      %612 = vmatpush1.xpose.msra.mxu0 0.0
      %613 = vmatprep.subr.mxu0 0.0
      %614 = vmatpush1.xpose.msra.mxu0 0.0
      %615 = vmatprep.subr.mxu0 0.0
      %616 = vmatpush1.xpose.msra.mxu0 0.0
      %617 = vmatprep.subr.mxu0 0.0
      %618 = vmatpush1.xpose.msra.mxu0 0.0
      %619 = vmatprep.subr.mxu0 0.0
      %620 = vmatpush1.xpose.msra.mxu0 0.0
      %621 = vmatprep.subr.mxu0 0.0
      %622 = vmatpush1.xpose.msra.mxu0 0.0
      %623 = vmatprep.subr.mxu0 0.0
      %624 = vmatpush1.xpose.msra.mxu0 0.0
      %625 = vmatprep.subr.mxu0 0.0
      %626 = vmatpush1.xpose.msra.mxu0 0.0
      %627 = vmatprep.subr.mxu0 0.0
      %628 = vmatpush1.xpose.msra.mxu0 0.0
      %629 = vmatprep.subr.mxu0 0.0
      %630 = vmatpush1.xpose.msra.mxu0 0.0
      %631 = vmatprep.subr.mxu0 0.0
      %632 = vmatpush1.xpose.msra.mxu0 0.0
      %633 = vmatprep.subr.mxu0 0.0
      %634 = vmatpush1.xpose.msra.mxu0 0.0
      %635 = vmatprep.subr.mxu0 0.0
      %636 = vmatpush1.xpose.msra.mxu0 0.0
      %637 = vmatprep.subr.mxu0 0.0
      %638 = vmatpush1.xpose.msra.mxu0 0.0
      %639 = vmatprep.subr.mxu0 0.0
      %640 = vmatpush1.xpose.msra.mxu0 0.0
      %641 = vmatprep.subr.mxu0 0.0
      %642 = vmatpush1.xpose.msra.mxu0 0.0
      %643 = vmatprep.subr.mxu0 0.0
      %644 = vmatpush1.xpose.msra.mxu0 0.0
      %645 = vmatprep.subr.mxu0 0.0
      %646 = vmatpush1.xpose.msra.mxu0 0.0
      %647 = vmatprep.subr.mxu0 0.0
      %648 = vmatpush1.xpose.msra.mxu0 0.0
      %649 = vmatprep.subr.mxu0 0.0
      %650 = vmatpush1.xpose.msra.mxu0 0.0
      %651 = vmatprep.mubr.f32.mxu0 0.0
      %652 = vmatmul.mubr.f32.gmra.mrb[0].mxu0 %v585
      %v653 = vpop.f32.mrb[0].mxu0
      %v654 = vadd.f32 0.0, %v653
      %v655 = vpop.f32.mrb[0].mxu0
      %656 = vdwg.mxu0
      %vm657 = vcmask 123904
      %658 = vst.msk [vmem:[%s365] sm:$0x3] %vm657, %v654
      %s659 = smul.u32 2, %s23
      %p660 = scmp.lt.s32.totalorder %s22, 1
      %s661 = scalar_select %p660, %s22, 1
      %p662 = scmp.lt.s32.totalorder %s659, 1
      %s663 = scalar_select %p662, %s659, 1
      %s664 = smul.addr %s661, 2
      %s665 = sadd.s32 %s663, %s664
      %s666 = smul.addr %s665, 8
      %s667 = scalar_lea.vmem %s4, %s666
      %p668 = scmp.lt.s32.totalorder %s22, 1
      %s669 = scalar_select %p668, %s22, 1
      %p670 = scmp.lt.s32.totalorder %s23, 0
      %s671 = scalar_select %p670, %s23, 0
      %s672 = sadd.s32 %s671, %s669
      %s673 = smul.addr %s672, 2
      %s674 = scalar_lea.vmem %s5, %s673
      %s675 = smul.u32 2, %s23
      %p676 = scmp.lt.s32.totalorder %s22, 1
      %s677 = scalar_select %p676, %s22, 1
      %p678 = scmp.lt.s32.totalorder %s675, 1
      %s679 = scalar_select %p678, %s675, 1
      %s680 = smul.addr %s677, 2
      %s681 = sadd.s32 %s679, %s680
      %s682 = smul.addr %s681, 8
      %s683 = scalar_lea.vmem %s6, %s682
      // Predicated region
      $region37: #{han_forward.9} parent=35 // pred_check
        %p684 = pneg %p154
      $region38: #{han_forward.9} parent=35 // pred_check_branch
        %686 = sbr.rel (%p684) target = $region40
      $region39: #{han_forward.9} parent=35 // pred_region
        %s687 = smul.u32 2, %s23
      $region40: #{han_forward.9} parent=35 // pred_fallthru
        _
      // Predicated region
      $region41: #{han_forward.9} parent=35 // pred_check
        %p688 = pneg %p182
      $region42: #{han_forward.9} parent=35 // pred_check_branch
        %690 = sbr.rel (%p688) target = $region44
      $region43: #{han_forward.9} parent=35 // pred_region
        _
      $region44: #{han_forward.9} parent=35 // pred_fallthru
        _
      // Predicated region
      $region45: #{han_forward.9} parent=35 // pred_check
        %p691 = pneg %p210
      $region46: #{han_forward.9} parent=35 // pred_check_branch
        %693 = sbr.rel (%p691) target = $region48
      $region47: #{han_forward.9} parent=35 // pred_region
        %s694 = smul.u32 2, %s23
      $region48: #{han_forward.9} parent=35 // pred_fallthru
        _
    $region36: #{han_forward.9} parent=5 // pred_fallthru
      _
    %p695 = scmp.le.s32.totalorder 2, %s13
    // Predicated region
    $region49: #{han_forward.9} parent=5 // pred_check
      %p696 = pneg %p695
    $region50: #{han_forward.9} parent=5 // pred_check_branch
      %698 = sbr.rel (%p696) target = $region52
    $region51: #{han_forward.9} parent=5 // pred_region
      %s699 = ssub.s32 %s13, 2
      // Predicated region
      $region53: #{han_forward.9} parent=51 // pred_check
        %p700 = pneg %p160
      $region54: #{han_forward.9} parent=51 // pred_check_branch
        %702 = sbr.rel (%p700) target = $region56
      $region55: #{han_forward.9} parent=51 // pred_region
        %s703 = smul.u32 2, %s25
        %p704 = scmp.lt.s32.totalorder %s24, 1
        %s705 = scalar_select %p704, %s24, 1
        %p706 = scmp.lt.s32.totalorder %s703, 1
        %s707 = scalar_select %p706, %s703, 1
        %s708 = smul.addr %s705, 2
        %s709 = sadd.s32 %s707, %s708
        %s710 = smul.addr %s709, 8
        %s711 = scalar_lea.vmem %s4, %s710
      $region56: #{han_forward.9} parent=51 // pred_fallthru
        _
      // Predicated region
      $region57: #{han_forward.9} parent=51 // pred_check
        %p712 = pneg %p188
      $region58: #{han_forward.9} parent=51 // pred_check_branch
        %714 = sbr.rel (%p712) target = $region60
      $region59: #{han_forward.9} parent=51 // pred_region
        %p715 = scmp.lt.s32.totalorder %s24, 1
        %s716 = scalar_select %p715, %s24, 1
        %p717 = scmp.lt.s32.totalorder %s25, 0
        %s718 = scalar_select %p717, %s25, 0
        %s719 = sadd.s32 %s718, %s716
        %s720 = smul.addr %s719, 2
        %s721 = scalar_lea.vmem %s5, %s720
      $region60: #{han_forward.9} parent=51 // pred_fallthru
        _
      // Predicated region
      $region61: #{han_forward.9} parent=51 // pred_check
        %p722 = pneg %p216
      $region62: #{han_forward.9} parent=51 // pred_check_branch
        %724 = sbr.rel (%p722) target = $region64
      $region63: #{han_forward.9} parent=51 // pred_region
        %s725 = smul.u32 2, %s25
        %p726 = scmp.lt.s32.totalorder %s24, 1
        %s727 = scalar_select %p726, %s24, 1
        %p728 = scmp.lt.s32.totalorder %s725, 1
        %s729 = scalar_select %p728, %s725, 1
        %s730 = smul.addr %s727, 2
        %s731 = sadd.s32 %s729, %s730
        %s732 = smul.addr %s731, 8
        %s733 = scalar_lea.vmem %s6, %s732
      $region64: #{han_forward.9} parent=51 // pred_fallthru
        _
    $region52: #{han_forward.9} parent=5 // pred_fallthru
      _
  $region6: #{han_forward.9} parent=0 // loop_footer
    %s17 = sadd.s32 1, %s13
  $region7: #{han_forward.9} parent=0 // loop_footer_branch
    %12 = sbr.rel target = $region3
  $region8: #{han_forward.9} parent=0 // loop_exit
    _

// kernel: han_forward.12
$region0: #{han_forward.12}
  #allocation0 [shape = 'u32[]', space=smem, size = 0x4, offset = 0x4, fixed_abs, tag = 'smem constant byte address 0x4 - core index']
  #allocation1 [shape = 'u32[144,128]{1,0:T(1,128)}', space=vmem, size = 0x12000, scoped, tag = 'internal scratch']
  %s0 = inlined_call_operand.vmem [shape: f32[2,16,16], index: 0, kind: input, shape index: {}]
  %s1 = inlined_call_operand.vmem [shape: f32[2,1], index: 1, kind: input, shape index: {}]
  %s2 = inlined_call_operand.vmem [shape: f32[16,16], index: 2, kind: output, shape index: {}]
  %s3 = sld [smem:[#allocation0]]
  $region18: #{han_forward.12} parent=0
    _
  %s5 = ssub.s32 1, %s3
  %s6 = scalar_select 0, %s5, %s3
  // Predicated region
  $region2: #{han_forward.12} parent=0 // pred_check
    _
  $region3: #{han_forward.12} parent=0 // pred_check_branch
    %8 = sbr.rel (0) target = $region5
  $region4: #{han_forward.12} parent=0 // pred_region
    _
  $region5: #{han_forward.12} parent=0 // pred_fallthru
    _
  // Predicated region
  $region6: #{han_forward.12} parent=0 // pred_check
    _
  $region7: #{han_forward.12} parent=0 // pred_check_branch
    %10 = sbr.rel (0) target = $region9
  $region8: #{han_forward.12} parent=0 // pred_region
    _
  $region9: #{han_forward.12} parent=0 // pred_fallthru
    _
  %v11 = vld [vmem:[%s0] sm:$0xff]
  %v12 = vld [vmem:[%s0 + $0x8] sm:$0xff]
  %v13 = vld [vmem:[%s0 + $0x10] sm:$0xff]
  %v14 = vld [vmem:[%s0 + $0x18] sm:$0xff]
  %v15 = vld [vmem:[%s1] sm:$0x3]
  %s17 = vtos %v15
  %v18 = vstv %s17
  %v20 = vmul.f32 %v18, %v11
  %v21 = vmul.f32 %v18, %v12
  %v22 = vrot.slane %v15, 1
  %s23 = vtos %v22
  %v24 = vstv %s23
  %v26 = vmul.f32 %v24, %v13
  %v27 = vmul.f32 %v24, %v14
  %v28 = vadd.f32 %v20, %v26
  %v29 = vadd.f32 %v21, %v27
  %vm30 = vcmask 130048
  %31 = vst.msk [vmem:[%s2] sm:$0xff] %vm30, %v28
  %32 = vst.msk [vmem:[%s2 + $0x8] sm:$0xff] %vm30, %v29
  // Predicated region
  $region10: #{han_forward.12} parent=0 // pred_check
    _
  $region11: #{han_forward.12} parent=0 // pred_check_branch
    %34 = sbr.rel (0) target = $region13
  $region12: #{han_forward.12} parent=0 // pred_region
    _
  $region13: #{han_forward.12} parent=0 // pred_fallthru
    _
  // Predicated region
  $region14: #{han_forward.12} parent=0 // pred_check
    _
  $region15: #{han_forward.12} parent=0 // pred_check_branch
    %36 = sbr.rel (0) target = $region17
  $region16: #{han_forward.12} parent=0 // pred_region
    _
  $region17: #{han_forward.12} parent=0 // pred_fallthru
    _

// kernel: han_forward.11
$region0: #{han_forward.11}
  #allocation0 [shape = 'u32[]', space=smem, size = 0x4, offset = 0x4, fixed_abs, tag = 'smem constant byte address 0x4 - core index']
  #allocation1 [shape = 'u32[144,128]{1,0:T(1,128)}', space=vmem, size = 0x12000, scoped, tag = 'internal scratch']
  #allocation2 [shape = 'f32[2,1]{1,0:T(2,128)}', space=vmem, size = 0x400, scoped, tag = 'scratch operand']
  %s0 = inlined_call_operand.vmem [shape: f32[2,16,1], index: 0, kind: input, shape index: {}]
  %s1 = inlined_call_operand.vmem [shape: f32[2,1], index: 1, kind: output, shape index: {}]
  %s2 = sld [smem:[#allocation0]]
  $region22: #{han_forward.11} parent=0
    _
  %s4 = ssub.s32 1, %s2
  %s5 = scalar_select 0, %s4, %s2
  // Predicated region
  $region2: #{han_forward.11} parent=0 // pred_check
    _
  $region3: #{han_forward.11} parent=0 // pred_check_branch
    %7 = sbr.rel (0) target = $region5
  $region4: #{han_forward.11} parent=0 // pred_region
    _
  $region5: #{han_forward.11} parent=0 // pred_fallthru
    _
  %p8 = scmp.eq.s32.totalorder 0, 0
  // Predicated region
  $region6: #{han_forward.11} parent=0 // pred_check
    %p9 = pneg %p8
  $region7: #{han_forward.11} parent=0 // pred_check_branch
    %11 = sbr.rel (%p9) target = $region9
  $region8: #{han_forward.11} parent=0 // pred_region
    %vm12 = vcmask 1024
    %13 = vst.msk [vmem:[#allocation2] sm:$0x3] %vm12, 0.0
  $region9: #{han_forward.11} parent=0 // pred_fallthru
    _
  %v14 = vld [vmem:[#allocation2] sm:$0x3]
  %v15 = vld [vmem:[%s0] sm:$0xff]
  %v16 = vld [vmem:[%s0 + $0x8] sm:$0xff]
  %v17 = vld [vmem:[%s0 + $0x10] sm:$0xff]
  %v18 = vld [vmem:[%s0 + $0x18] sm:$0xff]
  %vm19 = vcmask 7168
  %v20 = vsel %vm19, %v15, 0.0
  %v21 = vsel %vm19, %v16, 0.0
  %v22 = vadd.f32 %v20, %v21
  %v23 = vrot.slane %v22, 4
  %v24 = vadd.f32 %v22, %v23
  %v25 = vrot.slane %v24, 2
  %v26 = vadd.f32 %v24, %v25
  %v27 = vrot.slane %v26, 1
  %v28 = vadd.f32 %v26, %v27
  %v29 = vsel %vm19, %v17, 0.0
  %v30 = vsel %vm19, %v18, 0.0
  %v31 = vadd.f32 %v29, %v30
  %v32 = vrot.slane %v31, 4
  %v33 = vadd.f32 %v31, %v32
  %v34 = vrot.slane %v33, 2
  %v35 = vadd.f32 %v33, %v34
  %v36 = vrot.slane %v35, 1
  %v37 = vadd.f32 %v35, %v36
  %vm40 = vcmask 1041409
  %v41 = vsel %vm40, %v37, %v28
  %v43 = vadd.f32 %v14, %v41
  %vm44 = vcmask 1024
  %45 = vst.msk [vmem:[#allocation2] sm:$0x3] %vm44, %v43
  // Predicated region
  $region10: #{han_forward.11} parent=0 // pred_check
    %p46 = pneg %p8
  $region11: #{han_forward.11} parent=0 // pred_check_branch
    %48 = sbr.rel (%p46) target = $region13
  $region12: #{han_forward.11} parent=0 // pred_region
    %v49 = vld [vmem:[#allocation2] sm:$0x3]
    %v50 = vmul.f32 %v49, 0.0625
    %v51 = vsel %vm44, %v50, -inf
    %v52 = vrot.slane %v51, 4
    %v53 = vmax.f32 %v51, %v52
    %v54 = vrot.slane %v53, 2
    %v55 = vmax.f32 %v53, %v54
    %v56 = vrot.slane %v55, 1
    %v57 = vmax.f32 %v55, %v56
    %v58 = vsub.f32 %v50, %v57
    %v59 = vmul.f32 %v58, 1.442695
    %v60 = vpow.pop %v59
    %v61 = vsel %vm44, %v60, 0.0
    %v62 = vrot.slane %v61, 4
    %v63 = vadd.f32 %v61, %v62
    %v64 = vrot.slane %v63, 2
    %v65 = vadd.f32 %v63, %v64
    %v66 = vrot.slane %v65, 1
    %v67 = vadd.f32 %v65, %v66
    %v68 = vrcp.pop %v67
    %v69 = vmul.f32 %v60, %v68
    %70 = vst.msk [vmem:[%s1] sm:$0x3] %vm44, %v69
  $region13: #{han_forward.11} parent=0 // pred_fallthru
    _
  // Predicated region
  $region14: #{han_forward.11} parent=0 // pred_check
    _
  $region15: #{han_forward.11} parent=0 // pred_check_branch
    %72 = sbr.rel (0) target = $region17
  $region16: #{han_forward.11} parent=0 // pred_region
    _
  $region17: #{han_forward.11} parent=0 // pred_fallthru
    _
  // Predicated region
  $region18: #{han_forward.11} parent=0 // pred_check
    _
  $region19: #{han_forward.11} parent=0 // pred_check_branch
    %74 = sbr.rel (0) target = $region21
  $region20: #{han_forward.11} parent=0 // pred_region
    _
  $region21: #{han_forward.11} parent=0 // pred_fallthru
    _

// kernel: han_forward.17
$region0: #{han_forward.17}
  #allocation0 [shape = 'u32[]', space=smem, size = 0x4, offset = 0x4, fixed_abs, tag = 'smem constant byte address 0x4 - core index']
  #allocation1 [shape = 'u32[144,128]{1,0:T(1,128)}', space=vmem, size = 0x12000, scoped, tag = 'internal scratch']
  %s0 = inlined_call_operand.vmem [shape: f32[16,16], index: 0, kind: input, shape index: {}]
  %s1 = inlined_call_operand.vmem [shape: f32[16,4], index: 1, kind: input, shape index: {}]
  %s2 = inlined_call_operand.vmem [shape: f32[1,4], index: 2, kind: input, shape index: {}]
  %s3 = inlined_call_operand.vmem [shape: f32[16,4], index: 3, kind: output, shape index: {}]
  %s4 = sld [smem:[#allocation0]]
  $region22: #{han_forward.17} parent=0
    _
  %s6 = ssub.s32 1, %s4
  %s7 = scalar_select 0, %s6, %s4
  // Predicated region
  $region2: #{han_forward.17} parent=0 // pred_check
    _
  $region3: #{han_forward.17} parent=0 // pred_check_branch
    %9 = sbr.rel (0) target = $region5
  $region4: #{han_forward.17} parent=0 // pred_region
    _
  $region5: #{han_forward.17} parent=0 // pred_fallthru
    _
  // Predicated region
  $region6: #{han_forward.17} parent=0 // pred_check
    _
  $region7: #{han_forward.17} parent=0 // pred_check_branch
    %11 = sbr.rel (0) target = $region9
  $region8: #{han_forward.17} parent=0 // pred_region
    _
  $region9: #{han_forward.17} parent=0 // pred_fallthru
    _
  // Predicated region
  $region10: #{han_forward.17} parent=0 // pred_check
    _
  $region11: #{han_forward.17} parent=0 // pred_check_branch
    %13 = sbr.rel (0) target = $region13
  $region12: #{han_forward.17} parent=0 // pred_region
    _
  $region13: #{han_forward.17} parent=0 // pred_fallthru
    _
  %v14 = vld [vmem:[%s0] sm:$0xff]
  %v15 = vld [vmem:[%s0 + $0x8] sm:$0xff]
  %v16 = vld [vmem:[%s1] sm:$0xff]
  %v17 = vld [vmem:[%s1 + $0x8] sm:$0xff]
  %v18 = vld [vmem:[%s2] sm:$0x1]
  %v20 = vlaneseq
  %v21 = vshrl.u32 %v20, 7
  %v22 = vsub.s32 0, %v21
  %v23 = vrot.slane %v18, %v22
  %vm25 = vcmask 130048
  %v27 = vsel %vm25, %v14, 0
  %v30 = vsel %vm25, %v15, 0
  %32 = vmatprep.subr.mxu0 0.0
  %33 = vmatpush1.msra.mxu0 %v16
  %34 = vmatprep.subr.mxu0 0.0
  %35 = vmatpush1.msra.mxu0 %v17
  %36 = vmatprep.subr.mxu0 0.0
  %37 = vmatpush1.msra.mxu0 0.0
  %38 = vmatprep.subr.mxu0 0.0
  %39 = vmatpush1.msra.mxu0 0.0
  %40 = vmatprep.subr.mxu0 0.0
  %41 = vmatpush1.msra.mxu0 0.0
  %42 = vmatprep.subr.mxu0 0.0
  %43 = vmatpush1.msra.mxu0 0.0
  %44 = vmatprep.subr.mxu0 0.0
  %45 = vmatpush1.msra.mxu0 0.0
  %46 = vmatprep.subr.mxu0 0.0
  %47 = vmatpush1.msra.mxu0 0.0
  %48 = vmatprep.subr.mxu0 0.0
  %49 = vmatpush1.msra.mxu0 0.0
  %50 = vmatprep.subr.mxu0 0.0
  %51 = vmatpush1.msra.mxu0 0.0
  %52 = vmatprep.subr.mxu0 0.0
  %53 = vmatpush1.msra.mxu0 0.0
  %54 = vmatprep.subr.mxu0 0.0
  %55 = vmatpush1.msra.mxu0 0.0
  %56 = vmatprep.subr.mxu0 0.0
  %57 = vmatpush1.msra.mxu0 0.0
  %58 = vmatprep.subr.mxu0 0.0
  %59 = vmatpush1.msra.mxu0 0.0
  %60 = vmatprep.subr.mxu0 0.0
  %61 = vmatpush1.msra.mxu0 0.0
  %62 = vmatprep.subr.mxu0 0.0
  %63 = vmatpush1.msra.mxu0 0.0
  %64 = vmatprep.subr.mxu0 0.0
  %65 = vmatpush1.msra.mxu0 0.0
  %66 = vmatprep.subr.mxu0 0.0
  %67 = vmatpush1.msra.mxu0 0.0
  %68 = vmatprep.subr.mxu0 0.0
  %69 = vmatpush1.msra.mxu0 0.0
  %70 = vmatprep.subr.mxu0 0.0
  %71 = vmatpush1.msra.mxu0 0.0
  %72 = vmatprep.subr.mxu0 0.0
  %73 = vmatpush1.msra.mxu0 0.0
  %74 = vmatprep.subr.mxu0 0.0
  %75 = vmatpush1.msra.mxu0 0.0
  %76 = vmatprep.subr.mxu0 0.0
  %77 = vmatpush1.msra.mxu0 0.0
  %78 = vmatprep.subr.mxu0 0.0
  %79 = vmatpush1.msra.mxu0 0.0
  %80 = vmatprep.subr.mxu0 0.0
  %81 = vmatpush1.msra.mxu0 0.0
  %82 = vmatprep.subr.mxu0 0.0
  %83 = vmatpush1.msra.mxu0 0.0
  %84 = vmatprep.subr.mxu0 0.0
  %85 = vmatpush1.msra.mxu0 0.0
  %86 = vmatprep.subr.mxu0 0.0
  %87 = vmatpush1.msra.mxu0 0.0
  %88 = vmatprep.subr.mxu0 0.0
  %89 = vmatpush1.msra.mxu0 0.0
  %90 = vmatprep.subr.mxu0 0.0
  %91 = vmatpush1.msra.mxu0 0.0
  %92 = vmatprep.subr.mxu0 0.0
  %93 = vmatpush1.msra.mxu0 0.0
  %94 = vmatprep.subr.mxu0 0.0
  %95 = vmatpush1.msra.mxu0 0.0
  %96 = vmatprep.mubr.f32.mxu0 0.0
  %97 = vmatmul.mubr.f32.gmra.mrb[0].mxu0 %v27
  %v98 = vpop.f32.mrb[0].mxu0
  %v99 = vadd.f32 %v23, %v98
  %v100 = vpop.f32.mrb[0].mxu0
  %101 = vmatprep.mubr.f32.mxu0 0.0
  %102 = vmatmul.mubr.f32.gmra.mrb[0].mxu0 %v30
  %v103 = vpop.f32.mrb[0].mxu0
  %v104 = vadd.f32 %v23, %v103
  %v105 = vpop.f32.mrb[0].mxu0
  %106 = vdwg.mxu0
  %vm107 = vcmask 31744
  %108 = vst.msk [vmem:[%s3] sm:$0xff] %vm107, %v99
  %109 = vst.msk [vmem:[%s3 + $0x8] sm:$0xff] %vm107, %v104
  // Predicated region
  $region14: #{han_forward.17} parent=0 // pred_check
    _
  $region15: #{han_forward.17} parent=0 // pred_check_branch
    %111 = sbr.rel (0) target = $region17
  $region16: #{han_forward.17} parent=0 // pred_region
    _
  $region17: #{han_forward.17} parent=0 // pred_fallthru
    _
  // Predicated region
  $region18: #{han_forward.17} parent=0 // pred_check
    _
  $region19: #{han_forward.17} parent=0 // pred_check_branch
    %113 = sbr.rel (0) target = $region21
  $region20: #{han_forward.17} parent=0 // pred_region
    _
  $region21: #{han_forward.17} parent=0 // pred_fallthru
    _

// kernel: han_forward.13
$region0: #{han_forward.13}
  #allocation0 [shape = 'u32[]', space=smem, size = 0x4, offset = 0x4, fixed_abs, tag = 'smem constant byte address 0x4 - core index']
  #allocation1 [shape = 'u32[144,128]{1,0:T(1,128)}', space=vmem, size = 0x12000, scoped, tag = 'internal scratch']
  %s0 = inlined_call_operand.vmem [shape: f32[16,16], index: 0, kind: input, shape index: {}]
  %s1 = inlined_call_operand.vmem [shape: f32[2,16,16], index: 1, kind: input, shape index: {}]
  %s2 = inlined_call_operand.vmem [shape: f32[2,16,2], index: 2, kind: input, shape index: {}]
  %s3 = inlined_call_operand.vmem [shape: f32[2,16,2], index: 3, kind: input, shape index: {}]
  %s4 = inlined_call_operand.vmem [shape: f32[2,16,16], index: 4, kind: output, shape index: {0}]
  %s5 = inlined_call_operand.vmem [shape: f32[2,2,16], index: 5, kind: output, shape index: {1}]
  %s6 = inlined_call_operand.vmem [shape: f32[2,16,2], index: 6, kind: output, shape index: {2}]
  %7 = xla_tuple %s4, %s5, %s6
  %s8 = sld [smem:[#allocation0]]
  $region65: #{han_forward.13} parent=0
    _
  %s10 = ssub.s32 1, %s8
  %s11 = scalar_select 0, %s10, %s8
  loop: start=0, step=1, limit=4
  $region2: #{han_forward.13} parent=0 // loop_pre_header
    _
  $region3: #{han_forward.13} parent=0 // loop_header
    %s13 = sphi 0, %s17
    %p14 = scmp.ge.s32.totalorder %s13, 4
    %s20 = sphi 0, %s32
    %s21 = sphi 0, %s28
    %s22 = sphi 0, %s20
    %s23 = sphi 0, %s21
    %s24 = sphi 0, %s22
    %s25 = sphi 0, %s23
    %s35 = sphi 0, %s37
    %s38 = sphi 0, %s35
    %s39 = sphi 0, %s38
    %s55 = sphi 0, %s39
    %s61 = sphi 0, %s63
    %s64 = sphi 0, %s61
    %s65 = sphi 0, %s64
    %s81 = sphi 0, %s65
    %s87 = sphi 0, %s89
    %s90 = sphi 0, %s87
    %s91 = sphi 0, %s90
    %s107 = sphi 0, %s91
    %s113 = sphi 0, %s115
    %s116 = sphi 0, %s113
    %s117 = sphi 0, %s116
    %s133 = sphi 0, %s117
    %s141 = sphi 0, %s143
    %s144 = sphi 0, %s141
    %s145 = sphi 0, %s144
    %s161 = sphi 0, %s145
    %s169 = sphi 0, %s171
    %s172 = sphi 0, %s169
    %s173 = sphi 0, %s172
    %s189 = sphi 0, %s173
    %s197 = sphi 0, %s199
    %s200 = sphi 0, %s197
    %s201 = sphi 0, %s200
    %s217 = sphi 0, %s201
  $region4: #{han_forward.13} parent=0 // loop_header_branch
    %16 = sbr.rel (%p14) target = $region8
  $region5: #{han_forward.13} parent=0 // loop_body
    %s18 = ssub.s32 %s13, 1
    %s19 = ssub.s32 %s13, 2
    %s26 = sadd.s32 1, %s21
    %p27 = scmp.ge.s32.totalorder %s26, 1
    %s28 = scalar_select %p27, 0, %s26
    %s29 = sadd.s32 1, %s20
    %s30 = scalar_select %p27, %s29, %s20
    %p31 = scmp.ge.s32.totalorder %s30, 2
    %s32 = scalar_select %p31, 0, %s30
    %s33 = ssub.s32 %s21, %s28
    %p34 = scmp.eq.s32.totalorder %s33, 0
    %s36 = sadd.s32 %s35, 1
    %s37 = scalar_select %p34, %s35, %s36
    %p40 = pneg %p34
    %p41 = scmp.eq.s32.totalorder %s13, 1
    %p42 = por %p40, %p41
    %p43 = scmp.ne.s32.totalorder %s35, %s38
    %p44 = scmp.eq.s32.totalorder %s13, 0
    %p45 = por %p43, %p44
    %p46 = scmp.ne.s32.totalorder %s35, %s38
    %p47 = scmp.eq.s32.totalorder %s18, 1
    %p48 = por %p46, %p47
    %p49 = scmp.ne.s32.totalorder %s38, %s39
    %p50 = scmp.eq.s32.totalorder %s18, 0
    %p51 = por %p49, %p50
    %p52 = scmp.ne.s32.totalorder %s38, %s39
    %p53 = scmp.eq.s32.totalorder %s19, 1
    %p54 = por %p52, %p53
    %p56 = scmp.ne.s32.totalorder %s39, %s55
    %p57 = scmp.eq.s32.totalorder %s19, 0
    %p58 = por %p56, %p57
    %s59 = ssub.s32 %s20, %s32
    %p60 = scmp.eq.s32.totalorder %s59, 0
    %s62 = sadd.s32 %s61, 1
    %s63 = scalar_select %p60, %s61, %s62
    %p66 = pneg %p60
    %p67 = scmp.eq.s32.totalorder %s13, 1
    %p68 = por %p66, %p67
    %p69 = scmp.ne.s32.totalorder %s61, %s64
    %p70 = scmp.eq.s32.totalorder %s13, 0
    %p71 = por %p69, %p70
    %p72 = scmp.ne.s32.totalorder %s61, %s64
    %p73 = scmp.eq.s32.totalorder %s18, 1
    %p74 = por %p72, %p73
    %p75 = scmp.ne.s32.totalorder %s64, %s65
    %p76 = scmp.eq.s32.totalorder %s18, 0
    %p77 = por %p75, %p76
    %p78 = scmp.ne.s32.totalorder %s64, %s65
    %p79 = scmp.eq.s32.totalorder %s19, 1
    %p80 = por %p78, %p79
    %p82 = scmp.ne.s32.totalorder %s65, %s81
    %p83 = scmp.eq.s32.totalorder %s19, 0
    %p84 = por %p82, %p83
    %s85 = ssub.s32 %s20, %s32
    %p86 = scmp.eq.s32.totalorder %s85, 0
    %s88 = sadd.s32 %s87, 1
    %s89 = scalar_select %p86, %s87, %s88
    %p92 = pneg %p86
    %p93 = scmp.eq.s32.totalorder %s13, 1
    %p94 = por %p92, %p93
    %p95 = scmp.ne.s32.totalorder %s87, %s90
    %p96 = scmp.eq.s32.totalorder %s13, 0
    %p97 = por %p95, %p96
    %p98 = scmp.ne.s32.totalorder %s87, %s90
    %p99 = scmp.eq.s32.totalorder %s18, 1
    %p100 = por %p98, %p99
    %p101 = scmp.ne.s32.totalorder %s90, %s91
    %p102 = scmp.eq.s32.totalorder %s18, 0
    %p103 = por %p101, %p102
    %p104 = scmp.ne.s32.totalorder %s90, %s91
    %p105 = scmp.eq.s32.totalorder %s19, 1
    %p106 = por %p104, %p105
    %p108 = scmp.ne.s32.totalorder %s91, %s107
    %p109 = scmp.eq.s32.totalorder %s19, 0
    %p110 = por %p108, %p109
    %s111 = ssub.s32 %s20, %s32
    %p112 = scmp.eq.s32.totalorder %s111, 0
    %s114 = sadd.s32 %s113, 1
    %s115 = scalar_select %p112, %s113, %s114
    %p118 = pneg %p112
    %p119 = scmp.eq.s32.totalorder %s13, 1
    %p120 = por %p118, %p119
    %p121 = scmp.ne.s32.totalorder %s113, %s116
    %p122 = scmp.eq.s32.totalorder %s13, 0
    %p123 = por %p121, %p122
    %p124 = scmp.ne.s32.totalorder %s113, %s116
    %p125 = scmp.eq.s32.totalorder %s18, 1
    %p126 = por %p124, %p125
    %p127 = scmp.ne.s32.totalorder %s116, %s117
    %p128 = scmp.eq.s32.totalorder %s18, 0
    %p129 = por %p127, %p128
    %p130 = scmp.ne.s32.totalorder %s116, %s117
    %p131 = scmp.eq.s32.totalorder %s19, 1
    %p132 = por %p130, %p131
    %p134 = scmp.ne.s32.totalorder %s117, %s133
    %p135 = scmp.eq.s32.totalorder %s19, 0
    %p136 = por %p134, %p135
    %s137 = ssub.s32 %s20, %s32
    %s138 = ssub.s32 %s21, %s28
    %s139 = sor.u32 %s137, %s138
    %p140 = scmp.eq.s32.totalorder %s139, 0
    %s142 = sadd.s32 %s141, 1
    %s143 = scalar_select %p140, %s141, %s142
    %p146 = pneg %p140
    %p147 = scmp.eq.s32.totalorder %s13, 1
    %p148 = por %p146, %p147
    %p149 = scmp.ne.s32.totalorder %s141, %s144
    %p150 = scmp.eq.s32.totalorder %s13, 0
    %p151 = por %p149, %p150
    %p152 = scmp.ne.s32.totalorder %s141, %s144
    %p153 = scmp.eq.s32.totalorder %s18, 1
    %p154 = por %p152, %p153
    %p155 = scmp.ne.s32.totalorder %s144, %s145
    %p156 = scmp.eq.s32.totalorder %s18, 0
    %p157 = por %p155, %p156
    %p158 = scmp.ne.s32.totalorder %s144, %s145
    %p159 = scmp.eq.s32.totalorder %s19, 1
    %p160 = por %p158, %p159
    %p162 = scmp.ne.s32.totalorder %s145, %s161
    %p163 = scmp.eq.s32.totalorder %s19, 0
    %p164 = por %p162, %p163
    %s165 = ssub.s32 %s20, %s32
    %s166 = ssub.s32 %s21, %s28
    %s167 = sor.u32 %s165, %s166
    %p168 = scmp.eq.s32.totalorder %s167, 0
    %s170 = sadd.s32 %s169, 1
    %s171 = scalar_select %p168, %s169, %s170
    %p174 = pneg %p168
    %p175 = scmp.eq.s32.totalorder %s13, 1
    %p176 = por %p174, %p175
    %p177 = scmp.ne.s32.totalorder %s169, %s172
    %p178 = scmp.eq.s32.totalorder %s13, 0
    %p179 = por %p177, %p178
    %p180 = scmp.ne.s32.totalorder %s169, %s172
    %p181 = scmp.eq.s32.totalorder %s18, 1
    %p182 = por %p180, %p181
    %p183 = scmp.ne.s32.totalorder %s172, %s173
    %p184 = scmp.eq.s32.totalorder %s18, 0
    %p185 = por %p183, %p184
    %p186 = scmp.ne.s32.totalorder %s172, %s173
    %p187 = scmp.eq.s32.totalorder %s19, 1
    %p188 = por %p186, %p187
    %p190 = scmp.ne.s32.totalorder %s173, %s189
    %p191 = scmp.eq.s32.totalorder %s19, 0
    %p192 = por %p190, %p191
    %s193 = ssub.s32 %s20, %s32
    %s194 = ssub.s32 %s21, %s28
    %s195 = sor.u32 %s193, %s194
    %p196 = scmp.eq.s32.totalorder %s195, 0
    %s198 = sadd.s32 %s197, 1
    %s199 = scalar_select %p196, %s197, %s198
    %p202 = pneg %p196
    %p203 = scmp.eq.s32.totalorder %s13, 1
    %p204 = por %p202, %p203
    %p205 = scmp.ne.s32.totalorder %s197, %s200
    %p206 = scmp.eq.s32.totalorder %s13, 0
    %p207 = por %p205, %p206
    %p208 = scmp.ne.s32.totalorder %s197, %s200
    %p209 = scmp.eq.s32.totalorder %s18, 1
    %p210 = por %p208, %p209
    %p211 = scmp.ne.s32.totalorder %s200, %s201
    %p212 = scmp.eq.s32.totalorder %s18, 0
    %p213 = por %p211, %p212
    %p214 = scmp.ne.s32.totalorder %s200, %s201
    %p215 = scmp.eq.s32.totalorder %s19, 1
    %p216 = por %p214, %p215
    %p218 = scmp.ne.s32.totalorder %s201, %s217
    %p219 = scmp.eq.s32.totalorder %s19, 0
    %p220 = por %p218, %p219
    %p221 = scmp.le.s32.totalorder 1, %s13
    %p222 = scmp.lt.s32.totalorder %s13, 3
    %p223 = pnand %p221, %p222
    %p224 = pneg %p223
    // Predicated region
    $region9: #{han_forward.13} parent=5 // pred_check
      _
    $region10: #{han_forward.13} parent=5 // pred_check_branch
      %226 = sbr.rel (%p223) target = $region12
    $region11: #{han_forward.13} parent=5 // pred_region
      %s227 = ssub.s32 %s13, 1
      // Predicated region
      $region13: #{han_forward.13} parent=11 // pred_check
        %p228 = pneg %p51
      $region14: #{han_forward.13} parent=11 // pred_check_branch
        %230 = sbr.rel (%p228) target = $region16
      $region15: #{han_forward.13} parent=11 // pred_region
        %s231 = smul.u32 2, %s23
        %p232 = scmp.lt.s32.totalorder %s231, 1
        %s233 = scalar_select %p232, %s231, 1
        %s234 = smul.addr %s233, 8
        %s235 = scalar_lea.vmem %s0, %s234
        %s236 = smul.u32 2, %s23
      $region16: #{han_forward.13} parent=11 // pred_fallthru
        _
    $region12: #{han_forward.13} parent=5 // pred_fallthru
      _
    %p237 = scmp.lt.s32.totalorder %s13, 2
    // Predicated region
    $region17: #{han_forward.13} parent=5 // pred_check
      %p238 = pneg %p237
    $region18: #{han_forward.13} parent=5 // pred_check_branch
      %240 = sbr.rel (%p238) target = $region20
    $region19: #{han_forward.13} parent=5 // pred_region
      // Predicated region
      $region21: #{han_forward.13} parent=19 // pred_check
        %p241 = pneg %p71
      $region22: #{han_forward.13} parent=19 // pred_check_branch
        %243 = sbr.rel (%p241) target = $region24
      $region23: #{han_forward.13} parent=19 // pred_region
        %p244 = scmp.lt.s32.totalorder %s20, 1
        %s245 = scalar_select %p244, %s20, 1
        %s246 = smul.addr %s245, 2
        %s247 = smul.addr %s246, 8
        %s248 = scalar_lea.vmem %s1, %s247
      $region24: #{han_forward.13} parent=19 // pred_fallthru
        _
      // Predicated region
      $region25: #{han_forward.13} parent=19 // pred_check
        %p249 = pneg %p97
      $region26: #{han_forward.13} parent=19 // pred_check_branch
        %251 = sbr.rel (%p249) target = $region28
      $region27: #{han_forward.13} parent=19 // pred_region
        %p252 = scmp.lt.s32.totalorder %s20, 1
        %s253 = scalar_select %p252, %s20, 1
        %s254 = smul.addr %s253, 2
        %s255 = smul.addr %s254, 8
        %s256 = scalar_lea.vmem %s2, %s255
      $region28: #{han_forward.13} parent=19 // pred_fallthru
        _
      // Predicated region
      $region29: #{han_forward.13} parent=19 // pred_check
        %p257 = pneg %p123
      $region30: #{han_forward.13} parent=19 // pred_check_branch
        %259 = sbr.rel (%p257) target = $region32
      $region31: #{han_forward.13} parent=19 // pred_region
        %p260 = scmp.lt.s32.totalorder %s20, 1
        %s261 = scalar_select %p260, %s20, 1
        %s262 = smul.addr %s261, 2
        %s263 = smul.addr %s262, 8
        %s264 = scalar_lea.vmem %s3, %s263
      $region32: #{han_forward.13} parent=19 // pred_fallthru
        _
    $region20: #{han_forward.13} parent=5 // pred_fallthru
      _
    %p265 = scmp.le.s32.totalorder 1, %s13
    %p266 = scmp.lt.s32.totalorder %s13, 3
    %p267 = pnand %p265, %p266
    %p268 = pneg %p267
    // Predicated region
    $region33: #{han_forward.13} parent=5 // pred_check
      _
    $region34: #{han_forward.13} parent=5 // pred_check_branch
      %270 = sbr.rel (%p267) target = $region36
    $region35: #{han_forward.13} parent=5 // pred_region
      %s271 = ssub.s32 %s13, 1
      %s272 = smul.u32 2, %s23
      %p273 = scmp.lt.s32.totalorder %s272, 1
      %s274 = scalar_select %p273, %s272, 1
      %s275 = smul.addr %s274, 8
      %s276 = scalar_lea.vmem %s0, %s275
      %p277 = pneg %p51
      %p278 = pneg %p48
      %p279 = scmp.lt.s32.totalorder %s22, 1
      %s280 = scalar_select %p279, %s22, 1
      %s281 = smul.addr %s280, 2
      %s282 = smul.addr %s281, 8
      %s283 = scalar_lea.vmem %s1, %s282
      %p284 = pneg %p77
      %p285 = pneg %p74
      %p286 = scmp.lt.s32.totalorder %s22, 1
      %s287 = scalar_select %p286, %s22, 1
      %s288 = smul.addr %s287, 2
      %s289 = smul.addr %s288, 8
      %s290 = scalar_lea.vmem %s2, %s289
      %p291 = pneg %p103
      %p292 = pneg %p100
      %p293 = scmp.lt.s32.totalorder %s22, 1
      %s294 = scalar_select %p293, %s22, 1
      %s295 = smul.addr %s294, 2
      %s296 = smul.addr %s295, 8
      %s297 = scalar_lea.vmem %s3, %s296
      %p298 = pneg %p129
      %p299 = pneg %p126
      %p300 = pneg %p157
      %p301 = pneg %p154
      %s302 = smul.u32 2, %s23
      %p303 = scmp.lt.s32.totalorder %s22, 1
      %s304 = scalar_select %p303, %s22, 1
      %p305 = scmp.lt.s32.totalorder %s302, 1
      %s306 = scalar_select %p305, %s302, 1
      %s307 = smul.addr %s304, 2
      %s308 = sadd.s32 %s306, %s307
      %s309 = smul.addr %s308, 8
      %s310 = scalar_lea.vmem %s4, %s309
      %p311 = pneg %p185
      %p312 = pneg %p182
      %p313 = scmp.lt.s32.totalorder %s22, 1
      %s314 = scalar_select %p313, %s22, 1
      %p315 = scmp.lt.s32.totalorder %s23, 0
      %s316 = scalar_select %p315, %s23, 0
      %s317 = sadd.s32 %s316, %s314
      %s318 = smul.addr %s317, 2
      %s319 = scalar_lea.vmem %s5, %s318
      %p320 = pneg %p213
      %p321 = pneg %p210
      %s322 = smul.u32 2, %s23
      %p323 = scmp.lt.s32.totalorder %s22, 1
      %s324 = scalar_select %p323, %s22, 1
      %p325 = scmp.lt.s32.totalorder %s322, 1
      %s326 = scalar_select %p325, %s322, 1
      %s327 = smul.addr %s324, 2
      %s328 = sadd.s32 %s326, %s327
      %s329 = smul.addr %s328, 8
      %s330 = scalar_lea.vmem %s6, %s329
      %s331 = smul.u32 2, %s23
      %p332 = scmp.lt.s32.totalorder %s331, 1
      %s333 = scalar_select %p332, %s331, 1
      %s334 = smul.addr %s333, 8
      %s335 = scalar_lea.vmem %s0, %s334
      %s336 = smul.u32 2, %s23
      %p337 = scmp.lt.s32.totalorder %s22, 1
      %s338 = scalar_select %p337, %s22, 1
      %s339 = smul.addr %s338, 2
      %s340 = smul.addr %s339, 8
      %s341 = scalar_lea.vmem %s1, %s340
      %p342 = scmp.lt.s32.totalorder %s22, 1
      %s343 = scalar_select %p342, %s22, 1
      %s344 = smul.addr %s343, 2
      %s345 = smul.addr %s344, 8
      %s346 = scalar_lea.vmem %s2, %s345
      %p347 = scmp.lt.s32.totalorder %s22, 1
      %s348 = scalar_select %p347, %s22, 1
      %s349 = smul.addr %s348, 2
      %s350 = smul.addr %s349, 8
      %s351 = scalar_lea.vmem %s3, %s350
      %s352 = smul.u32 2, %s23
      %p353 = scmp.lt.s32.totalorder %s22, 1
      %s354 = scalar_select %p353, %s22, 1
      %p355 = scmp.lt.s32.totalorder %s352, 1
      %s356 = scalar_select %p355, %s352, 1
      %s357 = smul.addr %s354, 2
      %s358 = sadd.s32 %s356, %s357
      %s359 = smul.addr %s358, 8
      %s360 = scalar_lea.vmem %s4, %s359
      %s361 = smul.u32 2, %s23
      %p362 = scmp.lt.s32.totalorder %s22, 1
      %s363 = scalar_select %p362, %s22, 1
      %p364 = scmp.lt.s32.totalorder %s23, 0
      %s365 = scalar_select %p364, %s23, 0
      %s366 = sadd.s32 %s365, %s363
      %s367 = smul.addr %s366, 2
      %s368 = scalar_lea.vmem %s5, %s367
      %s369 = smul.u32 2, %s23
      %p370 = scmp.lt.s32.totalorder %s22, 1
      %s371 = scalar_select %p370, %s22, 1
      %p372 = scmp.lt.s32.totalorder %s369, 1
      %s373 = scalar_select %p372, %s369, 1
      %s374 = smul.addr %s371, 2
      %s375 = sadd.s32 %s373, %s374
      %s376 = smul.addr %s375, 8
      %s377 = scalar_lea.vmem %s6, %s376
      %s378 = smul.u32 2, %s23
      %v379 = vld [vmem:[%s335] sm:$0xff]
      %v380 = vld [vmem:[%s335 + $0x8] sm:$0xff]
      %v381 = vld [vmem:[%s341] sm:$0xff]
      %v382 = vld [vmem:[%s341 + $0x8] sm:$0xff]
      %vm383 = vcmask 130048
      %v385 = vsel %vm383, %v379, 0
      %v388 = vsel %vm383, %v380, 0
      %390 = vmatprep.subr.mxu0 0.0
      %391 = vmatpush1.msra.mxu0 %v381
      %392 = vmatprep.subr.mxu0 0.0
      %393 = vmatpush1.msra.mxu0 %v382
      %394 = vmatprep.subr.mxu0 0.0
      %395 = vmatpush1.msra.mxu0 0.0
      %396 = vmatprep.subr.mxu0 0.0
      %397 = vmatpush1.msra.mxu0 0.0
      %398 = vmatprep.subr.mxu0 0.0
      %399 = vmatpush1.msra.mxu0 0.0
      %400 = vmatprep.subr.mxu0 0.0
      %401 = vmatpush1.msra.mxu0 0.0
      %402 = vmatprep.subr.mxu0 0.0
      %403 = vmatpush1.msra.mxu0 0.0
      %404 = vmatprep.subr.mxu0 0.0
      %405 = vmatpush1.msra.mxu0 0.0
      %406 = vmatprep.subr.mxu0 0.0
      %407 = vmatpush1.msra.mxu0 0.0
      %408 = vmatprep.subr.mxu0 0.0
      %409 = vmatpush1.msra.mxu0 0.0
      %410 = vmatprep.subr.mxu0 0.0
      %411 = vmatpush1.msra.mxu0 0.0
      %412 = vmatprep.subr.mxu0 0.0
      %413 = vmatpush1.msra.mxu0 0.0
      %414 = vmatprep.subr.mxu0 0.0
      %415 = vmatpush1.msra.mxu0 0.0
      %416 = vmatprep.subr.mxu0 0.0
      %417 = vmatpush1.msra.mxu0 0.0
      %418 = vmatprep.subr.mxu0 0.0
      %419 = vmatpush1.msra.mxu0 0.0
      %420 = vmatprep.subr.mxu0 0.0
      %421 = vmatpush1.msra.mxu0 0.0
      %422 = vmatprep.subr.mxu0 0.0
      %423 = vmatpush1.msra.mxu0 0.0
      %424 = vmatprep.subr.mxu0 0.0
      %425 = vmatpush1.msra.mxu0 0.0
      %426 = vmatprep.subr.mxu0 0.0
      %427 = vmatpush1.msra.mxu0 0.0
      %428 = vmatprep.subr.mxu0 0.0
      %429 = vmatpush1.msra.mxu0 0.0
      %430 = vmatprep.subr.mxu0 0.0
      %431 = vmatpush1.msra.mxu0 0.0
      %432 = vmatprep.subr.mxu0 0.0
      %433 = vmatpush1.msra.mxu0 0.0
      %434 = vmatprep.subr.mxu0 0.0
      %435 = vmatpush1.msra.mxu0 0.0
      %436 = vmatprep.subr.mxu0 0.0
      %437 = vmatpush1.msra.mxu0 0.0
      %438 = vmatprep.subr.mxu0 0.0
      %439 = vmatpush1.msra.mxu0 0.0
      %440 = vmatprep.subr.mxu0 0.0
      %441 = vmatpush1.msra.mxu0 0.0
      %442 = vmatprep.subr.mxu0 0.0
      %443 = vmatpush1.msra.mxu0 0.0
      %444 = vmatprep.subr.mxu0 0.0
      %445 = vmatpush1.msra.mxu0 0.0
      %446 = vmatprep.subr.mxu0 0.0
      %447 = vmatpush1.msra.mxu0 0.0
      %448 = vmatprep.subr.mxu0 0.0
      %449 = vmatpush1.msra.mxu0 0.0
      %450 = vmatprep.subr.mxu0 0.0
      %451 = vmatpush1.msra.mxu0 0.0
      %452 = vmatprep.subr.mxu0 0.0
      %453 = vmatpush1.msra.mxu0 0.0
      %454 = vmatprep.mubr.f32.mxu0 0.0
      %455 = vmatmul.mubr.f32.gmra.mrb[0].mxu0 %v385
      %v456 = vpop.f32.mrb[0].mxu0
      %v457 = vadd.f32 0.0, %v456
      %v458 = vpop.f32.mrb[0].mxu0
      %459 = vmatprep.mubr.f32.mxu0 0.0
      %460 = vmatmul.mubr.f32.gmra.mrb[0].mxu0 %v388
      %v461 = vpop.f32.mrb[0].mxu0
      %v462 = vadd.f32 0.0, %v461
      %v463 = vpop.f32.mrb[0].mxu0
      %464 = vdwg.mxu0
      %465 = vst.msk [vmem:[%s360] sm:$0xff] %vm383, %v457
      %466 = vst.msk [vmem:[%s360 + $0x8] sm:$0xff] %vm383, %v462
      %v467 = vld [vmem:[%s351] sm:$0xff]
      %v468 = vld [vmem:[%s351 + $0x8] sm:$0xff]
      %v470 = vsel %vm383, %v457, 0
      %v473 = vsel %vm383, %v462, 0
      %475 = vmatprep.subr.mxu0 0.0
      %476 = vmatpush1.msra.mxu0 %v467
      %477 = vmatprep.subr.mxu0 0.0
      %478 = vmatpush1.msra.mxu0 %v468
      %479 = vmatprep.subr.mxu0 0.0
      %480 = vmatpush1.msra.mxu0 0.0
      %481 = vmatprep.subr.mxu0 0.0
      %482 = vmatpush1.msra.mxu0 0.0
      %483 = vmatprep.subr.mxu0 0.0
      %484 = vmatpush1.msra.mxu0 0.0
      %485 = vmatprep.subr.mxu0 0.0
      %486 = vmatpush1.msra.mxu0 0.0
      %487 = vmatprep.subr.mxu0 0.0
      %488 = vmatpush1.msra.mxu0 0.0
      %489 = vmatprep.subr.mxu0 0.0
      %490 = vmatpush1.msra.mxu0 0.0
      %491 = vmatprep.subr.mxu0 0.0
      %492 = vmatpush1.msra.mxu0 0.0
      %493 = vmatprep.subr.mxu0 0.0
      %494 = vmatpush1.msra.mxu0 0.0
      %495 = vmatprep.subr.mxu0 0.0
      %496 = vmatpush1.msra.mxu0 0.0
      %497 = vmatprep.subr.mxu0 0.0
      %498 = vmatpush1.msra.mxu0 0.0
      %499 = vmatprep.subr.mxu0 0.0
      %500 = vmatpush1.msra.mxu0 0.0
      %501 = vmatprep.subr.mxu0 0.0
      %502 = vmatpush1.msra.mxu0 0.0
      %503 = vmatprep.subr.mxu0 0.0
      %504 = vmatpush1.msra.mxu0 0.0
      %505 = vmatprep.subr.mxu0 0.0
      %506 = vmatpush1.msra.mxu0 0.0
      %507 = vmatprep.subr.mxu0 0.0
      %508 = vmatpush1.msra.mxu0 0.0
      %509 = vmatprep.subr.mxu0 0.0
      %510 = vmatpush1.msra.mxu0 0.0
      %511 = vmatprep.subr.mxu0 0.0
      %512 = vmatpush1.msra.mxu0 0.0
      %513 = vmatprep.subr.mxu0 0.0
      %514 = vmatpush1.msra.mxu0 0.0
      %515 = vmatprep.subr.mxu0 0.0
      %516 = vmatpush1.msra.mxu0 0.0
      %517 = vmatprep.subr.mxu0 0.0
      %518 = vmatpush1.msra.mxu0 0.0
      %519 = vmatprep.subr.mxu0 0.0
      %520 = vmatpush1.msra.mxu0 0.0
      %521 = vmatprep.subr.mxu0 0.0
      %522 = vmatpush1.msra.mxu0 0.0
      %523 = vmatprep.subr.mxu0 0.0
      %524 = vmatpush1.msra.mxu0 0.0
      %525 = vmatprep.subr.mxu0 0.0
      %526 = vmatpush1.msra.mxu0 0.0
      %527 = vmatprep.subr.mxu0 0.0
      %528 = vmatpush1.msra.mxu0 0.0
      %529 = vmatprep.subr.mxu0 0.0
      %530 = vmatpush1.msra.mxu0 0.0
      %531 = vmatprep.subr.mxu0 0.0
      %532 = vmatpush1.msra.mxu0 0.0
      %533 = vmatprep.subr.mxu0 0.0
      %534 = vmatpush1.msra.mxu0 0.0
      %535 = vmatprep.subr.mxu0 0.0
      %536 = vmatpush1.msra.mxu0 0.0
      %537 = vmatprep.subr.mxu0 0.0
      %538 = vmatpush1.msra.mxu0 0.0
      %539 = vmatprep.mubr.f32.mxu0 0.0
      %540 = vmatmul.mubr.f32.gmra.mrb[0].mxu0 %v470
      %v541 = vpop.f32.mrb[0].mxu0
      %v542 = vadd.f32 0.0, %v541
      %v543 = vpop.f32.mrb[0].mxu0
      %544 = vmatprep.mubr.f32.mxu0 0.0
      %545 = vmatmul.mubr.f32.gmra.mrb[0].mxu0 %v473
      %v546 = vpop.f32.mrb[0].mxu0
      %v547 = vadd.f32 0.0, %v546
      %v548 = vpop.f32.mrb[0].mxu0
      %549 = vdwg.mxu0
      %vm550 = vcmask 15360
      %551 = vst.msk [vmem:[%s377] sm:$0xff] %vm550, %v542
      %552 = vst.msk [vmem:[%s377 + $0x8] sm:$0xff] %vm550, %v547
      %v553 = vld [vmem:[%s346] sm:$0xff]
      %v554 = vld [vmem:[%s346 + $0x8] sm:$0xff]
      %555 = vxpose.xlu0.b32.start [1/16] %v553, 128
      %556 = vxpose.xlu0.b32.cont [2/16] %v554, 128
      %557 = vxpose.xlu0.b32.cont [3/16] 0.0, 128
      %558 = vxpose.xlu0.b32.cont [4/16] 0.0, 128
      %559 = vxpose.xlu0.b32.cont [5/16] 0.0, 128
      %560 = vxpose.xlu0.b32.cont [6/16] 0.0, 128
      %561 = vxpose.xlu0.b32.cont [7/16] 0.0, 128
      %562 = vxpose.xlu0.b32.cont [8/16] 0.0, 128
      %563 = vxpose.xlu0.b32.cont [9/16] 0.0, 128
      %564 = vxpose.xlu0.b32.cont [10/16] 0.0, 128
      %565 = vxpose.xlu0.b32.cont [11/16] 0.0, 128
      %566 = vxpose.xlu0.b32.cont [12/16] 0.0, 128
      %567 = vxpose.xlu0.b32.cont [13/16] 0.0, 128
      %568 = vxpose.xlu0.b32.cont [14/16] 0.0, 128
      %569 = vxpose.xlu0.b32.cont [15/16] 0.0, 128
      %570 = vxpose.xlu0.b32.end [16/16] 0.0, 128
      %v571 = vpop.trf.xlu0
      %v572 = vpop.trf.xlu0
      %v573 = vpop.trf.xlu0
      %v574 = vpop.trf.xlu0
      %v575 = vpop.trf.xlu0
      %v576 = vpop.trf.xlu0
      %v577 = vpop.trf.xlu0
      %v578 = vpop.trf.xlu0
      %v579 = vpop.trf.xlu0
      %v580 = vpop.trf.xlu0
      %v581 = vpop.trf.xlu0
      %v582 = vpop.trf.xlu0
      %v583 = vpop.trf.xlu0
      %v584 = vpop.trf.xlu0
      %v585 = vpop.trf.xlu0
      %v586 = vpop.trf.xlu0
      %v588 = vsel %vm383, %v571, 0
      %590 = vmatprep.subr.mxu0 0.0
      %591 = vmatpush1.xpose.msra.mxu0 %v470
      %592 = vmatprep.subr.mxu0 0.0
      %593 = vmatpush1.xpose.msra.mxu0 %v473
      %594 = vmatprep.subr.mxu0 0.0
      %595 = vmatpush1.xpose.msra.mxu0 0.0
      %596 = vmatprep.subr.mxu0 0.0
      %597 = vmatpush1.xpose.msra.mxu0 0.0
      %598 = vmatprep.subr.mxu0 0.0
      %599 = vmatpush1.xpose.msra.mxu0 0.0
      %600 = vmatprep.subr.mxu0 0.0
      %601 = vmatpush1.xpose.msra.mxu0 0.0
      %602 = vmatprep.subr.mxu0 0.0
      %603 = vmatpush1.xpose.msra.mxu0 0.0
      %604 = vmatprep.subr.mxu0 0.0
      %605 = vmatpush1.xpose.msra.mxu0 0.0
      %606 = vmatprep.subr.mxu0 0.0
      %607 = vmatpush1.xpose.msra.mxu0 0.0
      %608 = vmatprep.subr.mxu0 0.0
      %609 = vmatpush1.xpose.msra.mxu0 0.0
      %610 = vmatprep.subr.mxu0 0.0
      %611 = vmatpush1.xpose.msra.mxu0 0.0
      %612 = vmatprep.subr.mxu0 0.0
      %613 = vmatpush1.xpose.msra.mxu0 0.0
      %614 = vmatprep.subr.mxu0 0.0
      %615 = vmatpush1.xpose.msra.mxu0 0.0
      %616 = vmatprep.subr.mxu0 0.0
      %617 = vmatpush1.xpose.msra.mxu0 0.0
      %618 = vmatprep.subr.mxu0 0.0
      %619 = vmatpush1.xpose.msra.mxu0 0.0
      %620 = vmatprep.subr.mxu0 0.0
      %621 = vmatpush1.xpose.msra.mxu0 0.0
      %622 = vmatprep.subr.mxu0 0.0
      %623 = vmatpush1.xpose.msra.mxu0 0.0
      %624 = vmatprep.subr.mxu0 0.0
      %625 = vmatpush1.xpose.msra.mxu0 0.0
      %626 = vmatprep.subr.mxu0 0.0
      %627 = vmatpush1.xpose.msra.mxu0 0.0
      %628 = vmatprep.subr.mxu0 0.0
      %629 = vmatpush1.xpose.msra.mxu0 0.0
      %630 = vmatprep.subr.mxu0 0.0
      %631 = vmatpush1.xpose.msra.mxu0 0.0
      %632 = vmatprep.subr.mxu0 0.0
      %633 = vmatpush1.xpose.msra.mxu0 0.0
      %634 = vmatprep.subr.mxu0 0.0
      %635 = vmatpush1.xpose.msra.mxu0 0.0
      %636 = vmatprep.subr.mxu0 0.0
      %637 = vmatpush1.xpose.msra.mxu0 0.0
      %638 = vmatprep.subr.mxu0 0.0
      %639 = vmatpush1.xpose.msra.mxu0 0.0
      %640 = vmatprep.subr.mxu0 0.0
      %641 = vmatpush1.xpose.msra.mxu0 0.0
      %642 = vmatprep.subr.mxu0 0.0
      %643 = vmatpush1.xpose.msra.mxu0 0.0
      %644 = vmatprep.subr.mxu0 0.0
      %645 = vmatpush1.xpose.msra.mxu0 0.0
      %646 = vmatprep.subr.mxu0 0.0
      %647 = vmatpush1.xpose.msra.mxu0 0.0
      %648 = vmatprep.subr.mxu0 0.0
      %649 = vmatpush1.xpose.msra.mxu0 0.0
      %650 = vmatprep.subr.mxu0 0.0
      %651 = vmatpush1.xpose.msra.mxu0 0.0
      %652 = vmatprep.subr.mxu0 0.0
      %653 = vmatpush1.xpose.msra.mxu0 0.0
      %654 = vmatprep.mubr.f32.mxu0 0.0
      %655 = vmatmul.mubr.f32.gmra.mrb[0].mxu0 %v588
      %v656 = vpop.f32.mrb[0].mxu0
      %v657 = vadd.f32 0.0, %v656
      %v658 = vpop.f32.mrb[0].mxu0
      %659 = vdwg.mxu0
      %vm660 = vcmask 123904
      %661 = vst.msk [vmem:[%s368] sm:$0x3] %vm660, %v657
      %s662 = smul.u32 2, %s23
      %p663 = scmp.lt.s32.totalorder %s22, 1
      %s664 = scalar_select %p663, %s22, 1
      %p665 = scmp.lt.s32.totalorder %s662, 1
      %s666 = scalar_select %p665, %s662, 1
      %s667 = smul.addr %s664, 2
      %s668 = sadd.s32 %s666, %s667
      %s669 = smul.addr %s668, 8
      %s670 = scalar_lea.vmem %s4, %s669
      %p671 = scmp.lt.s32.totalorder %s22, 1
      %s672 = scalar_select %p671, %s22, 1
      %p673 = scmp.lt.s32.totalorder %s23, 0
      %s674 = scalar_select %p673, %s23, 0
      %s675 = sadd.s32 %s674, %s672
      %s676 = smul.addr %s675, 2
      %s677 = scalar_lea.vmem %s5, %s676
      %s678 = smul.u32 2, %s23
      %p679 = scmp.lt.s32.totalorder %s22, 1
      %s680 = scalar_select %p679, %s22, 1
      %p681 = scmp.lt.s32.totalorder %s678, 1
      %s682 = scalar_select %p681, %s678, 1
      %s683 = smul.addr %s680, 2
      %s684 = sadd.s32 %s682, %s683
      %s685 = smul.addr %s684, 8
      %s686 = scalar_lea.vmem %s6, %s685
      // Predicated region
      $region37: #{han_forward.13} parent=35 // pred_check
        %p687 = pneg %p154
      $region38: #{han_forward.13} parent=35 // pred_check_branch
        %689 = sbr.rel (%p687) target = $region40
      $region39: #{han_forward.13} parent=35 // pred_region
        %s690 = smul.u32 2, %s23
      $region40: #{han_forward.13} parent=35 // pred_fallthru
        _
      // Predicated region
      $region41: #{han_forward.13} parent=35 // pred_check
        %p691 = pneg %p182
      $region42: #{han_forward.13} parent=35 // pred_check_branch
        %693 = sbr.rel (%p691) target = $region44
      $region43: #{han_forward.13} parent=35 // pred_region
        _
      $region44: #{han_forward.13} parent=35 // pred_fallthru
        _
      // Predicated region
      $region45: #{han_forward.13} parent=35 // pred_check
        %p694 = pneg %p210
      $region46: #{han_forward.13} parent=35 // pred_check_branch
        %696 = sbr.rel (%p694) target = $region48
      $region47: #{han_forward.13} parent=35 // pred_region
        %s697 = smul.u32 2, %s23
      $region48: #{han_forward.13} parent=35 // pred_fallthru
        _
    $region36: #{han_forward.13} parent=5 // pred_fallthru
      _
    %p698 = scmp.le.s32.totalorder 2, %s13
    // Predicated region
    $region49: #{han_forward.13} parent=5 // pred_check
      %p699 = pneg %p698
    $region50: #{han_forward.13} parent=5 // pred_check_branch
      %701 = sbr.rel (%p699) target = $region52
    $region51: #{han_forward.13} parent=5 // pred_region
      %s702 = ssub.s32 %s13, 2
      // Predicated region
      $region53: #{han_forward.13} parent=51 // pred_check
        %p703 = pneg %p160
      $region54: #{han_forward.13} parent=51 // pred_check_branch
        %705 = sbr.rel (%p703) target = $region56
      $region55: #{han_forward.13} parent=51 // pred_region
        %s706 = smul.u32 2, %s25
        %p707 = scmp.lt.s32.totalorder %s24, 1
        %s708 = scalar_select %p707, %s24, 1
        %p709 = scmp.lt.s32.totalorder %s706, 1
        %s710 = scalar_select %p709, %s706, 1
        %s711 = smul.addr %s708, 2
        %s712 = sadd.s32 %s710, %s711
        %s713 = smul.addr %s712, 8
        %s714 = scalar_lea.vmem %s4, %s713
      $region56: #{han_forward.13} parent=51 // pred_fallthru
        _
      // Predicated region
      $region57: #{han_forward.13} parent=51 // pred_check
        %p715 = pneg %p188
      $region58: #{han_forward.13} parent=51 // pred_check_branch
        %717 = sbr.rel (%p715) target = $region60
      $region59: #{han_forward.13} parent=51 // pred_region
        %p718 = scmp.lt.s32.totalorder %s24, 1
        %s719 = scalar_select %p718, %s24, 1
        %p720 = scmp.lt.s32.totalorder %s25, 0
        %s721 = scalar_select %p720, %s25, 0
        %s722 = sadd.s32 %s721, %s719
        %s723 = smul.addr %s722, 2
        %s724 = scalar_lea.vmem %s5, %s723
      $region60: #{han_forward.13} parent=51 // pred_fallthru
        _
      // Predicated region
      $region61: #{han_forward.13} parent=51 // pred_check
        %p725 = pneg %p216
      $region62: #{han_forward.13} parent=51 // pred_check_branch
        %727 = sbr.rel (%p725) target = $region64
      $region63: #{han_forward.13} parent=51 // pred_region
        %s728 = smul.u32 2, %s25
        %p729 = scmp.lt.s32.totalorder %s24, 1
        %s730 = scalar_select %p729, %s24, 1
        %p731 = scmp.lt.s32.totalorder %s728, 1
        %s732 = scalar_select %p731, %s728, 1
        %s733 = smul.addr %s730, 2
        %s734 = sadd.s32 %s732, %s733
        %s735 = smul.addr %s734, 8
        %s736 = scalar_lea.vmem %s6, %s735
      $region64: #{han_forward.13} parent=51 // pred_fallthru
        _
    $region52: #{han_forward.13} parent=5 // pred_fallthru
      _
  $region6: #{han_forward.13} parent=0 // loop_footer
    %s17 = sadd.s32 1, %s13
  $region7: #{han_forward.13} parent=0 // loop_footer_branch
    %12 = sbr.rel target = $region3
  $region8: #{han_forward.13} parent=0 // loop_exit
    _

// kernel: han_forward.10
$region0: #{han_forward.10}
  #allocation0 [shape = 'u32[]', space=smem, size = 0x4, offset = 0x4, fixed_abs, tag = 'smem constant byte address 0x4 - core index']
  #allocation1 [shape = 'u32[144,128]{1,0:T(1,128)}', space=vmem, size = 0x12000, scoped, tag = 'internal scratch']
  #allocation2 [shape = 'f32[16,2]{1,0:T(8,128)}', space=vmem, size = 0x2000, scoped, tag = 'scratch operand']
  #allocation3 [shape = 'f32[16,2]{1,0:T(8,128)}', space=vmem, size = 0x2000, scoped, tag = 'scratch operand']
  #allocation4 [shape = 'f32[16,16]{1,0:T(8,128)}', space=vmem, size = 0x2000, scoped, tag = 'scratch operand']
  %s0 = inlined_call_operand.vmem [shape: f32[2,16,16], index: 0, kind: input, shape index: {}, may-alias: {0,1}]
  %s1 = inlined_call_operand.vmem [shape: f32[2,16,16], index: 1, kind: input, shape index: {}, may-alias: {0,1}]
  %s2 = inlined_call_operand.vmem [shape: f32[2,2,16], index: 2, kind: input, shape index: {}]
  %s3 = inlined_call_operand.vmem [shape: f32[2,16,2], index: 3, kind: input, shape index: {}]
  %s4 = inlined_call_operand.vmem [shape: f32[2,1,16], index: 4, kind: input, shape index: {}]
  %s5 = inlined_call_operand.vmem [shape: s8[2,16,16], index: 5, kind: input, shape index: {}]
  %s6 = inlined_call_operand.vmem [shape: f32[16,8], index: 6, kind: input, shape index: {}]
  %s7 = inlined_call_operand.vmem [shape: f32[1,8], index: 7, kind: input, shape index: {}]
  %s8 = inlined_call_operand.vmem [shape: f32[8,1], index: 8, kind: input, shape index: {}]
  %s9 = inlined_call_operand.vmem [shape: f32[2,16,16], index: 9, kind: output, shape index: {0}]
  %s10 = inlined_call_operand.vmem [shape: f32[2,16,1], index: 10, kind: output, shape index: {1}]
  %11 = xla_tuple %s9, %s10
  %s12 = sld [smem:[#allocation0]]
  $region85: #{han_forward.10} parent=0
    _
  %s14 = ssub.s32 1, %s12
  %s15 = scalar_select 0, %s14, %s12
  loop: start=0, step=1, limit=4
  $region2: #{han_forward.10} parent=0 // loop_pre_header
    _
  $region3: #{han_forward.10} parent=0 // loop_header
    %s17 = sphi 0, %s21
    %p18 = scmp.ge.s32.totalorder %s17, 4
    %s24 = sphi 0, %s43
    %s25 = sphi 0, %s39
    %s26 = sphi 0, %s35
    %s27 = sphi 0, %s24
    %s28 = sphi 0, %s25
    %s29 = sphi 0, %s26
    %s30 = sphi 0, %s27
    %s31 = sphi 0, %s28
    %s32 = sphi 0, %s29
    %s48 = sphi 0, %s50
    %s51 = sphi 0, %s48
    %s52 = sphi 0, %s51
    %s68 = sphi 0, %s52
    %s76 = sphi 0, %s78
    %s79 = sphi 0, %s76
    %s80 = sphi 0, %s79
    %s96 = sphi 0, %s80
    %s104 = sphi 0, %s106
    %s107 = sphi 0, %s104
    %s108 = sphi 0, %s107
    %s124 = sphi 0, %s108
    %s132 = sphi 0, %s134
    %s135 = sphi 0, %s132
    %s136 = sphi 0, %s135
    %s152 = sphi 0, %s136
    %s158 = sphi 0, %s160
    %s161 = sphi 0, %s158
    %s162 = sphi 0, %s161
    %s178 = sphi 0, %s162
    %s188 = sphi 0, %s190
    %s191 = sphi 0, %s188
    %s192 = sphi 0, %s191
    %s208 = sphi 0, %s192
    %s212 = sphi 0, %s212
    %s214 = sphi 0, %s212
    %s215 = sphi 0, %s214
    %s229 = sphi 0, %s215
    %s233 = sphi 0, %s233
    %s235 = sphi 0, %s233
    %s236 = sphi 0, %s235
    %s250 = sphi 0, %s236
    %s254 = sphi 0, %s254
    %s256 = sphi 0, %s254
    %s257 = sphi 0, %s256
    %s271 = sphi 0, %s257
    %s279 = sphi 0, %s281
    %s282 = sphi 0, %s279
    %s283 = sphi 0, %s282
    %s299 = sphi 0, %s283
    %s307 = sphi 0, %s309
    %s310 = sphi 0, %s307
    %s311 = sphi 0, %s310
    %s327 = sphi 0, %s311
  $region4: #{han_forward.10} parent=0 // loop_header_branch
    %20 = sbr.rel (%p18) target = $region8
  $region5: #{han_forward.10} parent=0 // loop_body
    %s22 = ssub.s32 %s17, 1
    %s23 = ssub.s32 %s17, 2
    %s33 = sadd.s32 1, %s26
    %p34 = scmp.ge.s32.totalorder %s33, 1
    %s35 = scalar_select %p34, 0, %s33
    %s36 = sadd.s32 1, %s25
    %s37 = scalar_select %p34, %s36, %s25
    %p38 = scmp.ge.s32.totalorder %s37, 2
    %s39 = scalar_select %p38, 0, %s37
    %s40 = sadd.s32 1, %s24
    %s41 = scalar_select %p38, %s40, %s24
    %p42 = scmp.ge.s32.totalorder %s41, 1
    %s43 = scalar_select %p42, 0, %s41
    %s44 = ssub.s32 %s25, %s39
    %s45 = ssub.s32 %s24, %s43
    %s46 = sor.u32 %s44, %s45
    %p47 = scmp.eq.s32.totalorder %s46, 0
    %s49 = sadd.s32 %s48, 1
    %s50 = scalar_select %p47, %s48, %s49
    %p53 = pneg %p47
    %p54 = scmp.eq.s32.totalorder %s17, 1
    %p55 = por %p53, %p54
    %p56 = scmp.ne.s32.totalorder %s48, %s51
    %p57 = scmp.eq.s32.totalorder %s17, 0
    %p58 = por %p56, %p57
    %p59 = scmp.ne.s32.totalorder %s48, %s51
    %p60 = scmp.eq.s32.totalorder %s22, 1
    %p61 = por %p59, %p60
    %p62 = scmp.ne.s32.totalorder %s51, %s52
    %p63 = scmp.eq.s32.totalorder %s22, 0
    %p64 = por %p62, %p63
    %p65 = scmp.ne.s32.totalorder %s51, %s52
    %p66 = scmp.eq.s32.totalorder %s23, 1
    %p67 = por %p65, %p66
    %p69 = scmp.ne.s32.totalorder %s52, %s68
    %p70 = scmp.eq.s32.totalorder %s23, 0
    %p71 = por %p69, %p70
    %s72 = ssub.s32 %s25, %s39
    %s73 = ssub.s32 %s26, %s35
    %s74 = sor.u32 %s72, %s73
    %p75 = scmp.eq.s32.totalorder %s74, 0
    %s77 = sadd.s32 %s76, 1
    %s78 = scalar_select %p75, %s76, %s77
    %p81 = pneg %p75
    %p82 = scmp.eq.s32.totalorder %s17, 1
    %p83 = por %p81, %p82
    %p84 = scmp.ne.s32.totalorder %s76, %s79
    %p85 = scmp.eq.s32.totalorder %s17, 0
    %p86 = por %p84, %p85
    %p87 = scmp.ne.s32.totalorder %s76, %s79
    %p88 = scmp.eq.s32.totalorder %s22, 1
    %p89 = por %p87, %p88
    %p90 = scmp.ne.s32.totalorder %s79, %s80
    %p91 = scmp.eq.s32.totalorder %s22, 0
    %p92 = por %p90, %p91
    %p93 = scmp.ne.s32.totalorder %s79, %s80
    %p94 = scmp.eq.s32.totalorder %s23, 1
    %p95 = por %p93, %p94
    %p97 = scmp.ne.s32.totalorder %s80, %s96
    %p98 = scmp.eq.s32.totalorder %s23, 0
    %p99 = por %p97, %p98
    %s100 = ssub.s32 %s25, %s39
    %s101 = ssub.s32 %s26, %s35
    %s102 = sor.u32 %s100, %s101
    %p103 = scmp.eq.s32.totalorder %s102, 0
    %s105 = sadd.s32 %s104, 1
    %s106 = scalar_select %p103, %s104, %s105
    %p109 = pneg %p103
    %p110 = scmp.eq.s32.totalorder %s17, 1
    %p111 = por %p109, %p110
    %p112 = scmp.ne.s32.totalorder %s104, %s107
    %p113 = scmp.eq.s32.totalorder %s17, 0
    %p114 = por %p112, %p113
    %p115 = scmp.ne.s32.totalorder %s104, %s107
    %p116 = scmp.eq.s32.totalorder %s22, 1
    %p117 = por %p115, %p116
    %p118 = scmp.ne.s32.totalorder %s107, %s108
    %p119 = scmp.eq.s32.totalorder %s22, 0
    %p120 = por %p118, %p119
    %p121 = scmp.ne.s32.totalorder %s107, %s108
    %p122 = scmp.eq.s32.totalorder %s23, 1
    %p123 = por %p121, %p122
    %p125 = scmp.ne.s32.totalorder %s108, %s124
    %p126 = scmp.eq.s32.totalorder %s23, 0
    %p127 = por %p125, %p126
    %s128 = ssub.s32 %s25, %s39
    %s129 = ssub.s32 %s24, %s43
    %s130 = sor.u32 %s128, %s129
    %p131 = scmp.eq.s32.totalorder %s130, 0
    %s133 = sadd.s32 %s132, 1
    %s134 = scalar_select %p131, %s132, %s133
    %p137 = pneg %p131
    %p138 = scmp.eq.s32.totalorder %s17, 1
    %p139 = por %p137, %p138
    %p140 = scmp.ne.s32.totalorder %s132, %s135
    %p141 = scmp.eq.s32.totalorder %s17, 0
    %p142 = por %p140, %p141
    %p143 = scmp.ne.s32.totalorder %s132, %s135
    %p144 = scmp.eq.s32.totalorder %s22, 1
    %p145 = por %p143, %p144
    %p146 = scmp.ne.s32.totalorder %s135, %s136
    %p147 = scmp.eq.s32.totalorder %s22, 0
    %p148 = por %p146, %p147
    %p149 = scmp.ne.s32.totalorder %s135, %s136
    %p150 = scmp.eq.s32.totalorder %s23, 1
    %p151 = por %p149, %p150
    %p153 = scmp.ne.s32.totalorder %s136, %s152
    %p154 = scmp.eq.s32.totalorder %s23, 0
    %p155 = por %p153, %p154
    %s156 = ssub.s32 %s25, %s39
    %p157 = scmp.eq.s32.totalorder %s156, 0
    %s159 = sadd.s32 %s158, 1
    %s160 = scalar_select %p157, %s158, %s159
    %p163 = pneg %p157
    %p164 = scmp.eq.s32.totalorder %s17, 1
    %p165 = por %p163, %p164
    %p166 = scmp.ne.s32.totalorder %s158, %s161
    %p167 = scmp.eq.s32.totalorder %s17, 0
    %p168 = por %p166, %p167
    %p169 = scmp.ne.s32.totalorder %s158, %s161
    %p170 = scmp.eq.s32.totalorder %s22, 1
    %p171 = por %p169, %p170
    %p172 = scmp.ne.s32.totalorder %s161, %s162
    %p173 = scmp.eq.s32.totalorder %s22, 0
    %p174 = por %p172, %p173
    %p175 = scmp.ne.s32.totalorder %s161, %s162
    %p176 = scmp.eq.s32.totalorder %s23, 1
    %p177 = por %p175, %p176
    %p179 = scmp.ne.s32.totalorder %s162, %s178
    %p180 = scmp.eq.s32.totalorder %s23, 0
    %p181 = por %p179, %p180
    %s182 = ssub.s32 %s25, %s39
    %s183 = ssub.s32 %s24, %s43
    %s184 = sor.u32 %s182, %s183
    %s185 = ssub.s32 %s26, %s35
    %s186 = sor.u32 %s184, %s185
    %p187 = scmp.eq.s32.totalorder %s186, 0
    %s189 = sadd.s32 %s188, 1
    %s190 = scalar_select %p187, %s188, %s189
    %p193 = pneg %p187
    %p194 = scmp.eq.s32.totalorder %s17, 1
    %p195 = por %p193, %p194
    %p196 = scmp.ne.s32.totalorder %s188, %s191
    %p197 = scmp.eq.s32.totalorder %s17, 0
    %p198 = por %p196, %p197
    %p199 = scmp.ne.s32.totalorder %s188, %s191
    %p200 = scmp.eq.s32.totalorder %s22, 1
    %p201 = por %p199, %p200
    %p202 = scmp.ne.s32.totalorder %s191, %s192
    %p203 = scmp.eq.s32.totalorder %s22, 0
    %p204 = por %p202, %p203
    %p205 = scmp.ne.s32.totalorder %s191, %s192
    %p206 = scmp.eq.s32.totalorder %s23, 1
    %p207 = por %p205, %p206
    %p209 = scmp.ne.s32.totalorder %s192, %s208
    %p210 = scmp.eq.s32.totalorder %s23, 0
    %p211 = por %p209, %p210
    %s213 = sadd.s32 %s212, 1
    %p216 = scmp.eq.s32.totalorder %s17, 1
    %p217 = scmp.ne.s32.totalorder %s212, %s214
    %p218 = scmp.eq.s32.totalorder %s17, 0
    %p219 = por %p217, %p218
    %p220 = scmp.ne.s32.totalorder %s212, %s214
    %p221 = scmp.eq.s32.totalorder %s22, 1
    %p222 = por %p220, %p221
    %p223 = scmp.ne.s32.totalorder %s214, %s215
    %p224 = scmp.eq.s32.totalorder %s22, 0
    %p225 = por %p223, %p224
    %p226 = scmp.ne.s32.totalorder %s214, %s215
    %p227 = scmp.eq.s32.totalorder %s23, 1
    %p228 = por %p226, %p227
    %p230 = scmp.ne.s32.totalorder %s215, %s229
    %p231 = scmp.eq.s32.totalorder %s23, 0
    %p232 = por %p230, %p231
    %s234 = sadd.s32 %s233, 1
    %p237 = scmp.eq.s32.totalorder %s17, 1
    %p238 = scmp.ne.s32.totalorder %s233, %s235
    %p239 = scmp.eq.s32.totalorder %s17, 0
    %p240 = por %p238, %p239
    %p241 = scmp.ne.s32.totalorder %s233, %s235
    %p242 = scmp.eq.s32.totalorder %s22, 1
    %p243 = por %p241, %p242
    %p244 = scmp.ne.s32.totalorder %s235, %s236
    %p245 = scmp.eq.s32.totalorder %s22, 0
    %p246 = por %p244, %p245
    %p247 = scmp.ne.s32.totalorder %s235, %s236
    %p248 = scmp.eq.s32.totalorder %s23, 1
    %p249 = por %p247, %p248
    %p251 = scmp.ne.s32.totalorder %s236, %s250
    %p252 = scmp.eq.s32.totalorder %s23, 0
    %p253 = por %p251, %p252
    %s255 = sadd.s32 %s254, 1
    %p258 = scmp.eq.s32.totalorder %s17, 1
    %p259 = scmp.ne.s32.totalorder %s254, %s256
    %p260 = scmp.eq.s32.totalorder %s17, 0
    %p261 = por %p259, %p260
    %p262 = scmp.ne.s32.totalorder %s254, %s256
    %p263 = scmp.eq.s32.totalorder %s22, 1
    %p264 = por %p262, %p263
    %p265 = scmp.ne.s32.totalorder %s256, %s257
    %p266 = scmp.eq.s32.totalorder %s22, 0
    %p267 = por %p265, %p266
    %p268 = scmp.ne.s32.totalorder %s256, %s257
    %p269 = scmp.eq.s32.totalorder %s23, 1
    %p270 = por %p268, %p269
    %p272 = scmp.ne.s32.totalorder %s257, %s271
    %p273 = scmp.eq.s32.totalorder %s23, 0
    %p274 = por %p272, %p273
    %s275 = ssub.s32 %s25, %s39
    %s276 = ssub.s32 %s24, %s43
    %s277 = sor.u32 %s275, %s276
    %p278 = scmp.eq.s32.totalorder %s277, 0
    %s280 = sadd.s32 %s279, 1
    %s281 = scalar_select %p278, %s279, %s280
    %p284 = pneg %p278
    %p285 = scmp.eq.s32.totalorder %s17, 1
    %p286 = por %p284, %p285
    %p287 = scmp.ne.s32.totalorder %s279, %s282
    %p288 = scmp.eq.s32.totalorder %s17, 0
    %p289 = por %p287, %p288
    %p290 = scmp.ne.s32.totalorder %s279, %s282
    %p291 = scmp.eq.s32.totalorder %s22, 1
    %p292 = por %p290, %p291
    %p293 = scmp.ne.s32.totalorder %s282, %s283
    %p294 = scmp.eq.s32.totalorder %s22, 0
    %p295 = por %p293, %p294
    %p296 = scmp.ne.s32.totalorder %s282, %s283
    %p297 = scmp.eq.s32.totalorder %s23, 1
    %p298 = por %p296, %p297
    %p300 = scmp.ne.s32.totalorder %s283, %s299
    %p301 = scmp.eq.s32.totalorder %s23, 0
    %p302 = por %p300, %p301
    %s303 = ssub.s32 %s25, %s39
    %s304 = ssub.s32 %s24, %s43
    %s305 = sor.u32 %s303, %s304
    %p306 = scmp.eq.s32.totalorder %s305, 0
    %s308 = sadd.s32 %s307, 1
    %s309 = scalar_select %p306, %s307, %s308
    %p312 = pneg %p306
    %p313 = scmp.eq.s32.totalorder %s17, 1
    %p314 = por %p312, %p313
    %p315 = scmp.ne.s32.totalorder %s307, %s310
    %p316 = scmp.eq.s32.totalorder %s17, 0
    %p317 = por %p315, %p316
    %p318 = scmp.ne.s32.totalorder %s307, %s310
    %p319 = scmp.eq.s32.totalorder %s22, 1
    %p320 = por %p318, %p319
    %p321 = scmp.ne.s32.totalorder %s310, %s311
    %p322 = scmp.eq.s32.totalorder %s22, 0
    %p323 = por %p321, %p322
    %p324 = scmp.ne.s32.totalorder %s310, %s311
    %p325 = scmp.eq.s32.totalorder %s23, 1
    %p326 = por %p324, %p325
    %p328 = scmp.ne.s32.totalorder %s311, %s327
    %p329 = scmp.eq.s32.totalorder %s23, 0
    %p330 = por %p328, %p329
    %p331 = scmp.le.s32.totalorder 1, %s17
    %p332 = scmp.lt.s32.totalorder %s17, 3
    %p333 = pnand %p331, %p332
    %p334 = pneg %p333
    // Predicated region
    $region9: #{han_forward.10} parent=5 // pred_check
      _
    $region10: #{han_forward.10} parent=5 // pred_check_branch
      %336 = sbr.rel (%p333) target = $region12
    $region11: #{han_forward.10} parent=5 // pred_region
      %s337 = ssub.s32 %s17, 1
      // Predicated region
      $region13: #{han_forward.10} parent=11 // pred_check
        %p338 = pneg %p225
      $region14: #{han_forward.10} parent=11 // pred_check_branch
        %340 = sbr.rel (%p338) target = $region16
      $region15: #{han_forward.10} parent=11 // pred_region
        _
      $region16: #{han_forward.10} parent=11 // pred_fallthru
        _
      // Predicated region
      $region17: #{han_forward.10} parent=11 // pred_check
        %p341 = pneg %p246
      $region18: #{han_forward.10} parent=11 // pred_check_branch
        %343 = sbr.rel (%p341) target = $region20
      $region19: #{han_forward.10} parent=11 // pred_region
        _
      $region20: #{han_forward.10} parent=11 // pred_fallthru
        _
      // Predicated region
      $region21: #{han_forward.10} parent=11 // pred_check
        %p344 = pneg %p267
      $region22: #{han_forward.10} parent=11 // pred_check_branch
        %346 = sbr.rel (%p344) target = $region24
      $region23: #{han_forward.10} parent=11 // pred_region
        _
      $region24: #{han_forward.10} parent=11 // pred_fallthru
        _
    $region12: #{han_forward.10} parent=5 // pred_fallthru
      _
    %p347 = scmp.lt.s32.totalorder %s17, 2
    // Predicated region
    $region25: #{han_forward.10} parent=5 // pred_check
      %p348 = pneg %p347
    $region26: #{han_forward.10} parent=5 // pred_check_branch
      %350 = sbr.rel (%p348) target = $region28
    $region27: #{han_forward.10} parent=5 // pred_region
      // Predicated region
      $region29: #{han_forward.10} parent=27 // pred_check
        %p351 = pneg %p58
      $region30: #{han_forward.10} parent=27 // pred_check_branch
        %353 = sbr.rel (%p351) target = $region32
      $region31: #{han_forward.10} parent=27 // pred_region
        %s354 = smul.u32 2, %s24
        %p355 = scmp.lt.s32.totalorder %s25, 1
        %s356 = scalar_select %p355, %s25, 1
        %p357 = scmp.lt.s32.totalorder %s354, 1
        %s358 = scalar_select %p357, %s354, 1
        %s359 = smul.addr %s356, 2
        %s360 = sadd.s32 %s358, %s359
        %s361 = smul.addr %s360, 8
        %s362 = scalar_lea.vmem %s0, %s361
        %s363 = smul.u32 2, %s24
      $region32: #{han_forward.10} parent=27 // pred_fallthru
        _
      // Predicated region
      $region33: #{han_forward.10} parent=27 // pred_check
        %p364 = pneg %p86
      $region34: #{han_forward.10} parent=27 // pred_check_branch
        %366 = sbr.rel (%p364) target = $region36
      $region35: #{han_forward.10} parent=27 // pred_region
        %s367 = smul.u32 2, %s26
        %p368 = scmp.lt.s32.totalorder %s25, 1
        %s369 = scalar_select %p368, %s25, 1
        %p370 = scmp.lt.s32.totalorder %s367, 1
        %s371 = scalar_select %p370, %s367, 1
        %s372 = smul.addr %s369, 2
        %s373 = sadd.s32 %s371, %s372
        %s374 = smul.addr %s373, 8
        %s375 = scalar_lea.vmem %s1, %s374
        %s376 = smul.u32 2, %s26
      $region36: #{han_forward.10} parent=27 // pred_fallthru
        _
      // Predicated region
      $region37: #{han_forward.10} parent=27 // pred_check
        %p377 = pneg %p114
      $region38: #{han_forward.10} parent=27 // pred_check_branch
        %379 = sbr.rel (%p377) target = $region40
      $region39: #{han_forward.10} parent=27 // pred_region
        %p380 = scmp.lt.s32.totalorder %s25, 1
        %s381 = scalar_select %p380, %s25, 1
        %p382 = scmp.lt.s32.totalorder %s26, 0
        %s383 = scalar_select %p382, %s26, 0
        %s384 = sadd.s32 %s383, %s381
        %s385 = smul.addr %s384, 2
        %s386 = scalar_lea.vmem %s2, %s385
      $region40: #{han_forward.10} parent=27 // pred_fallthru
        _
      // Predicated region
      $region41: #{han_forward.10} parent=27 // pred_check
        %p387 = pneg %p142
      $region42: #{han_forward.10} parent=27 // pred_check_branch
        %389 = sbr.rel (%p387) target = $region44
      $region43: #{han_forward.10} parent=27 // pred_region
        %s390 = smul.u32 2, %s24
        %p391 = scmp.lt.s32.totalorder %s25, 1
        %s392 = scalar_select %p391, %s25, 1
        %p393 = scmp.lt.s32.totalorder %s390, 1
        %s394 = scalar_select %p393, %s390, 1
        %s395 = smul.addr %s392, 2
        %s396 = sadd.s32 %s394, %s395
        %s397 = smul.addr %s396, 8
        %s398 = scalar_lea.vmem %s3, %s397
        %s399 = smul.u32 2, %s24
      $region44: #{han_forward.10} parent=27 // pred_fallthru
        _
      // Predicated region
      $region45: #{han_forward.10} parent=27 // pred_check
        %p400 = pneg %p168
      $region46: #{han_forward.10} parent=27 // pred_check_branch
        %402 = sbr.rel (%p400) target = $region48
      $region47: #{han_forward.10} parent=27 // pred_region
        %p403 = scmp.lt.s32.totalorder %s25, 1
        %s404 = scalar_select %p403, %s25, 1
        %s405 = scalar_lea.vmem %s4, %s404
      $region48: #{han_forward.10} parent=27 // pred_fallthru
        _
      // Predicated region
      $region49: #{han_forward.10} parent=27 // pred_check
        %p406 = pneg %p198
      $region50: #{han_forward.10} parent=27 // pred_check_branch
        %408 = sbr.rel (%p406) target = $region52
      $region51: #{han_forward.10} parent=27 // pred_region
        %s409 = smul.u32 2, %s24
        %p410 = scmp.lt.s32.totalorder %s25, 1
        %s411 = scalar_select %p410, %s25, 1
        %p412 = scmp.lt.s32.totalorder %s409, 1
        %s413 = scalar_select %p412, %s409, 1
        %p414 = scmp.lt.s32.totalorder %s26, 0
        %s415 = scalar_select %p414, %s26, 0
        %s416 = sadd.s32 %s415, %s413
        %s417 = smul.addr %s411, 2
        %s418 = sadd.s32 %s416, %s417
        %s419 = smul.addr %s418, 2
        %s420 = scalar_lea.vmem %s5, %s419
        %s421 = smul.u32 2, %s24
      $region52: #{han_forward.10} parent=27 // pred_fallthru
        _
    $region28: #{han_forward.10} parent=5 // pred_fallthru
      _
    %p422 = scmp.le.s32.totalorder 1, %s17
    %p423 = scmp.lt.s32.totalorder %s17, 3
    %p424 = pnand %p422, %p423
    %p425 = pneg %p424
    // Predicated region
    $region53: #{han_forward.10} parent=5 // pred_check
      _
    $region54: #{han_forward.10} parent=5 // pred_check_branch
      %427 = sbr.rel (%p424) target = $region56
    $region55: #{han_forward.10} parent=5 // pred_region
      %s428 = ssub.s32 %s17, 1
      %s429 = smul.u32 2, %s27
      %p430 = scmp.lt.s32.totalorder %s28, 1
      %s431 = scalar_select %p430, %s28, 1
      %p432 = scmp.lt.s32.totalorder %s429, 1
      %s433 = scalar_select %p432, %s429, 1
      %s434 = smul.addr %s431, 2
      %s435 = sadd.s32 %s433, %s434
      %s436 = smul.addr %s435, 8
      %s437 = scalar_lea.vmem %s0, %s436
      %p438 = pneg %p64
      %p439 = pneg %p61
      %s440 = smul.u32 2, %s29
      %p441 = scmp.lt.s32.totalorder %s28, 1
      %s442 = scalar_select %p441, %s28, 1
      %p443 = scmp.lt.s32.totalorder %s440, 1
      %s444 = scalar_select %p443, %s440, 1
      %s445 = smul.addr %s442, 2
      %s446 = sadd.s32 %s444, %s445
      %s447 = smul.addr %s446, 8
      %s448 = scalar_lea.vmem %s1, %s447
      %p449 = pneg %p92
      %p450 = pneg %p89
      %p451 = scmp.lt.s32.totalorder %s28, 1
      %s452 = scalar_select %p451, %s28, 1
      %p453 = scmp.lt.s32.totalorder %s29, 0
      %s454 = scalar_select %p453, %s29, 0
      %s455 = sadd.s32 %s454, %s452
      %s456 = smul.addr %s455, 2
      %s457 = scalar_lea.vmem %s2, %s456
      %p458 = pneg %p120
      %p459 = pneg %p117
      %s460 = smul.u32 2, %s27
      %p461 = scmp.lt.s32.totalorder %s28, 1
      %s462 = scalar_select %p461, %s28, 1
      %p463 = scmp.lt.s32.totalorder %s460, 1
      %s464 = scalar_select %p463, %s460, 1
      %s465 = smul.addr %s462, 2
      %s466 = sadd.s32 %s464, %s465
      %s467 = smul.addr %s466, 8
      %s468 = scalar_lea.vmem %s3, %s467
      %p469 = pneg %p148
      %p470 = pneg %p145
      %p471 = scmp.lt.s32.totalorder %s28, 1
      %s472 = scalar_select %p471, %s28, 1
      %s473 = scalar_lea.vmem %s4, %s472
      %p474 = pneg %p174
      %p475 = pneg %p171
      %s476 = smul.u32 2, %s27
      %p477 = scmp.lt.s32.totalorder %s28, 1
      %s478 = scalar_select %p477, %s28, 1
      %p479 = scmp.lt.s32.totalorder %s476, 1
      %s480 = scalar_select %p479, %s476, 1
      %p481 = scmp.lt.s32.totalorder %s29, 0
      %s482 = scalar_select %p481, %s29, 0
      %s483 = sadd.s32 %s482, %s480
      %s484 = smul.addr %s478, 2
      %s485 = sadd.s32 %s483, %s484
      %s486 = smul.addr %s485, 2
      %s487 = scalar_lea.vmem %s5, %s486
      %p488 = pneg %p204
      %p489 = pneg %p201
      %p490 = pneg %p225
      %p491 = pneg %p222
      %p492 = pneg %p246
      %p493 = pneg %p243
      %p494 = pneg %p267
      %p495 = pneg %p264
      %p496 = pneg %p295
      %p497 = pneg %p292
      %s498 = smul.u32 2, %s27
      %p499 = scmp.lt.s32.totalorder %s28, 1
      %s500 = scalar_select %p499, %s28, 1
      %p501 = scmp.lt.s32.totalorder %s498, 1
      %s502 = scalar_select %p501, %s498, 1
      %s503 = smul.addr %s500, 2
      %s504 = sadd.s32 %s502, %s503
      %s505 = smul.addr %s504, 8
      %s506 = scalar_lea.vmem %s9, %s505
      %p507 = pneg %p323
      %p508 = pneg %p320
      %s509 = smul.u32 2, %s27
      %p510 = scmp.lt.s32.totalorder %s28, 1
      %s511 = scalar_select %p510, %s28, 1
      %p512 = scmp.lt.s32.totalorder %s509, 1
      %s513 = scalar_select %p512, %s509, 1
      %s514 = smul.addr %s511, 2
      %s515 = sadd.s32 %s513, %s514
      %s516 = smul.addr %s515, 8
      %s517 = scalar_lea.vmem %s10, %s516
      %s518 = smul.u32 2, %s27
      %p519 = scmp.lt.s32.totalorder %s28, 1
      %s520 = scalar_select %p519, %s28, 1
      %p521 = scmp.lt.s32.totalorder %s518, 1
      %s522 = scalar_select %p521, %s518, 1
      %s523 = smul.addr %s520, 2
      %s524 = sadd.s32 %s522, %s523
      %s525 = smul.addr %s524, 8
      %s526 = scalar_lea.vmem %s0, %s525
      %s527 = smul.u32 2, %s27
      %s528 = smul.u32 2, %s29
      %p529 = scmp.lt.s32.totalorder %s28, 1
      %s530 = scalar_select %p529, %s28, 1
      %p531 = scmp.lt.s32.totalorder %s528, 1
      %s532 = scalar_select %p531, %s528, 1
      %s533 = smul.addr %s530, 2
      %s534 = sadd.s32 %s532, %s533
      %s535 = smul.addr %s534, 8
      %s536 = scalar_lea.vmem %s1, %s535
      %s537 = smul.u32 2, %s29
      %p538 = scmp.lt.s32.totalorder %s28, 1
      %s539 = scalar_select %p538, %s28, 1
      %p540 = scmp.lt.s32.totalorder %s29, 0
      %s541 = scalar_select %p540, %s29, 0
      %s542 = sadd.s32 %s541, %s539
      %s543 = smul.addr %s542, 2
      %s544 = scalar_lea.vmem %s2, %s543
      %s545 = smul.u32 2, %s27
      %p546 = scmp.lt.s32.totalorder %s28, 1
      %s547 = scalar_select %p546, %s28, 1
      %p548 = scmp.lt.s32.totalorder %s545, 1
      %s549 = scalar_select %p548, %s545, 1
      %s550 = smul.addr %s547, 2
      %s551 = sadd.s32 %s549, %s550
      %s552 = smul.addr %s551, 8
      %s553 = scalar_lea.vmem %s3, %s552
      %s554 = smul.u32 2, %s27
      %p555 = scmp.lt.s32.totalorder %s28, 1
      %s556 = scalar_select %p555, %s28, 1
      %s557 = scalar_lea.vmem %s4, %s556
      %s558 = smul.u32 2, %s27
      %p559 = scmp.lt.s32.totalorder %s28, 1
      %s560 = scalar_select %p559, %s28, 1
      %p561 = scmp.lt.s32.totalorder %s558, 1
      %s562 = scalar_select %p561, %s558, 1
      %p563 = scmp.lt.s32.totalorder %s29, 0
      %s564 = scalar_select %p563, %s29, 0
      %s565 = sadd.s32 %s564, %s562
      %s566 = smul.addr %s560, 2
      %s567 = sadd.s32 %s565, %s566
      %s568 = smul.addr %s567, 2
      %s569 = scalar_lea.vmem %s5, %s568
      %s570 = smul.u32 2, %s27
      %s571 = smul.u32 2, %s27
      %p572 = scmp.lt.s32.totalorder %s28, 1
      %s573 = scalar_select %p572, %s28, 1
      %p574 = scmp.lt.s32.totalorder %s571, 1
      %s575 = scalar_select %p574, %s571, 1
      %s576 = smul.addr %s573, 2
      %s577 = sadd.s32 %s575, %s576
      %s578 = smul.addr %s577, 8
      %s579 = scalar_lea.vmem %s9, %s578
      %s580 = smul.u32 2, %s27
      %s581 = smul.u32 2, %s27
      %p582 = scmp.lt.s32.totalorder %s28, 1
      %s583 = scalar_select %p582, %s28, 1
      %p584 = scmp.lt.s32.totalorder %s581, 1
      %s585 = scalar_select %p584, %s581, 1
      %s586 = smul.addr %s583, 2
      %s587 = sadd.s32 %s585, %s586
      %s588 = smul.addr %s587, 8
      %s589 = scalar_lea.vmem %s10, %s588
      %s590 = smul.u32 2, %s27
      %p593 = scmp.eq.s32.totalorder %s29, 0
      // Predicated region
      $region57: #{han_forward.10} parent=55 // pred_check
        %p594 = pneg %p593
      $region58: #{han_forward.10} parent=55 // pred_check_branch
        %596 = sbr.rel (%p594) target = $region60
      $region59: #{han_forward.10} parent=55 // pred_region
        %vm597 = vcmask 15360
        %598 = vst.msk [vmem:[#allocation2] sm:$0xff] %vm597, -1e+30
        %599 = vst.msk [vmem:[#allocation2 + $0x8] sm:$0xff] %vm597, -1e+30
        %600 = vst.msk [vmem:[#allocation3] sm:$0xff] %vm597, 0.0
        %601 = vst.msk [vmem:[#allocation3 + $0x8] sm:$0xff] %vm597, 0.0
        %vm602 = vcmask 130048
        %603 = vst.msk [vmem:[#allocation4] sm:$0xff] %vm602, 0.0
        %604 = vst.msk [vmem:[#allocation4 + $0x8] sm:$0xff] %vm602, 0.0
      $region60: #{han_forward.10} parent=55 // pred_fallthru
        _
      %v605 = vld [vmem:[%s553] sm:$0xff]
      %v606 = vld [vmem:[%s553 + $0x8] sm:$0xff]
      %v607 = vld [vmem:[%s544] sm:$0x3]
      %v608 = vld [vmem:[%s536] sm:$0xff]
      %v609 = vld [vmem:[%s536 + $0x8] sm:$0xff]
      %v610 = vlaneseq
      %v611 = vshrl.u32 %v610, 7
      %v612 = vsub.s32 0, %v611
      %v613 = vrot.slane %v605, %v612
      %615 = vbcast.lane.b32.xlu0 %v613, 256
      %v616 = vpop.permute.xlu0 %615
      %v617 = vlaneseq
      %v618 = vshrl.u32 %v617, 7
      %v619 = vsub.s32 1, %v618
      %v620 = vrot.slane %v605, %v619
      %622 = vbcast.lane.b32.xlu0 %v620, 256
      %v623 = vpop.permute.xlu0 %622
      %v624 = vlaneseq
      %v625 = vshrl.u32 %v624, 7
      %v626 = vsub.s32 2, %v625
      %v627 = vrot.slane %v605, %v626
      %629 = vbcast.lane.b32.xlu0 %v627, 256
      %v630 = vpop.permute.xlu0 %629
      %v631 = vlaneseq
      %v632 = vshrl.u32 %v631, 7
      %v633 = vsub.s32 3, %v632
      %v634 = vrot.slane %v605, %v633
      %636 = vbcast.lane.b32.xlu0 %v634, 256
      %v637 = vpop.permute.xlu0 %636
      %v638 = vlaneseq
      %v639 = vshrl.u32 %v638, 7
      %v640 = vsub.s32 4, %v639
      %v641 = vrot.slane %v605, %v640
      %643 = vbcast.lane.b32.xlu0 %v641, 256
      %v644 = vpop.permute.xlu0 %643
      %v645 = vlaneseq
      %v646 = vshrl.u32 %v645, 7
      %v647 = vsub.s32 5, %v646
      %v648 = vrot.slane %v605, %v647
      %650 = vbcast.lane.b32.xlu0 %v648, 256
      %v651 = vpop.permute.xlu0 %650
      %v652 = vlaneseq
      %v653 = vshrl.u32 %v652, 7
      %v654 = vsub.s32 6, %v653
      %v655 = vrot.slane %v605, %v654
      %657 = vbcast.lane.b32.xlu0 %v655, 256
      %v658 = vpop.permute.xlu0 %657
      %v659 = vlaneseq
      %v660 = vshrl.u32 %v659, 7
      %v661 = vsub.s32 7, %v660
      %v662 = vrot.slane %v605, %v661
      %664 = vbcast.lane.b32.xlu0 %v662, 256
      %v665 = vpop.permute.xlu0 %664
      %v666 = vlaneseq
      %v667 = vshrl.u32 %v666, 7
      %v668 = vsub.s32 0, %v667
      %v669 = vrot.slane %v606, %v668
      %671 = vbcast.lane.b32.xlu0 %v669, 256
      %v672 = vpop.permute.xlu0 %671
      %v673 = vlaneseq
      %v674 = vshrl.u32 %v673, 7
      %v675 = vsub.s32 1, %v674
      %v676 = vrot.slane %v606, %v675
      %678 = vbcast.lane.b32.xlu0 %v676, 256
      %v679 = vpop.permute.xlu0 %678
      %v680 = vlaneseq
      %v681 = vshrl.u32 %v680, 7
      %v682 = vsub.s32 2, %v681
      %v683 = vrot.slane %v606, %v682
      %685 = vbcast.lane.b32.xlu0 %v683, 256
      %v686 = vpop.permute.xlu0 %685
      %v687 = vlaneseq
      %v688 = vshrl.u32 %v687, 7
      %v689 = vsub.s32 3, %v688
      %v690 = vrot.slane %v606, %v689
      %692 = vbcast.lane.b32.xlu0 %v690, 256
      %v693 = vpop.permute.xlu0 %692
      %v694 = vlaneseq
      %v695 = vshrl.u32 %v694, 7
      %v696 = vsub.s32 4, %v695
      %v697 = vrot.slane %v606, %v696
      %699 = vbcast.lane.b32.xlu0 %v697, 256
      %v700 = vpop.permute.xlu0 %699
      %v701 = vlaneseq
      %v702 = vshrl.u32 %v701, 7
      %v703 = vsub.s32 5, %v702
      %v704 = vrot.slane %v606, %v703
      %706 = vbcast.lane.b32.xlu0 %v704, 256
      %v707 = vpop.permute.xlu0 %706
      %v708 = vlaneseq
      %v709 = vshrl.u32 %v708, 7
      %v710 = vsub.s32 6, %v709
      %v711 = vrot.slane %v606, %v710
      %713 = vbcast.lane.b32.xlu0 %v711, 256
      %v714 = vpop.permute.xlu0 %713
      %v715 = vlaneseq
      %v716 = vshrl.u32 %v715, 7
      %v717 = vsub.s32 7, %v716
      %v718 = vrot.slane %v606, %v717
      %720 = vbcast.lane.b32.xlu0 %v718, 256
      %v721 = vpop.permute.xlu0 %720
      %v722 = vadd.f32 %v616, %v607
      %v723 = vadd.f32 %v623, %v607
      %v724 = vadd.f32 %v630, %v607
      %v725 = vadd.f32 %v637, %v607
      %v726 = vadd.f32 %v644, %v607
      %v727 = vadd.f32 %v651, %v607
      %v728 = vadd.f32 %v658, %v607
      %v729 = vadd.f32 %v665, %v607
      %v730 = vadd.f32 %v672, %v607
      %v731 = vadd.f32 %v679, %v607
      %v732 = vadd.f32 %v686, %v607
      %v733 = vadd.f32 %v693, %v607
      %v734 = vadd.f32 %v700, %v607
      %v735 = vadd.f32 %v707, %v607
      %v736 = vadd.f32 %v714, %v607
      %v737 = vadd.f32 %v721, %v607
      %vm738 = vcmp.gt.f32.partialorder %v722, 0.0
      %vm739 = vcmp.gt.f32.partialorder %v723, 0.0
      %vm740 = vcmp.gt.f32.partialorder %v724, 0.0
      %vm741 = vcmp.gt.f32.partialorder %v725, 0.0
      %vm742 = vcmp.gt.f32.partialorder %v726, 0.0
      %vm743 = vcmp.gt.f32.partialorder %v727, 0.0
      %vm744 = vcmp.gt.f32.partialorder %v728, 0.0
      %vm745 = vcmp.gt.f32.partialorder %v729, 0.0
      %vm746 = vcmp.gt.f32.partialorder %v730, 0.0
      %vm747 = vcmp.gt.f32.partialorder %v731, 0.0
      %vm748 = vcmp.gt.f32.partialorder %v732, 0.0
      %vm749 = vcmp.gt.f32.partialorder %v733, 0.0
      %vm750 = vcmp.gt.f32.partialorder %v734, 0.0
      %vm751 = vcmp.gt.f32.partialorder %v735, 0.0
      %vm752 = vcmp.gt.f32.partialorder %v736, 0.0
      %vm753 = vcmp.gt.f32.partialorder %v737, 0.0
      %v754 = vmul.f32 %v722, 0.2
      %v755 = vmul.f32 %v723, 0.2
      %v756 = vmul.f32 %v724, 0.2
      %v757 = vmul.f32 %v725, 0.2
      %v758 = vmul.f32 %v726, 0.2
      %v759 = vmul.f32 %v727, 0.2
      %v760 = vmul.f32 %v728, 0.2
      %v761 = vmul.f32 %v729, 0.2
      %v762 = vmul.f32 %v730, 0.2
      %v763 = vmul.f32 %v731, 0.2
      %v764 = vmul.f32 %v732, 0.2
      %v765 = vmul.f32 %v733, 0.2
      %v766 = vmul.f32 %v734, 0.2
      %v767 = vmul.f32 %v735, 0.2
      %v768 = vmul.f32 %v736, 0.2
      %v769 = vmul.f32 %v737, 0.2
      %v770 = vsel %vm738, %v722, %v754
      %v771 = vsel %vm739, %v723, %v755
      %v772 = vsel %vm740, %v724, %v756
      %v773 = vsel %vm741, %v725, %v757
      %v774 = vsel %vm742, %v726, %v758
      %v775 = vsel %vm743, %v727, %v759
      %v776 = vsel %vm744, %v728, %v760
      %v777 = vsel %vm745, %v729, %v761
      %v778 = vsel %vm746, %v730, %v762
      %v779 = vsel %vm747, %v731, %v763
      %v780 = vsel %vm748, %v732, %v764
      %v781 = vsel %vm749, %v733, %v765
      %v782 = vsel %vm750, %v734, %v766
      %v783 = vsel %vm751, %v735, %v767
      %v784 = vsel %vm752, %v736, %v768
      %v785 = vsel %vm753, %v737, %v769
      %v786 = vld [vmem:[%s569] sm:$0x3]
      %v787 = vld [vmem:[%s569 + $0x2] sm:$0x3]
      %vm788 = vnez %v786
      %vm789 = vnez %v787
      %v790 = vsel %vm788, 16843009, 0
      %v791 = vsel %vm789, 16843009, 0
      %v792 = vunpack.c.0.s8 %v790
      %v793 = vunpack.c.0.s8 %v791
      %vm794 = vcmp.ne.s32.totalorder %v792, 0
      %vm795 = vcmp.ne.s32.totalorder %v793, 0
      %v796 = vsel %vm794, 1, 0
      %v797 = vsel %vm795, 1, 0
      %v798 = vcvt.s32.f32 %v796
      %v799 = vcvt.s32.f32 %v797
      %v800 = vsub.f32 %v798, 1.0
      %v801 = vsub.f32 %v799, 1.0
      %v802 = vmul.f32 %v800, 1e+30
      %v803 = vmul.f32 %v801, 1e+30
      %v806 = vcombine.high %v802, %v802
      %v808 = vunpack.c.l.s4 1966171168
      %v809 = vunpack.c.0.s8 %v808
      %v810 = vlaneseq
      %v811 = vshrl.u32 %v810, 7
      %v812 = vsub.s32 %v809, %v811
      %v813 = vrot.slane %v802, %v812
      %v815 = vunpack.c.l.s4 1966171168
      %v816 = vunpack.c.0.s8 %v815
      %v817 = vlaneseq
      %v818 = vshrl.u32 %v817, 7
      %v819 = vsub.s32 %v816, %v818
      %v820 = vrot.slane %v806, %v819
      %v821 = vcombine.high %v813, %v813
      %v822 = vcombine.high %v820, %v820
      %v824 = vunpack.c.l.s4 1966171168
      %v825 = vunpack.c.0.s8 %v824
      %v826 = vlaneseq
      %v827 = vshrl.u32 %v826, 7
      %v828 = vsub.s32 %v825, %v827
      %v829 = vrot.slane %v813, %v828
      %v831 = vunpack.c.l.s4 1966171168
      %v832 = vunpack.c.0.s8 %v831
      %v833 = vlaneseq
      %v834 = vshrl.u32 %v833, 7
      %v835 = vsub.s32 %v832, %v834
      %v836 = vrot.slane %v820, %v835
      %v838 = vunpack.c.l.s4 1966171168
      %v839 = vunpack.c.0.s8 %v838
      %v840 = vlaneseq
      %v841 = vshrl.u32 %v840, 7
      %v842 = vsub.s32 %v839, %v841
      %v843 = vrot.slane %v821, %v842
      %v845 = vunpack.c.l.s4 1966171168
      %v846 = vunpack.c.0.s8 %v845
      %v847 = vlaneseq
      %v848 = vshrl.u32 %v847, 7
      %v849 = vsub.s32 %v846, %v848
      %v850 = vrot.slane %v822, %v849
      %v851 = vcombine.high %v829, %v829
      %v852 = vcombine.high %v836, %v836
      %v853 = vcombine.high %v843, %v843
      %v854 = vcombine.high %v850, %v850
      %v855 = vcombine.high %v803, %v803
      %v857 = vunpack.c.l.s4 1966171168
      %v858 = vunpack.c.0.s8 %v857
      %v859 = vlaneseq
      %v860 = vshrl.u32 %v859, 7
      %v861 = vsub.s32 %v858, %v860
      %v862 = vrot.slane %v803, %v861
      %v864 = vunpack.c.l.s4 1966171168
      %v865 = vunpack.c.0.s8 %v864
      %v866 = vlaneseq
      %v867 = vshrl.u32 %v866, 7
      %v868 = vsub.s32 %v865, %v867
      %v869 = vrot.slane %v855, %v868
      %v870 = vcombine.high %v862, %v862
      %v871 = vcombine.high %v869, %v869
      %v873 = vunpack.c.l.s4 1966171168
      %v874 = vunpack.c.0.s8 %v873
      %v875 = vlaneseq
      %v876 = vshrl.u32 %v875, 7
      %v877 = vsub.s32 %v874, %v876
      %v878 = vrot.slane %v862, %v877
      %v880 = vunpack.c.l.s4 1966171168
      %v881 = vunpack.c.0.s8 %v880
      %v882 = vlaneseq
      %v883 = vshrl.u32 %v882, 7
      %v884 = vsub.s32 %v881, %v883
      %v885 = vrot.slane %v869, %v884
      %v887 = vunpack.c.l.s4 1966171168
      %v888 = vunpack.c.0.s8 %v887
      %v889 = vlaneseq
      %v890 = vshrl.u32 %v889, 7
      %v891 = vsub.s32 %v888, %v890
      %v892 = vrot.slane %v870, %v891
      %v894 = vunpack.c.l.s4 1966171168
      %v895 = vunpack.c.0.s8 %v894
      %v896 = vlaneseq
      %v897 = vshrl.u32 %v896, 7
      %v898 = vsub.s32 %v895, %v897
      %v899 = vrot.slane %v871, %v898
      %v900 = vcombine.high %v878, %v878
      %v901 = vcombine.high %v885, %v885
      %v902 = vcombine.high %v892, %v892
      %v903 = vcombine.high %v899, %v899
      %v904 = vlaneseq
      %v905 = vshrl.u32 %v904, 7
      %v906 = vsub.s32 0, %v905
      %v907 = vrot.slane %v829, %v906
      %v908 = vlaneseq
      %v909 = vshrl.u32 %v908, 7
      %v910 = vsub.s32 0, %v909
      %v911 = vrot.slane %v843, %v910
      %v912 = vlaneseq
      %v913 = vshrl.u32 %v912, 7
      %v914 = vsub.s32 0, %v913
      %v915 = vrot.slane %v851, %v914
      %v916 = vlaneseq
      %v917 = vshrl.u32 %v916, 7
      %v918 = vsub.s32 0, %v917
      %v919 = vrot.slane %v853, %v918
      %v920 = vlaneseq
      %v921 = vshrl.u32 %v920, 7
      %v922 = vsub.s32 0, %v921
      %v923 = vrot.slane %v836, %v922
      %v924 = vlaneseq
      %v925 = vshrl.u32 %v924, 7
      %v926 = vsub.s32 0, %v925
      %v927 = vrot.slane %v850, %v926
      %v928 = vlaneseq
      %v929 = vshrl.u32 %v928, 7
      %v930 = vsub.s32 0, %v929
      %v931 = vrot.slane %v852, %v930
      %v932 = vlaneseq
      %v933 = vshrl.u32 %v932, 7
      %v934 = vsub.s32 0, %v933
      %v935 = vrot.slane %v854, %v934
      %v936 = vlaneseq
      %v937 = vshrl.u32 %v936, 7
      %v938 = vsub.s32 0, %v937
      %v939 = vrot.slane %v878, %v938
      %v940 = vlaneseq
      %v941 = vshrl.u32 %v940, 7
      %v942 = vsub.s32 0, %v941
      %v943 = vrot.slane %v892, %v942
      %v944 = vlaneseq
      %v945 = vshrl.u32 %v944, 7
      %v946 = vsub.s32 0, %v945
      %v947 = vrot.slane %v900, %v946
      %v948 = vlaneseq
      %v949 = vshrl.u32 %v948, 7
      %v950 = vsub.s32 0, %v949
      %v951 = vrot.slane %v902, %v950
      %v952 = vlaneseq
      %v953 = vshrl.u32 %v952, 7
      %v954 = vsub.s32 0, %v953
      %v955 = vrot.slane %v885, %v954
      %v956 = vlaneseq
      %v957 = vshrl.u32 %v956, 7
      %v958 = vsub.s32 0, %v957
      %v959 = vrot.slane %v899, %v958
      %v960 = vlaneseq
      %v961 = vshrl.u32 %v960, 7
      %v962 = vsub.s32 0, %v961
      %v963 = vrot.slane %v901, %v962
      %v964 = vlaneseq
      %v965 = vshrl.u32 %v964, 7
      %v966 = vsub.s32 0, %v965
      %v967 = vrot.slane %v903, %v966
      %v984 = vadd.f32 %v770, %v907
      %v985 = vadd.f32 %v771, %v911
      %v986 = vadd.f32 %v772, %v915
      %v987 = vadd.f32 %v773, %v919
      %v988 = vadd.f32 %v774, %v923
      %v989 = vadd.f32 %v775, %v927
      %v990 = vadd.f32 %v776, %v931
      %v991 = vadd.f32 %v777, %v935
      %v992 = vadd.f32 %v778, %v939
      %v993 = vadd.f32 %v779, %v943
      %v994 = vadd.f32 %v780, %v947
      %v995 = vadd.f32 %v781, %v951
      %v996 = vadd.f32 %v782, %v955
      %v997 = vadd.f32 %v783, %v959
      %v998 = vadd.f32 %v784, %v963
      %v999 = vadd.f32 %v785, %v967
      %v1000 = vld [vmem:[#allocation2] sm:$0xff]
      %v1001 = vld [vmem:[#allocation2 + $0x8] sm:$0xff]
      %vm1002 = vcmask 123904
      %v1003 = vsel %vm1002, %v984, -inf
      %1004 = vmax.xlane.f32.xlu0 %v1003
      %v1005 = vpop.xlane.xlu0 %1004
      %v1006 = vsel %vm1002, %v985, -inf
      %1007 = vmax.xlane.f32.xlu0 %v1006
      %v1008 = vpop.xlane.xlu0 %1007
      %v1009 = vsel %vm1002, %v986, -inf
      %1010 = vmax.xlane.f32.xlu0 %v1009
      %v1011 = vpop.xlane.xlu0 %1010
      %v1012 = vsel %vm1002, %v987, -inf
      %1013 = vmax.xlane.f32.xlu0 %v1012
      %v1014 = vpop.xlane.xlu0 %1013
      %v1015 = vsel %vm1002, %v988, -inf
      %1016 = vmax.xlane.f32.xlu0 %v1015
      %v1017 = vpop.xlane.xlu0 %1016
      %v1018 = vsel %vm1002, %v989, -inf
      %1019 = vmax.xlane.f32.xlu0 %v1018
      %v1020 = vpop.xlane.xlu0 %1019
      %v1021 = vsel %vm1002, %v990, -inf
      %1022 = vmax.xlane.f32.xlu0 %v1021
      %v1023 = vpop.xlane.xlu0 %1022
      %v1024 = vsel %vm1002, %v991, -inf
      %1025 = vmax.xlane.f32.xlu0 %v1024
      %v1026 = vpop.xlane.xlu0 %1025
      %v1027 = vsel %vm1002, %v992, -inf
      %1028 = vmax.xlane.f32.xlu0 %v1027
      %v1029 = vpop.xlane.xlu0 %1028
      %v1030 = vsel %vm1002, %v993, -inf
      %1031 = vmax.xlane.f32.xlu0 %v1030
      %v1032 = vpop.xlane.xlu0 %1031
      %v1033 = vsel %vm1002, %v994, -inf
      %1034 = vmax.xlane.f32.xlu0 %v1033
      %v1035 = vpop.xlane.xlu0 %1034
      %v1036 = vsel %vm1002, %v995, -inf
      %1037 = vmax.xlane.f32.xlu0 %v1036
      %v1038 = vpop.xlane.xlu0 %1037
      %v1039 = vsel %vm1002, %v996, -inf
      %1040 = vmax.xlane.f32.xlu0 %v1039
      %v1041 = vpop.xlane.xlu0 %1040
      %v1042 = vsel %vm1002, %v997, -inf
      %1043 = vmax.xlane.f32.xlu0 %v1042
      %v1044 = vpop.xlane.xlu0 %1043
      %v1045 = vsel %vm1002, %v998, -inf
      %1046 = vmax.xlane.f32.xlu0 %v1045
      %v1047 = vpop.xlane.xlu0 %1046
      %v1048 = vsel %vm1002, %v999, -inf
      %1049 = vmax.xlane.f32.xlu0 %v1048
      %v1050 = vpop.xlane.xlu0 %1049
      %v1067 = vlaneseq
      %v1068 = vand.u32 %v1067, 127
      %v1069 = vlaneseq
      %v1070 = vshrl.u32 %v1069, 7
      %v1071 = vsub.s32 %v1068, %v1070
      %v1072 = vrot.slane %v1005, %v1071
      %v1073 = vlaneseq
      %v1074 = vshrl.u32 %v1073, 7
      %v1075 = vsub.s32 %v1068, %v1074
      %v1076 = vrot.slane %v1008, %v1075
      %v1077 = vlaneseq
      %v1078 = vshrl.u32 %v1077, 7
      %v1079 = vsub.s32 %v1068, %v1078
      %v1080 = vrot.slane %v1011, %v1079
      %v1081 = vlaneseq
      %v1082 = vshrl.u32 %v1081, 7
      %v1083 = vsub.s32 %v1068, %v1082
      %v1084 = vrot.slane %v1014, %v1083
      %v1085 = vlaneseq
      %v1086 = vshrl.u32 %v1085, 7
      %v1087 = vsub.s32 %v1068, %v1086
      %v1088 = vrot.slane %v1017, %v1087
      %v1089 = vlaneseq
      %v1090 = vshrl.u32 %v1089, 7
      %v1091 = vsub.s32 %v1068, %v1090
      %v1092 = vrot.slane %v1020, %v1091
      %v1093 = vlaneseq
      %v1094 = vshrl.u32 %v1093, 7
      %v1095 = vsub.s32 %v1068, %v1094
      %v1096 = vrot.slane %v1023, %v1095
      %v1097 = vlaneseq
      %v1098 = vshrl.u32 %v1097, 7
      %v1099 = vsub.s32 %v1068, %v1098
      %v1100 = vrot.slane %v1026, %v1099
      %v1101 = vlaneseq
      %v1102 = vshrl.u32 %v1101, 7
      %v1103 = vsub.s32 %v1068, %v1102
      %v1104 = vrot.slane %v1029, %v1103
      %v1105 = vlaneseq
      %v1106 = vshrl.u32 %v1105, 7
      %v1107 = vsub.s32 %v1068, %v1106
      %v1108 = vrot.slane %v1032, %v1107
      %v1109 = vlaneseq
      %v1110 = vshrl.u32 %v1109, 7
      %v1111 = vsub.s32 %v1068, %v1110
      %v1112 = vrot.slane %v1035, %v1111
      %v1113 = vlaneseq
      %v1114 = vshrl.u32 %v1113, 7
      %v1115 = vsub.s32 %v1068, %v1114
      %v1116 = vrot.slane %v1038, %v1115
      %v1117 = vlaneseq
      %v1118 = vshrl.u32 %v1117, 7
      %v1119 = vsub.s32 %v1068, %v1118
      %v1120 = vrot.slane %v1041, %v1119
      %v1121 = vlaneseq
      %v1122 = vshrl.u32 %v1121, 7
      %v1123 = vsub.s32 %v1068, %v1122
      %v1124 = vrot.slane %v1044, %v1123
      %v1125 = vlaneseq
      %v1126 = vshrl.u32 %v1125, 7
      %v1127 = vsub.s32 %v1068, %v1126
      %v1128 = vrot.slane %v1047, %v1127
      %v1129 = vlaneseq
      %v1130 = vshrl.u32 %v1129, 7
      %v1131 = vsub.s32 %v1068, %v1130
      %v1132 = vrot.slane %v1050, %v1131
      %vm1133 = vcmask 1041409
      %v1134 = vsel %vm1133, %v1076, %v1072
      %vm1135 = vcmask 1042434
      %v1136 = vsel %vm1135, %v1080, %v1134
      %vm1137 = vcmask 1043459
      %v1138 = vsel %vm1137, %v1084, %v1136
      %vm1139 = vcmask 1044484
      %v1140 = vsel %vm1139, %v1088, %v1138
      %vm1141 = vcmask 1045509
      %v1142 = vsel %vm1141, %v1092, %v1140
      %vm1143 = vcmask 1046534
      %v1144 = vsel %vm1143, %v1096, %v1142
      %vm1145 = vcmask 1047559
      %v1146 = vsel %vm1145, %v1100, %v1144
      %v1147 = vsel %vm1133, %v1108, %v1104
      %v1148 = vsel %vm1135, %v1112, %v1147
      %v1149 = vsel %vm1137, %v1116, %v1148
      %v1150 = vsel %vm1139, %v1120, %v1149
      %v1151 = vsel %vm1141, %v1124, %v1150
      %v1152 = vsel %vm1143, %v1128, %v1151
      %v1153 = vsel %vm1145, %v1132, %v1152
      %v1156 = vmax.f32 %v1000, %v1146
      %v1157 = vmax.f32 %v1001, %v1153
      %v1158 = vsub.f32 %v1000, %v1156
      %v1159 = vsub.f32 %v1001, %v1157
      %v1160 = vmul.f32 %v1158, 1.442695
      %v1161 = vpow.pop %v1160
      %v1162 = vmul.f32 %v1159, 1.442695
      %v1163 = vpow.pop %v1162
      %v1164 = vlaneseq
      %v1165 = vshrl.u32 %v1164, 7
      %v1166 = vsub.s32 0, %v1165
      %v1167 = vrot.slane %v1156, %v1166
      %1169 = vbcast.lane.b32.xlu0 %v1167, 256
      %v1170 = vpop.permute.xlu0 %1169
      %v1171 = vlaneseq
      %v1172 = vshrl.u32 %v1171, 7
      %v1173 = vsub.s32 1, %v1172
      %v1174 = vrot.slane %v1156, %v1173
      %1176 = vbcast.lane.b32.xlu0 %v1174, 256
      %v1177 = vpop.permute.xlu0 %1176
      %v1178 = vlaneseq
      %v1179 = vshrl.u32 %v1178, 7
      %v1180 = vsub.s32 2, %v1179
      %v1181 = vrot.slane %v1156, %v1180
      %1183 = vbcast.lane.b32.xlu0 %v1181, 256
      %v1184 = vpop.permute.xlu0 %1183
      %v1185 = vlaneseq
      %v1186 = vshrl.u32 %v1185, 7
      %v1187 = vsub.s32 3, %v1186
      %v1188 = vrot.slane %v1156, %v1187
      %1190 = vbcast.lane.b32.xlu0 %v1188, 256
      %v1191 = vpop.permute.xlu0 %1190
      %v1192 = vlaneseq
      %v1193 = vshrl.u32 %v1192, 7
      %v1194 = vsub.s32 4, %v1193
      %v1195 = vrot.slane %v1156, %v1194
      %1197 = vbcast.lane.b32.xlu0 %v1195, 256
      %v1198 = vpop.permute.xlu0 %1197
      %v1199 = vlaneseq
      %v1200 = vshrl.u32 %v1199, 7
      %v1201 = vsub.s32 5, %v1200
      %v1202 = vrot.slane %v1156, %v1201
      %1204 = vbcast.lane.b32.xlu0 %v1202, 256
      %v1205 = vpop.permute.xlu0 %1204
      %v1206 = vlaneseq
      %v1207 = vshrl.u32 %v1206, 7
      %v1208 = vsub.s32 6, %v1207
      %v1209 = vrot.slane %v1156, %v1208
      %1211 = vbcast.lane.b32.xlu0 %v1209, 256
      %v1212 = vpop.permute.xlu0 %1211
      %v1213 = vlaneseq
      %v1214 = vshrl.u32 %v1213, 7
      %v1215 = vsub.s32 7, %v1214
      %v1216 = vrot.slane %v1156, %v1215
      %1218 = vbcast.lane.b32.xlu0 %v1216, 256
      %v1219 = vpop.permute.xlu0 %1218
      %v1220 = vlaneseq
      %v1221 = vshrl.u32 %v1220, 7
      %v1222 = vsub.s32 0, %v1221
      %v1223 = vrot.slane %v1157, %v1222
      %1225 = vbcast.lane.b32.xlu0 %v1223, 256
      %v1226 = vpop.permute.xlu0 %1225
      %v1227 = vlaneseq
      %v1228 = vshrl.u32 %v1227, 7
      %v1229 = vsub.s32 1, %v1228
      %v1230 = vrot.slane %v1157, %v1229
      %1232 = vbcast.lane.b32.xlu0 %v1230, 256
      %v1233 = vpop.permute.xlu0 %1232
      %v1234 = vlaneseq
      %v1235 = vshrl.u32 %v1234, 7
      %v1236 = vsub.s32 2, %v1235
      %v1237 = vrot.slane %v1157, %v1236
      %1239 = vbcast.lane.b32.xlu0 %v1237, 256
      %v1240 = vpop.permute.xlu0 %1239
      %v1241 = vlaneseq
      %v1242 = vshrl.u32 %v1241, 7
      %v1243 = vsub.s32 3, %v1242
      %v1244 = vrot.slane %v1157, %v1243
      %1246 = vbcast.lane.b32.xlu0 %v1244, 256
      %v1247 = vpop.permute.xlu0 %1246
      %v1248 = vlaneseq
      %v1249 = vshrl.u32 %v1248, 7
      %v1250 = vsub.s32 4, %v1249
      %v1251 = vrot.slane %v1157, %v1250
      %1253 = vbcast.lane.b32.xlu0 %v1251, 256
      %v1254 = vpop.permute.xlu0 %1253
      %v1255 = vlaneseq
      %v1256 = vshrl.u32 %v1255, 7
      %v1257 = vsub.s32 5, %v1256
      %v1258 = vrot.slane %v1157, %v1257
      %1260 = vbcast.lane.b32.xlu0 %v1258, 256
      %v1261 = vpop.permute.xlu0 %1260
      %v1262 = vlaneseq
      %v1263 = vshrl.u32 %v1262, 7
      %v1264 = vsub.s32 6, %v1263
      %v1265 = vrot.slane %v1157, %v1264
      %1267 = vbcast.lane.b32.xlu0 %v1265, 256
      %v1268 = vpop.permute.xlu0 %1267
      %v1269 = vlaneseq
      %v1270 = vshrl.u32 %v1269, 7
      %v1271 = vsub.s32 7, %v1270
      %v1272 = vrot.slane %v1157, %v1271
      %1274 = vbcast.lane.b32.xlu0 %v1272, 256
      %v1275 = vpop.permute.xlu0 %1274
      %v1276 = vsub.f32 %v984, %v1170
      %v1277 = vsub.f32 %v985, %v1177
      %v1278 = vsub.f32 %v986, %v1184
      %v1279 = vsub.f32 %v987, %v1191
      %v1280 = vsub.f32 %v988, %v1198
      %v1281 = vsub.f32 %v989, %v1205
      %v1282 = vsub.f32 %v990, %v1212
      %v1283 = vsub.f32 %v991, %v1219
      %v1284 = vsub.f32 %v992, %v1226
      %v1285 = vsub.f32 %v993, %v1233
      %v1286 = vsub.f32 %v994, %v1240
      %v1287 = vsub.f32 %v995, %v1247
      %v1288 = vsub.f32 %v996, %v1254
      %v1289 = vsub.f32 %v997, %v1261
      %v1290 = vsub.f32 %v998, %v1268
      %v1291 = vsub.f32 %v999, %v1275
      %v1292 = vmul.f32 %v1276, 1.442695
      %v1293 = vpow.pop %v1292
      %v1294 = vmul.f32 %v1277, 1.442695
      %v1295 = vpow.pop %v1294
      %v1296 = vmul.f32 %v1278, 1.442695
      %v1297 = vpow.pop %v1296
      %v1298 = vmul.f32 %v1279, 1.442695
      %v1299 = vpow.pop %v1298
      %v1300 = vmul.f32 %v1280, 1.442695
      %v1301 = vpow.pop %v1300
      %v1302 = vmul.f32 %v1281, 1.442695
      %v1303 = vpow.pop %v1302
      %v1304 = vmul.f32 %v1282, 1.442695
      %v1305 = vpow.pop %v1304
      %v1306 = vmul.f32 %v1283, 1.442695
      %v1307 = vpow.pop %v1306
      %v1308 = vmul.f32 %v1284, 1.442695
      %v1309 = vpow.pop %v1308
      %v1310 = vmul.f32 %v1285, 1.442695
      %v1311 = vpow.pop %v1310
      %v1312 = vmul.f32 %v1286, 1.442695
      %v1313 = vpow.pop %v1312
      %v1314 = vmul.f32 %v1287, 1.442695
      %v1315 = vpow.pop %v1314
      %v1316 = vmul.f32 %v1288, 1.442695
      %v1317 = vpow.pop %v1316
      %v1318 = vmul.f32 %v1289, 1.442695
      %v1319 = vpow.pop %v1318
      %v1320 = vmul.f32 %v1290, 1.442695
      %v1321 = vpow.pop %v1320
      %v1322 = vmul.f32 %v1291, 1.442695
      %v1323 = vpow.pop %v1322
      %v1326 = vcombine.high %v798, %v798
      %v1328 = vunpack.c.l.s4 1966171168
      %v1329 = vunpack.c.0.s8 %v1328
      %v1330 = vlaneseq
      %v1331 = vshrl.u32 %v1330, 7
      %v1332 = vsub.s32 %v1329, %v1331
      %v1333 = vrot.slane %v798, %v1332
      %v1335 = vunpack.c.l.s4 1966171168
      %v1336 = vunpack.c.0.s8 %v1335
      %v1337 = vlaneseq
      %v1338 = vshrl.u32 %v1337, 7
      %v1339 = vsub.s32 %v1336, %v1338
      %v1340 = vrot.slane %v1326, %v1339
      %v1341 = vcombine.high %v1333, %v1333
      %v1342 = vcombine.high %v1340, %v1340
      %v1344 = vunpack.c.l.s4 1966171168
      %v1345 = vunpack.c.0.s8 %v1344
      %v1346 = vlaneseq
      %v1347 = vshrl.u32 %v1346, 7
      %v1348 = vsub.s32 %v1345, %v1347
      %v1349 = vrot.slane %v1333, %v1348
      %v1351 = vunpack.c.l.s4 1966171168
      %v1352 = vunpack.c.0.s8 %v1351
      %v1353 = vlaneseq
      %v1354 = vshrl.u32 %v1353, 7
      %v1355 = vsub.s32 %v1352, %v1354
      %v1356 = vrot.slane %v1340, %v1355
      %v1358 = vunpack.c.l.s4 1966171168
      %v1359 = vunpack.c.0.s8 %v1358
      %v1360 = vlaneseq
      %v1361 = vshrl.u32 %v1360, 7
      %v1362 = vsub.s32 %v1359, %v1361
      %v1363 = vrot.slane %v1341, %v1362
      %v1365 = vunpack.c.l.s4 1966171168
      %v1366 = vunpack.c.0.s8 %v1365
      %v1367 = vlaneseq
      %v1368 = vshrl.u32 %v1367, 7
      %v1369 = vsub.s32 %v1366, %v1368
      %v1370 = vrot.slane %v1342, %v1369
      %v1371 = vcombine.high %v1349, %v1349
      %v1372 = vcombine.high %v1356, %v1356
      %v1373 = vcombine.high %v1363, %v1363
      %v1374 = vcombine.high %v1370, %v1370
      %v1375 = vcombine.high %v799, %v799
      %v1377 = vunpack.c.l.s4 1966171168
      %v1378 = vunpack.c.0.s8 %v1377
      %v1379 = vlaneseq
      %v1380 = vshrl.u32 %v1379, 7
      %v1381 = vsub.s32 %v1378, %v1380
      %v1382 = vrot.slane %v799, %v1381
      %v1384 = vunpack.c.l.s4 1966171168
      %v1385 = vunpack.c.0.s8 %v1384
      %v1386 = vlaneseq
      %v1387 = vshrl.u32 %v1386, 7
      %v1388 = vsub.s32 %v1385, %v1387
      %v1389 = vrot.slane %v1375, %v1388
      %v1390 = vcombine.high %v1382, %v1382
      %v1391 = vcombine.high %v1389, %v1389
      %v1393 = vunpack.c.l.s4 1966171168
      %v1394 = vunpack.c.0.s8 %v1393
      %v1395 = vlaneseq
      %v1396 = vshrl.u32 %v1395, 7
      %v1397 = vsub.s32 %v1394, %v1396
      %v1398 = vrot.slane %v1382, %v1397
      %v1400 = vunpack.c.l.s4 1966171168
      %v1401 = vunpack.c.0.s8 %v1400
      %v1402 = vlaneseq
      %v1403 = vshrl.u32 %v1402, 7
      %v1404 = vsub.s32 %v1401, %v1403
      %v1405 = vrot.slane %v1389, %v1404
      %v1407 = vunpack.c.l.s4 1966171168
      %v1408 = vunpack.c.0.s8 %v1407
      %v1409 = vlaneseq
      %v1410 = vshrl.u32 %v1409, 7
      %v1411 = vsub.s32 %v1408, %v1410
      %v1412 = vrot.slane %v1390, %v1411
      %v1414 = vunpack.c.l.s4 1966171168
      %v1415 = vunpack.c.0.s8 %v1414
      %v1416 = vlaneseq
      %v1417 = vshrl.u32 %v1416, 7
      %v1418 = vsub.s32 %v1415, %v1417
      %v1419 = vrot.slane %v1391, %v1418
      %v1420 = vcombine.high %v1398, %v1398
      %v1421 = vcombine.high %v1405, %v1405
      %v1422 = vcombine.high %v1412, %v1412
      %v1423 = vcombine.high %v1419, %v1419
      %v1424 = vlaneseq
      %v1425 = vshrl.u32 %v1424, 7
      %v1426 = vsub.s32 0, %v1425
      %v1427 = vrot.slane %v1349, %v1426
      %v1428 = vlaneseq
      %v1429 = vshrl.u32 %v1428, 7
      %v1430 = vsub.s32 0, %v1429
      %v1431 = vrot.slane %v1363, %v1430
      %v1432 = vlaneseq
      %v1433 = vshrl.u32 %v1432, 7
      %v1434 = vsub.s32 0, %v1433
      %v1435 = vrot.slane %v1371, %v1434
      %v1436 = vlaneseq
      %v1437 = vshrl.u32 %v1436, 7
      %v1438 = vsub.s32 0, %v1437
      %v1439 = vrot.slane %v1373, %v1438
      %v1440 = vlaneseq
      %v1441 = vshrl.u32 %v1440, 7
      %v1442 = vsub.s32 0, %v1441
      %v1443 = vrot.slane %v1356, %v1442
      %v1444 = vlaneseq
      %v1445 = vshrl.u32 %v1444, 7
      %v1446 = vsub.s32 0, %v1445
      %v1447 = vrot.slane %v1370, %v1446
      %v1448 = vlaneseq
      %v1449 = vshrl.u32 %v1448, 7
      %v1450 = vsub.s32 0, %v1449
      %v1451 = vrot.slane %v1372, %v1450
      %v1452 = vlaneseq
      %v1453 = vshrl.u32 %v1452, 7
      %v1454 = vsub.s32 0, %v1453
      %v1455 = vrot.slane %v1374, %v1454
      %v1456 = vlaneseq
      %v1457 = vshrl.u32 %v1456, 7
      %v1458 = vsub.s32 0, %v1457
      %v1459 = vrot.slane %v1398, %v1458
      %v1460 = vlaneseq
      %v1461 = vshrl.u32 %v1460, 7
      %v1462 = vsub.s32 0, %v1461
      %v1463 = vrot.slane %v1412, %v1462
      %v1464 = vlaneseq
      %v1465 = vshrl.u32 %v1464, 7
      %v1466 = vsub.s32 0, %v1465
      %v1467 = vrot.slane %v1420, %v1466
      %v1468 = vlaneseq
      %v1469 = vshrl.u32 %v1468, 7
      %v1470 = vsub.s32 0, %v1469
      %v1471 = vrot.slane %v1422, %v1470
      %v1472 = vlaneseq
      %v1473 = vshrl.u32 %v1472, 7
      %v1474 = vsub.s32 0, %v1473
      %v1475 = vrot.slane %v1405, %v1474
      %v1476 = vlaneseq
      %v1477 = vshrl.u32 %v1476, 7
      %v1478 = vsub.s32 0, %v1477
      %v1479 = vrot.slane %v1419, %v1478
      %v1480 = vlaneseq
      %v1481 = vshrl.u32 %v1480, 7
      %v1482 = vsub.s32 0, %v1481
      %v1483 = vrot.slane %v1421, %v1482
      %v1484 = vlaneseq
      %v1485 = vshrl.u32 %v1484, 7
      %v1486 = vsub.s32 0, %v1485
      %v1487 = vrot.slane %v1423, %v1486
      %v1504 = vmul.f32 %v1293, %v1427
      %v1505 = vmul.f32 %v1295, %v1431
      %v1506 = vmul.f32 %v1297, %v1435
      %v1507 = vmul.f32 %v1299, %v1439
      %v1508 = vmul.f32 %v1301, %v1443
      %v1509 = vmul.f32 %v1303, %v1447
      %v1510 = vmul.f32 %v1305, %v1451
      %v1511 = vmul.f32 %v1307, %v1455
      %v1512 = vmul.f32 %v1309, %v1459
      %v1513 = vmul.f32 %v1311, %v1463
      %v1514 = vmul.f32 %v1313, %v1467
      %v1515 = vmul.f32 %v1315, %v1471
      %v1516 = vmul.f32 %v1317, %v1475
      %v1517 = vmul.f32 %v1319, %v1479
      %v1518 = vmul.f32 %v1321, %v1483
      %v1519 = vmul.f32 %v1323, %v1487
      %v1520 = vld [vmem:[#allocation3] sm:$0xff]
      %v1521 = vld [vmem:[#allocation3 + $0x8] sm:$0xff]
      %v1522 = vmul.f32 %v1161, %v1520
      %v1523 = vmul.f32 %v1163, %v1521
      %v1524 = vsel %vm1002, %v1504, 0.0
      %1525 = vadd.xlane.f32.xlu0 %v1524
      %v1526 = vpop.xlane.xlu0 %1525
      %v1527 = vsel %vm1002, %v1505, 0.0
      %1528 = vadd.xlane.f32.xlu0 %v1527
      %v1529 = vpop.xlane.xlu0 %1528
      %v1530 = vsel %vm1002, %v1506, 0.0
      %1531 = vadd.xlane.f32.xlu0 %v1530
      %v1532 = vpop.xlane.xlu0 %1531
      %v1533 = vsel %vm1002, %v1507, 0.0
      %1534 = vadd.xlane.f32.xlu0 %v1533
      %v1535 = vpop.xlane.xlu0 %1534
      %v1536 = vsel %vm1002, %v1508, 0.0
      %1537 = vadd.xlane.f32.xlu0 %v1536
      %v1538 = vpop.xlane.xlu0 %1537
      %v1539 = vsel %vm1002, %v1509, 0.0
      %1540 = vadd.xlane.f32.xlu0 %v1539
      %v1541 = vpop.xlane.xlu0 %1540
      %v1542 = vsel %vm1002, %v1510, 0.0
      %1543 = vadd.xlane.f32.xlu0 %v1542
      %v1544 = vpop.xlane.xlu0 %1543
      %v1545 = vsel %vm1002, %v1511, 0.0
      %1546 = vadd.xlane.f32.xlu0 %v1545
      %v1547 = vpop.xlane.xlu0 %1546
      %v1548 = vsel %vm1002, %v1512, 0.0
      %1549 = vadd.xlane.f32.xlu0 %v1548
      %v1550 = vpop.xlane.xlu0 %1549
      %v1551 = vsel %vm1002, %v1513, 0.0
      %1552 = vadd.xlane.f32.xlu0 %v1551
      %v1553 = vpop.xlane.xlu0 %1552
      %v1554 = vsel %vm1002, %v1514, 0.0
      %1555 = vadd.xlane.f32.xlu0 %v1554
      %v1556 = vpop.xlane.xlu0 %1555
      %v1557 = vsel %vm1002, %v1515, 0.0
      %1558 = vadd.xlane.f32.xlu0 %v1557
      %v1559 = vpop.xlane.xlu0 %1558
      %v1560 = vsel %vm1002, %v1516, 0.0
      %1561 = vadd.xlane.f32.xlu0 %v1560
      %v1562 = vpop.xlane.xlu0 %1561
      %v1563 = vsel %vm1002, %v1517, 0.0
      %1564 = vadd.xlane.f32.xlu0 %v1563
      %v1565 = vpop.xlane.xlu0 %1564
      %v1566 = vsel %vm1002, %v1518, 0.0
      %1567 = vadd.xlane.f32.xlu0 %v1566
      %v1568 = vpop.xlane.xlu0 %1567
      %v1569 = vsel %vm1002, %v1519, 0.0
      %1570 = vadd.xlane.f32.xlu0 %v1569
      %v1571 = vpop.xlane.xlu0 %1570
      %v1588 = vlaneseq
      %v1589 = vshrl.u32 %v1588, 7
      %v1590 = vsub.s32 %v1068, %v1589
      %v1591 = vrot.slane %v1526, %v1590
      %v1592 = vlaneseq
      %v1593 = vshrl.u32 %v1592, 7
      %v1594 = vsub.s32 %v1068, %v1593
      %v1595 = vrot.slane %v1529, %v1594
      %v1596 = vlaneseq
      %v1597 = vshrl.u32 %v1596, 7
      %v1598 = vsub.s32 %v1068, %v1597
      %v1599 = vrot.slane %v1532, %v1598
      %v1600 = vlaneseq
      %v1601 = vshrl.u32 %v1600, 7
      %v1602 = vsub.s32 %v1068, %v1601
      %v1603 = vrot.slane %v1535, %v1602
      %v1604 = vlaneseq
      %v1605 = vshrl.u32 %v1604, 7
      %v1606 = vsub.s32 %v1068, %v1605
      %v1607 = vrot.slane %v1538, %v1606
      %v1608 = vlaneseq
      %v1609 = vshrl.u32 %v1608, 7
      %v1610 = vsub.s32 %v1068, %v1609
      %v1611 = vrot.slane %v1541, %v1610
      %v1612 = vlaneseq
      %v1613 = vshrl.u32 %v1612, 7
      %v1614 = vsub.s32 %v1068, %v1613
      %v1615 = vrot.slane %v1544, %v1614
      %v1616 = vlaneseq
      %v1617 = vshrl.u32 %v1616, 7
      %v1618 = vsub.s32 %v1068, %v1617
      %v1619 = vrot.slane %v1547, %v1618
      %v1620 = vlaneseq
      %v1621 = vshrl.u32 %v1620, 7
      %v1622 = vsub.s32 %v1068, %v1621
      %v1623 = vrot.slane %v1550, %v1622
      %v1624 = vlaneseq
      %v1625 = vshrl.u32 %v1624, 7
      %v1626 = vsub.s32 %v1068, %v1625
      %v1627 = vrot.slane %v1553, %v1626
      %v1628 = vlaneseq
      %v1629 = vshrl.u32 %v1628, 7
      %v1630 = vsub.s32 %v1068, %v1629
      %v1631 = vrot.slane %v1556, %v1630
      %v1632 = vlaneseq
      %v1633 = vshrl.u32 %v1632, 7
      %v1634 = vsub.s32 %v1068, %v1633
      %v1635 = vrot.slane %v1559, %v1634
      %v1636 = vlaneseq
      %v1637 = vshrl.u32 %v1636, 7
      %v1638 = vsub.s32 %v1068, %v1637
      %v1639 = vrot.slane %v1562, %v1638
      %v1640 = vlaneseq
      %v1641 = vshrl.u32 %v1640, 7
      %v1642 = vsub.s32 %v1068, %v1641
      %v1643 = vrot.slane %v1565, %v1642
      %v1644 = vlaneseq
      %v1645 = vshrl.u32 %v1644, 7
      %v1646 = vsub.s32 %v1068, %v1645
      %v1647 = vrot.slane %v1568, %v1646
      %v1648 = vlaneseq
      %v1649 = vshrl.u32 %v1648, 7
      %v1650 = vsub.s32 %v1068, %v1649
      %v1651 = vrot.slane %v1571, %v1650
      %v1652 = vsel %vm1133, %v1595, %v1591
      %v1653 = vsel %vm1135, %v1599, %v1652
      %v1654 = vsel %vm1137, %v1603, %v1653
      %v1655 = vsel %vm1139, %v1607, %v1654
      %v1656 = vsel %vm1141, %v1611, %v1655
      %v1657 = vsel %vm1143, %v1615, %v1656
      %v1658 = vsel %vm1145, %v1619, %v1657
      %v1659 = vsel %vm1133, %v1627, %v1623
      %v1660 = vsel %vm1135, %v1631, %v1659
      %v1661 = vsel %vm1137, %v1635, %v1660
      %v1662 = vsel %vm1139, %v1639, %v1661
      %v1663 = vsel %vm1141, %v1643, %v1662
      %v1664 = vsel %vm1143, %v1647, %v1663
      %v1665 = vsel %vm1145, %v1651, %v1664
      %v1668 = vadd.f32 %v1522, %v1658
      %v1669 = vadd.f32 %v1523, %v1665
      %vm1670 = vcmask 15360
      %1671 = vst.msk [vmem:[#allocation3] sm:$0xff] %vm1670, %v1668
      %1672 = vst.msk [vmem:[#allocation3 + $0x8] sm:$0xff] %vm1670, %v1669
      %1673 = vst.msk [vmem:[#allocation2] sm:$0xff] %vm1670, %v1156
      %1674 = vst.msk [vmem:[#allocation2 + $0x8] sm:$0xff] %vm1670, %v1157
      %v1675 = vld [vmem:[#allocation4] sm:$0xff]
      %v1676 = vld [vmem:[#allocation4 + $0x8] sm:$0xff]
      %v1693 = vrot.slane %v1505, 7
      %v1694 = vsel %vm1133, %v1693, %v1504
      %v1695 = vrot.slane %v1506, 6
      %v1696 = vsel %vm1135, %v1695, %v1694
      %v1697 = vrot.slane %v1507, 5
      %v1698 = vsel %vm1137, %v1697, %v1696
      %v1699 = vrot.slane %v1508, 4
      %v1700 = vsel %vm1139, %v1699, %v1698
      %v1701 = vrot.slane %v1509, 3
      %v1702 = vsel %vm1141, %v1701, %v1700
      %v1703 = vrot.slane %v1510, 2
      %v1704 = vsel %vm1143, %v1703, %v1702
      %v1705 = vrot.slane %v1511, 1
      %v1706 = vsel %vm1145, %v1705, %v1704
      %v1707 = vrot.slane %v1513, 7
      %v1708 = vsel %vm1133, %v1707, %v1512
      %v1709 = vrot.slane %v1514, 6
      %v1710 = vsel %vm1135, %v1709, %v1708
      %v1711 = vrot.slane %v1515, 5
      %v1712 = vsel %vm1137, %v1711, %v1710
      %v1713 = vrot.slane %v1516, 4
      %v1714 = vsel %vm1139, %v1713, %v1712
      %v1715 = vrot.slane %v1517, 3
      %v1716 = vsel %vm1141, %v1715, %v1714
      %v1717 = vrot.slane %v1518, 2
      %v1718 = vsel %vm1143, %v1717, %v1716
      %v1719 = vrot.slane %v1519, 1
      %v1720 = vsel %vm1145, %v1719, %v1718
      %vm1721 = vcmask 130048
      %v1722 = vsel %vm1721, %v1706, 0
      %v1724 = vsel %vm1721, %v1720, 0
      %1726 = vmatprep.subr.mxu0 0.0
      %1727 = vmatpush1.msra.mxu0 %v608
      %1728 = vmatprep.subr.mxu0 0.0
      %1729 = vmatpush1.msra.mxu0 %v609
      %1730 = vmatprep.subr.mxu0 0.0
      %1731 = vmatpush1.msra.mxu0 0.0
      %1732 = vmatprep.subr.mxu0 0.0
      %1733 = vmatpush1.msra.mxu0 0.0
      %1734 = vmatprep.subr.mxu0 0.0
      %1735 = vmatpush1.msra.mxu0 0.0
      %1736 = vmatprep.subr.mxu0 0.0
      %1737 = vmatpush1.msra.mxu0 0.0
      %1738 = vmatprep.subr.mxu0 0.0
      %1739 = vmatpush1.msra.mxu0 0.0
      %1740 = vmatprep.subr.mxu0 0.0
      %1741 = vmatpush1.msra.mxu0 0.0
      %1742 = vmatprep.subr.mxu0 0.0
      %1743 = vmatpush1.msra.mxu0 0.0
      %1744 = vmatprep.subr.mxu0 0.0
      %1745 = vmatpush1.msra.mxu0 0.0
      %1746 = vmatprep.subr.mxu0 0.0
      %1747 = vmatpush1.msra.mxu0 0.0
      %1748 = vmatprep.subr.mxu0 0.0
      %1749 = vmatpush1.msra.mxu0 0.0
      %1750 = vmatprep.subr.mxu0 0.0
      %1751 = vmatpush1.msra.mxu0 0.0
      %1752 = vmatprep.subr.mxu0 0.0
      %1753 = vmatpush1.msra.mxu0 0.0
      %1754 = vmatprep.subr.mxu0 0.0
      %1755 = vmatpush1.msra.mxu0 0.0
      %1756 = vmatprep.subr.mxu0 0.0
      %1757 = vmatpush1.msra.mxu0 0.0
      %1758 = vmatprep.subr.mxu0 0.0
      %1759 = vmatpush1.msra.mxu0 0.0
      %1760 = vmatprep.subr.mxu0 0.0
      %1761 = vmatpush1.msra.mxu0 0.0
      %1762 = vmatprep.subr.mxu0 0.0
      %1763 = vmatpush1.msra.mxu0 0.0
      %1764 = vmatprep.subr.mxu0 0.0
      %1765 = vmatpush1.msra.mxu0 0.0
      %1766 = vmatprep.subr.mxu0 0.0
      %1767 = vmatpush1.msra.mxu0 0.0
      %1768 = vmatprep.subr.mxu0 0.0
      %1769 = vmatpush1.msra.mxu0 0.0
      %1770 = vmatprep.subr.mxu0 0.0
      %1771 = vmatpush1.msra.mxu0 0.0
      %1772 = vmatprep.subr.mxu0 0.0
      %1773 = vmatpush1.msra.mxu0 0.0
      %1774 = vmatprep.subr.mxu0 0.0
      %1775 = vmatpush1.msra.mxu0 0.0
      %1776 = vmatprep.subr.mxu0 0.0
      %1777 = vmatpush1.msra.mxu0 0.0
      %1778 = vmatprep.subr.mxu0 0.0
      %1779 = vmatpush1.msra.mxu0 0.0
      %1780 = vmatprep.subr.mxu0 0.0
      %1781 = vmatpush1.msra.mxu0 0.0
      %1782 = vmatprep.subr.mxu0 0.0
      %1783 = vmatpush1.msra.mxu0 0.0
      %1784 = vmatprep.subr.mxu0 0.0
      %1785 = vmatpush1.msra.mxu0 0.0
      %1786 = vmatprep.subr.mxu0 0.0
      %1787 = vmatpush1.msra.mxu0 0.0
      %1788 = vmatprep.subr.mxu0 0.0
      %1789 = vmatpush1.msra.mxu0 0.0
      %1790 = vmatprep.mubr.f32.mxu0 0.0
      %1791 = vmatmul.mubr.f32.gmra.mrb[0].mxu0 %v1722
      %v1792 = vpop.f32.mrb[0].mxu0
      %v1793 = vadd.f32 0.0, %v1792
      %v1794 = vpop.f32.mrb[0].mxu0
      %1795 = vmatprep.mubr.f32.mxu0 0.0
      %1796 = vmatmul.mubr.f32.gmra.mrb[0].mxu0 %v1724
      %v1797 = vpop.f32.mrb[0].mxu0
      %v1798 = vadd.f32 0.0, %v1797
      %v1799 = vpop.f32.mrb[0].mxu0
      %1800 = vdwg.mxu0
      %1802 = vset.pattern.permute.xlu0 0
      %1803 = vperm.xlu0 %1802, %v1161
      %v1804 = vpop.permute.xlu0 %1803
      %1807 = vset.pattern.permute.xlu0 0
      %1808 = vperm.xlu0 %1807, %v1163
      %v1809 = vpop.permute.xlu0 %1808
      %v1811 = vmul.f32 %v1804, %v1675
      %v1812 = vmul.f32 %v1809, %v1676
      %v1813 = vadd.f32 %v1811, %v1793
      %v1814 = vadd.f32 %v1812, %v1798
      %v1815 = vrot.slane %v1504, 1
      %v1816 = vsel %vm1133, %v1505, %v1815
      %v1817 = vrot.slane %v1506, 7
      %v1818 = vsel %vm1135, %v1817, %v1816
      %v1819 = vrot.slane %v1507, 6
      %v1820 = vsel %vm1137, %v1819, %v1818
      %v1821 = vrot.slane %v1508, 5
      %v1822 = vsel %vm1139, %v1821, %v1820
      %v1823 = vrot.slane %v1509, 4
      %v1824 = vsel %vm1141, %v1823, %v1822
      %v1825 = vrot.slane %v1510, 3
      %v1826 = vsel %vm1143, %v1825, %v1824
      %v1827 = vrot.slane %v1511, 2
      %v1828 = vsel %vm1145, %v1827, %v1826
      %v1829 = vrot.slane %v1512, 1
      %v1830 = vsel %vm1133, %v1513, %v1829
      %v1831 = vrot.slane %v1514, 7
      %v1832 = vsel %vm1135, %v1831, %v1830
      %v1833 = vrot.slane %v1515, 6
      %v1834 = vsel %vm1137, %v1833, %v1832
      %v1835 = vrot.slane %v1516, 5
      %v1836 = vsel %vm1139, %v1835, %v1834
      %v1837 = vrot.slane %v1517, 4
      %v1838 = vsel %vm1141, %v1837, %v1836
      %v1839 = vrot.slane %v1518, 3
      %v1840 = vsel %vm1143, %v1839, %v1838
      %v1841 = vrot.slane %v1519, 2
      %v1842 = vsel %vm1145, %v1841, %v1840
      %1845 = vrot.lane.b32.xlu0 %v608, 120
      %v1846 = vpop.permute.xlu0 %1845
      %1847 = vrot.lane.b32.xlu0 %v609, 120
      %v1848 = vpop.permute.xlu0 %1847
      %v1851 = vsel %vm1721, %v1828, 0
      %v1853 = vsel %vm1721, %v1842, 0
      %1855 = vmatprep.subr.mxu0 0.0
      %1856 = vmatpush1.msra.mxu0 %v1846
      %1857 = vmatprep.subr.mxu0 0.0
      %1858 = vmatpush1.msra.mxu0 %v1848
      %1859 = vmatprep.subr.mxu0 0.0
      %1860 = vmatpush1.msra.mxu0 0.0
      %1861 = vmatprep.subr.mxu0 0.0
      %1862 = vmatpush1.msra.mxu0 0.0
      %1863 = vmatprep.subr.mxu0 0.0
      %1864 = vmatpush1.msra.mxu0 0.0
      %1865 = vmatprep.subr.mxu0 0.0
      %1866 = vmatpush1.msra.mxu0 0.0
      %1867 = vmatprep.subr.mxu0 0.0
      %1868 = vmatpush1.msra.mxu0 0.0
      %1869 = vmatprep.subr.mxu0 0.0
      %1870 = vmatpush1.msra.mxu0 0.0
      %1871 = vmatprep.subr.mxu0 0.0
      %1872 = vmatpush1.msra.mxu0 0.0
      %1873 = vmatprep.subr.mxu0 0.0
      %1874 = vmatpush1.msra.mxu0 0.0
      %1875 = vmatprep.subr.mxu0 0.0
      %1876 = vmatpush1.msra.mxu0 0.0
      %1877 = vmatprep.subr.mxu0 0.0
      %1878 = vmatpush1.msra.mxu0 0.0
      %1879 = vmatprep.subr.mxu0 0.0
      %1880 = vmatpush1.msra.mxu0 0.0
      %1881 = vmatprep.subr.mxu0 0.0
      %1882 = vmatpush1.msra.mxu0 0.0
      %1883 = vmatprep.subr.mxu0 0.0
      %1884 = vmatpush1.msra.mxu0 0.0
      %1885 = vmatprep.subr.mxu0 0.0
      %1886 = vmatpush1.msra.mxu0 0.0
      %1887 = vmatprep.subr.mxu0 0.0
      %1888 = vmatpush1.msra.mxu0 0.0
      %1889 = vmatprep.subr.mxu0 0.0
      %1890 = vmatpush1.msra.mxu0 0.0
      %1891 = vmatprep.subr.mxu0 0.0
      %1892 = vmatpush1.msra.mxu0 0.0
      %1893 = vmatprep.subr.mxu0 0.0
      %1894 = vmatpush1.msra.mxu0 0.0
      %1895 = vmatprep.subr.mxu0 0.0
      %1896 = vmatpush1.msra.mxu0 0.0
      %1897 = vmatprep.subr.mxu0 0.0
      %1898 = vmatpush1.msra.mxu0 0.0
      %1899 = vmatprep.subr.mxu0 0.0
      %1900 = vmatpush1.msra.mxu0 0.0
      %1901 = vmatprep.subr.mxu0 0.0
      %1902 = vmatpush1.msra.mxu0 0.0
      %1903 = vmatprep.subr.mxu0 0.0
      %1904 = vmatpush1.msra.mxu0 0.0
      %1905 = vmatprep.subr.mxu0 0.0
      %1906 = vmatpush1.msra.mxu0 0.0
      %1907 = vmatprep.subr.mxu0 0.0
      %1908 = vmatpush1.msra.mxu0 0.0
      %1909 = vmatprep.subr.mxu0 0.0
      %1910 = vmatpush1.msra.mxu0 0.0
      %1911 = vmatprep.subr.mxu0 0.0
      %1912 = vmatpush1.msra.mxu0 0.0
      %1913 = vmatprep.subr.mxu0 0.0
      %1914 = vmatpush1.msra.mxu0 0.0
      %1915 = vmatprep.subr.mxu0 0.0
      %1916 = vmatpush1.msra.mxu0 0.0
      %1917 = vmatprep.subr.mxu0 0.0
      %1918 = vmatpush1.msra.mxu0 0.0
      %1919 = vmatprep.mubr.f32.mxu0 0.0
      %1920 = vmatmul.mubr.f32.gmra.mrb[0].mxu0 %v1851
      %v1921 = vpop.f32.mrb[0].mxu0
      %v1922 = vadd.f32 0.0, %v1921
      %v1923 = vpop.f32.mrb[0].mxu0
      %1924 = vmatprep.mubr.f32.mxu0 0.0
      %1925 = vmatmul.mubr.f32.gmra.mrb[0].mxu0 %v1853
      %v1926 = vpop.f32.mrb[0].mxu0
      %v1927 = vadd.f32 0.0, %v1926
      %v1928 = vpop.f32.mrb[0].mxu0
      %1929 = vdwg.mxu0
      %1930 = vset.pattern.permute.xlu0 1
      %1931 = vperm.xlu0 %1930, %v1161
      %v1932 = vpop.permute.xlu0 %1931
      %1934 = vset.pattern.permute.xlu0 1
      %1935 = vperm.xlu0 %1934, %v1163
      %v1936 = vpop.permute.xlu0 %1935
      %v1938 = vmul.f32 %v1932, %v1675
      %v1939 = vmul.f32 %v1936, %v1676
      %1942 = vrot.lane.b32.xlu0 %v1922, 8
      %v1943 = vpop.permute.xlu0 %1942
      %1944 = vrot.lane.b32.xlu0 %v1927, 8
      %v1945 = vpop.permute.xlu0 %1944
      %v1948 = vadd.f32 %v1938, %v1943
      %v1949 = vadd.f32 %v1939, %v1945
      %vm1950 = vcmask 64512
      %v1951 = vsel %vm1950, %v1813, %v1948
      %v1952 = vsel %vm1950, %v1814, %v1949
      %1953 = vst.msk [vmem:[#allocation4] sm:$0xff] %vm1721, %v1951
      %1954 = vst.msk [vmem:[#allocation4 + $0x8] sm:$0xff] %vm1721, %v1952
      // Predicated region
      $region61: #{han_forward.10} parent=55 // pred_check
        %p1955 = pneg %p593
      $region62: #{han_forward.10} parent=55 // pred_check_branch
        %1957 = sbr.rel (%p1955) target = $region64
      $region63: #{han_forward.10} parent=55 // pred_region
        %v1958 = vld [vmem:[#allocation3] sm:$0xff]
        %v1959 = vld [vmem:[#allocation3 + $0x8] sm:$0xff]
        %vm1960 = vcmp.gt.f32.partialorder %v1958, 0.0
        %vm1961 = vcmp.gt.f32.partialorder %v1959, 0.0
        %v1962 = vrcp.pop %v1958
        %v1963 = vmul.f32 1.0, %v1962
        %v1964 = vrcp.pop %v1959
        %v1965 = vmul.f32 1.0, %v1964
        %v1966 = vsel %vm1960, %v1963, 0.0
        %v1967 = vsel %vm1961, %v1965, 0.0
        %v1968 = vld [vmem:[#allocation4] sm:$0xff]
        %v1969 = vld [vmem:[#allocation4 + $0x8] sm:$0xff]
        %1971 = vset.pattern.permute.xlu0 0
        %1972 = vperm.xlu0 %1971, %v1966
        %v1973 = vpop.permute.xlu0 %1972
        %1976 = vset.pattern.permute.xlu0 0
        %1977 = vperm.xlu0 %1976, %v1967
        %v1978 = vpop.permute.xlu0 %1977
        %v1980 = vmul.f32 %v1968, %v1973
        %v1981 = vmul.f32 %v1969, %v1978
        %1982 = vset.pattern.permute.xlu0 1
        %1983 = vperm.xlu0 %1982, %v1966
        %v1984 = vpop.permute.xlu0 %1983
        %1986 = vset.pattern.permute.xlu0 1
        %1987 = vperm.xlu0 %1986, %v1967
        %v1988 = vpop.permute.xlu0 %1987
        %v1990 = vmul.f32 %v1968, %v1984
        %v1991 = vmul.f32 %v1969, %v1988
        %v1992 = vsel %vm1950, %v1980, %v1990
        %v1993 = vsel %vm1950, %v1981, %v1991
        %v1994 = vld [vmem:[%s557] sm:$0x1]
        %v1996 = vlaneseq
        %v1997 = vshrl.u32 %v1996, 7
        %v1998 = vsub.s32 0, %v1997
        %v1999 = vrot.slane %v1994, %v1998
        %v2001 = vadd.f32 %v1992, %v1999
        %v2002 = vadd.f32 %v1993, %v1999
        %vm2003 = vcmp.gt.f32.partialorder %v2001, 0.0
        %vm2004 = vcmp.gt.f32.partialorder %v2002, 0.0
        %v2005 = vmin.f32 %v2001, 0.0
        %v2006 = vmin.f32 %v2002, 0.0
        %v2007 = vmul.f32 %v2005, 1.442695
        %v2008 = vpow.pop %v2007
        %v2009 = vmul.f32 %v2006, 1.442695
        %v2010 = vpow.pop %v2009
        %v2011 = vsub.f32 %v2008, 1.0
        %v2012 = vsub.f32 %v2010, 1.0
        %v2013 = vsel %vm2003, %v2001, %v2011
        %v2014 = vsel %vm2004, %v2002, %v2012
        %2015 = vst.msk [vmem:[%s579] sm:$0xff] %vm1721, %v2013
        %2016 = vst.msk [vmem:[%s579 + $0x8] sm:$0xff] %vm1721, %v2014
        %v2017 = vld [vmem:[%s6] sm:$0xff]
        %v2018 = vld [vmem:[%s6 + $0x8] sm:$0xff]
        %v2019 = vld [vmem:[%s7] sm:$0x1]
        %v2021 = vlaneseq
        %v2022 = vshrl.u32 %v2021, 7
        %v2023 = vsub.s32 0, %v2022
        %v2024 = vrot.slane %v2019, %v2023
        %v2027 = vsel %vm1721, %v2013, 0
        %v2030 = vsel %vm1721, %v2014, 0
        %2032 = vmatprep.subr.mxu0 0.0
        %2033 = vmatpush1.msra.mxu0 %v2017
        %2034 = vmatprep.subr.mxu0 0.0
        %2035 = vmatpush1.msra.mxu0 %v2018
        %2036 = vmatprep.subr.mxu0 0.0
        %2037 = vmatpush1.msra.mxu0 0.0
        %2038 = vmatprep.subr.mxu0 0.0
        %2039 = vmatpush1.msra.mxu0 0.0
        %2040 = vmatprep.subr.mxu0 0.0
        %2041 = vmatpush1.msra.mxu0 0.0
        %2042 = vmatprep.subr.mxu0 0.0
        %2043 = vmatpush1.msra.mxu0 0.0
        %2044 = vmatprep.subr.mxu0 0.0
        %2045 = vmatpush1.msra.mxu0 0.0
        %2046 = vmatprep.subr.mxu0 0.0
        %2047 = vmatpush1.msra.mxu0 0.0
        %2048 = vmatprep.subr.mxu0 0.0
        %2049 = vmatpush1.msra.mxu0 0.0
        %2050 = vmatprep.subr.mxu0 0.0
        %2051 = vmatpush1.msra.mxu0 0.0
        %2052 = vmatprep.subr.mxu0 0.0
        %2053 = vmatpush1.msra.mxu0 0.0
        %2054 = vmatprep.subr.mxu0 0.0
        %2055 = vmatpush1.msra.mxu0 0.0
        %2056 = vmatprep.subr.mxu0 0.0
        %2057 = vmatpush1.msra.mxu0 0.0
        %2058 = vmatprep.subr.mxu0 0.0
        %2059 = vmatpush1.msra.mxu0 0.0
        %2060 = vmatprep.subr.mxu0 0.0
        %2061 = vmatpush1.msra.mxu0 0.0
        %2062 = vmatprep.subr.mxu0 0.0
        %2063 = vmatpush1.msra.mxu0 0.0
        %2064 = vmatprep.subr.mxu0 0.0
        %2065 = vmatpush1.msra.mxu0 0.0
        %2066 = vmatprep.subr.mxu0 0.0
        %2067 = vmatpush1.msra.mxu0 0.0
        %2068 = vmatprep.subr.mxu0 0.0
        %2069 = vmatpush1.msra.mxu0 0.0
        %2070 = vmatprep.subr.mxu0 0.0
        %2071 = vmatpush1.msra.mxu0 0.0
        %2072 = vmatprep.subr.mxu0 0.0
        %2073 = vmatpush1.msra.mxu0 0.0
        %2074 = vmatprep.subr.mxu0 0.0
        %2075 = vmatpush1.msra.mxu0 0.0
        %2076 = vmatprep.subr.mxu0 0.0
        %2077 = vmatpush1.msra.mxu0 0.0
        %2078 = vmatprep.subr.mxu0 0.0
        %2079 = vmatpush1.msra.mxu0 0.0
        %2080 = vmatprep.subr.mxu0 0.0
        %2081 = vmatpush1.msra.mxu0 0.0
        %2082 = vmatprep.subr.mxu0 0.0
        %2083 = vmatpush1.msra.mxu0 0.0
        %2084 = vmatprep.subr.mxu0 0.0
        %2085 = vmatpush1.msra.mxu0 0.0
        %2086 = vmatprep.subr.mxu0 0.0
        %2087 = vmatpush1.msra.mxu0 0.0
        %2088 = vmatprep.subr.mxu0 0.0
        %2089 = vmatpush1.msra.mxu0 0.0
        %2090 = vmatprep.subr.mxu0 0.0
        %2091 = vmatpush1.msra.mxu0 0.0
        %2092 = vmatprep.subr.mxu0 0.0
        %2093 = vmatpush1.msra.mxu0 0.0
        %2094 = vmatprep.subr.mxu0 0.0
        %2095 = vmatpush1.msra.mxu0 0.0
        %2096 = vmatprep.mubr.f32.mxu0 0.0
        %2097 = vmatmul.mubr.f32.gmra.mrb[0].mxu0 %v2027
        %v2098 = vpop.f32.mrb[0].mxu0
        %v2099 = vadd.f32 %v2024, %v2098
        %v2100 = vpop.f32.mrb[0].mxu0
        %2101 = vmatprep.mubr.f32.mxu0 0.0
        %2102 = vmatmul.mubr.f32.gmra.mrb[0].mxu0 %v2030
        %v2103 = vpop.f32.mrb[0].mxu0
        %v2104 = vadd.f32 %v2024, %v2103
        %v2105 = vpop.f32.mrb[0].mxu0
        %2106 = vdwg.mxu0
        %v2107 = vtanh.pop %v2099
        %v2108 = vtanh.pop %v2104
        %v2109 = vld [vmem:[%s8] sm:$0xff]
        %v2111 = vsel %vm1950, %v2107, 0
        %v2114 = vsel %vm1950, %v2108, 0
        %2116 = vmatprep.subr.mxu0 0.0
        %2117 = vmatpush1.msra.mxu0 %v2109
        %2118 = vmatprep.subr.mxu0 0.0
        %2119 = vmatpush1.msra.mxu0 0.0
        %2120 = vmatprep.subr.mxu0 0.0
        %2121 = vmatpush1.msra.mxu0 0.0
        %2122 = vmatprep.subr.mxu0 0.0
        %2123 = vmatpush1.msra.mxu0 0.0
        %2124 = vmatprep.subr.mxu0 0.0
        %2125 = vmatpush1.msra.mxu0 0.0
        %2126 = vmatprep.subr.mxu0 0.0
        %2127 = vmatpush1.msra.mxu0 0.0
        %2128 = vmatprep.subr.mxu0 0.0
        %2129 = vmatpush1.msra.mxu0 0.0
        %2130 = vmatprep.subr.mxu0 0.0
        %2131 = vmatpush1.msra.mxu0 0.0
        %2132 = vmatprep.subr.mxu0 0.0
        %2133 = vmatpush1.msra.mxu0 0.0
        %2134 = vmatprep.subr.mxu0 0.0
        %2135 = vmatpush1.msra.mxu0 0.0
        %2136 = vmatprep.subr.mxu0 0.0
        %2137 = vmatpush1.msra.mxu0 0.0
        %2138 = vmatprep.subr.mxu0 0.0
        %2139 = vmatpush1.msra.mxu0 0.0
        %2140 = vmatprep.subr.mxu0 0.0
        %2141 = vmatpush1.msra.mxu0 0.0
        %2142 = vmatprep.subr.mxu0 0.0
        %2143 = vmatpush1.msra.mxu0 0.0
        %2144 = vmatprep.subr.mxu0 0.0
        %2145 = vmatpush1.msra.mxu0 0.0
        %2146 = vmatprep.subr.mxu0 0.0
        %2147 = vmatpush1.msra.mxu0 0.0
        %2148 = vmatprep.subr.mxu0 0.0
        %2149 = vmatpush1.msra.mxu0 0.0
        %2150 = vmatprep.subr.mxu0 0.0
        %2151 = vmatpush1.msra.mxu0 0.0
        %2152 = vmatprep.subr.mxu0 0.0
        %2153 = vmatpush1.msra.mxu0 0.0
        %2154 = vmatprep.subr.mxu0 0.0
        %2155 = vmatpush1.msra.mxu0 0.0
        %2156 = vmatprep.subr.mxu0 0.0
        %2157 = vmatpush1.msra.mxu0 0.0
        %2158 = vmatprep.subr.mxu0 0.0
        %2159 = vmatpush1.msra.mxu0 0.0
        %2160 = vmatprep.subr.mxu0 0.0
        %2161 = vmatpush1.msra.mxu0 0.0
        %2162 = vmatprep.subr.mxu0 0.0
        %2163 = vmatpush1.msra.mxu0 0.0
        %2164 = vmatprep.subr.mxu0 0.0
        %2165 = vmatpush1.msra.mxu0 0.0
        %2166 = vmatprep.subr.mxu0 0.0
        %2167 = vmatpush1.msra.mxu0 0.0
        %2168 = vmatprep.subr.mxu0 0.0
        %2169 = vmatpush1.msra.mxu0 0.0
        %2170 = vmatprep.subr.mxu0 0.0
        %2171 = vmatpush1.msra.mxu0 0.0
        %2172 = vmatprep.subr.mxu0 0.0
        %2173 = vmatpush1.msra.mxu0 0.0
        %2174 = vmatprep.subr.mxu0 0.0
        %2175 = vmatpush1.msra.mxu0 0.0
        %2176 = vmatprep.subr.mxu0 0.0
        %2177 = vmatpush1.msra.mxu0 0.0
        %2178 = vmatprep.subr.mxu0 0.0
        %2179 = vmatpush1.msra.mxu0 0.0
        %2180 = vmatprep.mubr.f32.mxu0 0.0
        %2181 = vmatmul.mubr.f32.gmra.mrb[0].mxu0 %v2111
        %v2182 = vpop.f32.mrb[0].mxu0
        %v2183 = vadd.f32 0.0, %v2182
        %v2184 = vpop.f32.mrb[0].mxu0
        %2185 = vmatprep.mubr.f32.mxu0 0.0
        %2186 = vmatmul.mubr.f32.gmra.mrb[0].mxu0 %v2114
        %v2187 = vpop.f32.mrb[0].mxu0
        %v2188 = vadd.f32 0.0, %v2187
        %v2189 = vpop.f32.mrb[0].mxu0
        %2190 = vdwg.mxu0
        %vm2191 = vcmask 7168
        %2192 = vst.msk [vmem:[%s589] sm:$0xff] %vm2191, %v2183
        %2193 = vst.msk [vmem:[%s589 + $0x8] sm:$0xff] %vm2191, %v2188
      $region64: #{han_forward.10} parent=55 // pred_fallthru
        _
      %s2194 = smul.u32 2, %s27
      %p2195 = scmp.lt.s32.totalorder %s28, 1
      %s2196 = scalar_select %p2195, %s28, 1
      %p2197 = scmp.lt.s32.totalorder %s2194, 1
      %s2198 = scalar_select %p2197, %s2194, 1
      %s2199 = smul.addr %s2196, 2
      %s2200 = sadd.s32 %s2198, %s2199
      %s2201 = smul.addr %s2200, 8
      %s2202 = scalar_lea.vmem %s9, %s2201
      %s2203 = smul.u32 2, %s27
      %p2204 = scmp.lt.s32.totalorder %s28, 1
      %s2205 = scalar_select %p2204, %s28, 1
      %p2206 = scmp.lt.s32.totalorder %s2203, 1
      %s2207 = scalar_select %p2206, %s2203, 1
      %s2208 = smul.addr %s2205, 2
      %s2209 = sadd.s32 %s2207, %s2208
      %s2210 = smul.addr %s2209, 8
      %s2211 = scalar_lea.vmem %s10, %s2210
      // Predicated region
      $region65: #{han_forward.10} parent=55 // pred_check
        %p2212 = pneg %p292
      $region66: #{han_forward.10} parent=55 // pred_check_branch
        %2214 = sbr.rel (%p2212) target = $region68
      $region67: #{han_forward.10} parent=55 // pred_region
        %s2215 = smul.u32 2, %s27
      $region68: #{han_forward.10} parent=55 // pred_fallthru
        _
      // Predicated region
      $region69: #{han_forward.10} parent=55 // pred_check
        %p2216 = pneg %p320
      $region70: #{han_forward.10} parent=55 // pred_check_branch
        %2218 = sbr.rel (%p2216) target = $region72
      $region71: #{han_forward.10} parent=55 // pred_region
        %s2219 = smul.u32 2, %s27
      $region72: #{han_forward.10} parent=55 // pred_fallthru
        _
    $region56: #{han_forward.10} parent=5 // pred_fallthru
      _
    %p2220 = scmp.le.s32.totalorder 2, %s17
    // Predicated region
    $region73: #{han_forward.10} parent=5 // pred_check
      %p2221 = pneg %p2220
    $region74: #{han_forward.10} parent=5 // pred_check_branch
      %2223 = sbr.rel (%p2221) target = $region76
    $region75: #{han_forward.10} parent=5 // pred_region
      %s2224 = ssub.s32 %s17, 2
      // Predicated region
      $region77: #{han_forward.10} parent=75 // pred_check
        %p2225 = pneg %p298
      $region78: #{han_forward.10} parent=75 // pred_check_branch
        %2227 = sbr.rel (%p2225) target = $region80
      $region79: #{han_forward.10} parent=75 // pred_region
        %s2228 = smul.u32 2, %s30
        %p2229 = scmp.lt.s32.totalorder %s31, 1
        %s2230 = scalar_select %p2229, %s31, 1
        %p2231 = scmp.lt.s32.totalorder %s2228, 1
        %s2232 = scalar_select %p2231, %s2228, 1
        %s2233 = smul.addr %s2230, 2
        %s2234 = sadd.s32 %s2232, %s2233
        %s2235 = smul.addr %s2234, 8
        %s2236 = scalar_lea.vmem %s9, %s2235
      $region80: #{han_forward.10} parent=75 // pred_fallthru
        _
      // Predicated region
      $region81: #{han_forward.10} parent=75 // pred_check
        %p2237 = pneg %p326
      $region82: #{han_forward.10} parent=75 // pred_check_branch
        %2239 = sbr.rel (%p2237) target = $region84
      $region83: #{han_forward.10} parent=75 // pred_region
        %s2240 = smul.u32 2, %s30
        %p2241 = scmp.lt.s32.totalorder %s31, 1
        %s2242 = scalar_select %p2241, %s31, 1
        %p2243 = scmp.lt.s32.totalorder %s2240, 1
        %s2244 = scalar_select %p2243, %s2240, 1
        %s2245 = smul.addr %s2242, 2
        %s2246 = sadd.s32 %s2244, %s2245
        %s2247 = smul.addr %s2246, 8
        %s2248 = scalar_lea.vmem %s10, %s2247
      $region84: #{han_forward.10} parent=75 // pred_fallthru
        _
    $region76: #{han_forward.10} parent=5 // pred_fallthru
      _
  $region6: #{han_forward.10} parent=0 // loop_footer
    %s21 = sadd.s32 1, %s17
  $region7: #{han_forward.10} parent=0 // loop_footer_branch
    %16 = sbr.rel target = $region3
  $region8: #{han_forward.10} parent=0 // loop_exit
    _

</llo_original>
